<compile_context>
chip_gen: v7x
topology: tpu7x:2x2x1
jax: 0.10.0
libtpu: 0.0.40
codegen_flags: <defaults>
</compile_context>

<pallas_src>
import functools

import jax
import jax.numpy as jnp
from jax.experimental import pallas as pl
from jax.experimental.pallas import tpu as pltpu

# Flip to jnp.bfloat16 on v6e/v7x for ~2x MXU throughput and half the HBM/VMEM
# traffic on the dominant pe_g tensor.  Accumulation and softmax stay f32
# (v5e-friendly).  Kept f32 by default to match the torch reference bit-for-bit.
MATMUL_DTYPE = jnp.float32


def _dot(a, b):
    return jnp.dot(a.astype(MATMUL_DTYPE), b.astype(MATMUL_DTYPE),
                   preferred_element_type=jnp.float32)


# ----------------------------------------------------------------------------
# Tiled linear kernel (rows pipelined / double-buffered, megacore-parallel)
# ----------------------------------------------------------------------------
def _linear_kernel(x_ref, w_ref, b_ref, o_ref, *, relu):
    y = _dot(x_ref[...], w_ref[...]) + b_ref[...]
    if relu:
        y = jnp.maximum(y, 0.0)
    o_ref[...] = y.astype(o_ref.dtype)


def pallas_linear(x, w_t, b, relu=False, tile_rows=512):
    """y = x @ w_t + b  (w_t is the torch weight already transposed to (K, M))."""
    N, K = x.shape
    M = w_t.shape[1]
    tn = min(tile_rows, N)
    if tn < N:
        tn = max(8, (tn // 8) * 8)        # sublane-aligned row tiles
    b2 = b.reshape(1, M).astype(jnp.float32)
    return pl.pallas_call(
        functools.partial(_linear_kernel, relu=relu),
        out_shape=jax.ShapeDtypeStruct((N, M), jnp.float32),
        grid_spec=pl.GridSpec(
            grid=(pl.cdiv(N, tn),),
            in_specs=[
                pl.BlockSpec((tn, K), lambda i: (i, 0)),
                pl.BlockSpec((K, M), lambda i: (0, 0)),
                pl.BlockSpec((1, M), lambda i: (0, 0)),
            ],
            out_specs=pl.BlockSpec((tn, M), lambda i: (i, 0)),
        ),
        compiler_params=pltpu.CompilerParams(
            dimension_semantics=("parallel",)),
    )(x.astype(jnp.float32), w_t.astype(jnp.float32), b2)


# ----------------------------------------------------------------------------
# Fused lattice-rel attention kernel (flash-style over key tiles)
# ----------------------------------------------------------------------------
def _rel_attn_kernel(vlen_ref, q_ref, k_ref, v_ref, pe_ref, wrw_ref, wrb_ref,
                     o_ref, m_ref, l_ref, acc_ref,
                     *, num_heads, head_dim, seq_len_total):
    b = pl.program_id(0)
    kj = pl.program_id(2)
    nk = pl.num_programs(2)
    d = head_dim

    @pl.when(kj == 0)
    def _():
        m_ref[...] = jnp.full(m_ref.shape, -jnp.inf, m_ref.dtype)
        l_ref[...] = jnp.zeros(l_ref.shape, l_ref.dtype)
        acc_ref[...] = jnp.zeros(acc_ref.shape, acc_ref.dtype)

    q = q_ref[0]                          # (qt, H)
    k = k_ref[0]                          # (kt, H)
    v = v_ref[0]                          # (kt, H)
    rel = jnp.maximum(pe_ref[0], 0.0)     # (qt, kt, H): fused ReLU of f1 output
    rel_mm = rel.astype(MATMUL_DTYPE)

    qt, kt = q.shape[0], k.shape[0]
    # Key mask built in-kernel from the scalar-prefetched valid lengths.
    valid = jnp.minimum(vlen_ref[b], seq_len_total)
    key_idx = kj * kt + jax.lax.broadcasted_iota(jnp.int32, (qt, kt), 1)
    key_ok = key_idx < valid

    for h in range(num_heads):            # static unrolled head loop
        sl = slice(h * d, (h + 1) * d)
        q_h = q[:, sl]                    # (qt, d)
        k_h = k[:, sl]                    # (kt, d)
        v_h = v[:, sl]                    # (kt, d)

        # A_C[i, j] = q_h[i] . k_h[j]
        a_c = _dot(q_h, k_h.T)                                  # (qt, kt)

        # Fold w_r into the query:  B_D[i,j] = (q_h[i] @ W_r[h]) . rel[i,j]
        #                                      + q_h[i] . b_r[h]
        q_r = _dot(q_h, wrw_ref[sl, :])                         # (qt, H)
        bias_h = jnp.sum(q_h * wrb_ref[:, sl], axis=-1, keepdims=True)

        # Batched MXU contraction over the hidden dim (batch = query row).
        b_d = jnp.einsum('ioc,ijc->ioj',
                         q_r[:, None, :].astype(MATMUL_DTYPE), rel_mm,
                         preferred_element_type=jnp.float32)[:, 0, :]

        s = a_c + b_d + bias_h                                  # (qt, kt)
        s = jnp.where(key_ok, s, jnp.float32(-1e15))

        # Online softmax across key tiles.
        m_prev = m_ref[h]                                       # (qt, 1)
        m_new = jnp.maximum(m_prev, jnp.max(s, axis=-1, keepdims=True))
        alpha = jnp.exp(m_prev - m_new)
        p = jnp.exp(s - m_new)
        l_ref[h] = alpha * l_ref[h] + jnp.sum(p, axis=-1, keepdims=True)
        acc_ref[h] = alpha * acc_ref[h] + _dot(p, v_h)
        m_ref[h] = m_new

    @pl.when(kj == nk - 1)
    def _():
        outs = []
        for h in range(num_heads):
            inv_l = pl.reciprocal(l_ref[h], approx=True)        # EUP slot
            outs.append(acc_ref[h] * inv_l)
        # Heads concatenated back along hidden -> one lane-dense (qt, H) store;
        # this equals torch's transpose(1,2).reshape(B, L, H).
        o_ref[0] = jnp.concatenate(outs, axis=-1).astype(o_ref.dtype)


def _attn_tiles(L, H, vmem_budget_bytes=8 * 1024 * 1024):
    """(query_tile, key_tile) so the streamed (qt, kt, H) f32 pe block,
    double-buffered, stays under a conservative budget (v7x 64 MiB safe)."""
    qt = L if L <= 256 else 256
    kt = vmem_budget_bytes // max(1, qt * H * 4 * 2)
    kt = max(8, (kt // 8) * 8)
    if kt >= L:
        kt = L
    return qt, kt


def pallas_rel_attention(valid_len, q, k, v, pe_g, wr_w, wr_b, *, num_heads):
    """q,k,v: (B, L, H); pe_g: (B, L, L, H) projected pos-fusion (pre-ReLU);
    wr_w: (H, H) torch layout; wr_b: (H,); valid_len: (B,) int."""
    B, L, H = q.shape
    d = H // num_heads
    qt, kt = _attn_tiles(L, H)
    wr_b2 = wr_b.reshape(1, H).astype(jnp.float32)
    kernel = functools.partial(_rel_attn_kernel, num_heads=num_heads,
                               head_dim=d, seq_len_total=L)
    return pl.pallas_call(
        kernel,
        out_shape=jax.ShapeDtypeStruct((B, L, H), jnp.float32),
        grid_spec=pltpu.PrefetchScalarGridSpec(
            num_scalar_prefetch=1,
            grid=(B, pl.cdiv(L, qt), pl.cdiv(L, kt)),
            in_specs=[
                pl.BlockSpec((1, qt, H), lambda b, qi, kj, vl: (b, qi, 0)),
                pl.BlockSpec((1, kt, H), lambda b, qi, kj, vl: (b, kj, 0)),
                pl.BlockSpec((1, kt, H), lambda b, qi, kj, vl: (b, kj, 0)),
                pl.BlockSpec((1, qt, kt, H),
                             lambda b, qi, kj, vl: (b, qi, kj, 0)),
                pl.BlockSpec((H, H), lambda b, qi, kj, vl: (0, 0)),
                pl.BlockSpec((1, H), lambda b, qi, kj, vl: (0, 0)),
            ],
            out_specs=pl.BlockSpec((1, qt, H),
                                   lambda b, qi, kj, vl: (b, qi, 0)),
            scratch_shapes=[
                pltpu.VMEM((num_heads, qt, 1), jnp.float32),   # running max
                pltpu.VMEM((num_heads, qt, 1), jnp.float32),   # running denom
                pltpu.VMEM((num_heads, qt, d), jnp.float32),   # output accum
            ],
        ),
        compiler_params=pltpu.CompilerParams(
            dimension_semantics=("parallel", "parallel", "arbitrary")),
    )(valid_len.astype(jnp.int32), q.astype(jnp.float32),
      k.astype(jnp.float32), v.astype(jnp.float32),
      pe_g.astype(jnp.float32), wr_w.astype(jnp.float32), wr_b2)


# ----------------------------------------------------------------------------
# Model wrapper (glue in plain JAX, hot paths in Pallas)
# ----------------------------------------------------------------------------
def transformer_encoder_forward(params, inp, seq_len, lex_num, pos_s, pos_e,
                                *, max_seq_len, num_heads):
    B, L, H = inp.shape

    # ---- Four_Pos_Fusion_Embedding (table-level projection) ----------------
    # f1(cat([pe_ss, pe_ee])) == pe_ss @ W_ss^T + pe_ee @ W_ee^T + b, so project
    # the small (n_pe, H) tables once instead of running f1 over B*L*L rows.
    W_ss = params["f1_w"][:, :H]                    # (H, H)
    W_ee = params["f1_w"][:, H:]                    # (H, H)
    pe_ss_proj = pallas_linear(params["pe_ss"], W_ss.T, params["f1_b"])
    pe_ee_proj = pallas_linear(params["pe_ee"], W_ee.T,
                               jnp.zeros((H,), jnp.float32))

    pos_ss = pos_s[:, :, None] - pos_s[:, None, :]  # (B, L, L)
    pos_ee = pos_e[:, :, None] - pos_e[:, None, :]
    # TODO(synk): data-dependent embedding gather stays in JAX (jnp.take);
    # a Pallas DMA-gather is overkill at these table sizes.
    pe_g = (jnp.take(pe_ss_proj, (pos_ss + max_seq_len).reshape(-1), axis=0) +
            jnp.take(pe_ee_proj, (pos_ee + max_seq_len).reshape(-1), axis=0)
            ).reshape(B, L, L, H)
    # ReLU(f1) and the w_r projection are fused into the attention kernel
    # (w_r is folded into the query), so rel / rel_r never round-trip HBM.

    # ---- MultiHead_Attention_Lattice_rel ------------------------------------
    x2d = inp.reshape(-1, H)
    key = pallas_linear(x2d, params["wk_w"].T, params["wk_b"]).reshape(B, L, H)
    query = pallas_linear(x2d, params["wq_w"].T, params["wq_b"]).reshape(B, L, H)
    value = pallas_linear(x2d, params["wv_w"].T, params["wv_b"]).reshape(B, L, H)

    valid_len = seq_len + lex_num                   # (B,)
    out = pallas_rel_attention(valid_len, query, key, value, pe_g,
                               params["wr_w"], params["wr_b"],
                               num_heads=num_heads)
    return out                                      # (B, L, H)


# ----------------------------------------------------------------------------
# Deterministic parameter init + demo run
# ----------------------------------------------------------------------------
def init_params(key, hidden, max_seq_len):
    ks = jax.random.split(key, 12)
    n_pe = 2 * max_seq_len + 1

    def lin(kw, kb, out_f, in_f):
        w = jax.random.normal(kw, (out_f, in_f), jnp.float32) * 0.05
        b = jax.random.normal(kb, (out_f,), jnp.float32) * 0.05
        return w, b

    f1_w, f1_b = lin(ks[0], ks[1], hidden, 2 * hidden)
    wk_w, wk_b = lin(ks[2], ks[3], hidden, hidden)
    wq_w, wq_b = lin(ks[4], ks[5], hidden, hidden)
    wv_w, wv_b = lin(ks[6], ks[7], hidden, hidden)
    wr_w, wr_b = lin(ks[8], ks[9], hidden, hidden)
    pe_ss = jax.random.normal(ks[10], (n_pe, hidden), jnp.float32) * 0.1
    pe_ee = jax.random.normal(ks[11], (n_pe, hidden), jnp.float32) * 0.1
    return dict(f1_w=f1_w, f1_b=f1_b, wk_w=wk_w, wk_b=wk_b,
                wq_w=wq_w, wq_b=wq_b, wv_w=wv_w, wv_b=wv_b,
                wr_w=wr_w, wr_b=wr_b, pe_ss=pe_ss, pe_ee=pe_ee)


if __name__ == "__main__":
    B, L, H, NUM_HEADS, MAX_SEQ_LEN = 2, 8, 32, 4, 16

    key = jax.random.PRNGKey(0)
    k_inp, k_pe, k_params = jax.random.split(key, 3)

    inp = jax.random.normal(k_inp, (B, L, H), jnp.float32)
    pos_s = jnp.tile(jnp.arange(L, dtype=jnp.int32)[None, :], (B, 1))
    pos_e = pos_s + jax.random.randint(k_pe, (B, L), 0, 3, dtype=jnp.int32)
    seq_len = jnp.array([6, 5], dtype=jnp.int32)
    lex_num = jnp.array([2, 1], dtype=jnp.int32)

    params = init_params(k_params, H, MAX_SEQ_LEN)

    fwd = jax.jit(functools.partial(transformer_encoder_forward,
                                    max_seq_len=MAX_SEQ_LEN,
                                    num_heads=NUM_HEADS))
    out = fwd(params, inp, seq_len, lex_num, pos_s, pos_e)
    out = jax.block_until_ready(out)
    assert out.shape == (B, L, H) and out.dtype == jnp.float32
    print("KERNEL_OK")
</pallas_src>

<mosaic_0001>
module attributes {stable_mosaic.version = 11 : i64} {
  func.func @_linear_kernel(%arg0: i32, %arg1: memref<33x32xf32, #tpu.memory_space<vmem>>, %arg2: memref<32x32xf32, #tpu.memory_space<vmem>>, %arg3: memref<1x32xf32, #tpu.memory_space<vmem>>, %arg4: memref<33x32xf32, #tpu.memory_space<vmem>>) attributes {dimension_semantics = [#tpu.dimension_semantics<parallel>], iteration_bounds = array<i64: 1>, scalar_prefetch = 0 : i64, scratch_operands = 0 : i64, tpu.core_type = #tpu.core_type<tc>, window_params = [{transform_indices = @transform_0, window_bounds = array<i64: 33, 32>}, {pipeline_mode = #tpu.pipeline_mode<synchronous>, transform_indices = @transform_1, window_bounds = array<i64: 32, 32>}, {pipeline_mode = #tpu.pipeline_mode<synchronous>, transform_indices = @transform_2, window_bounds = array<i64: 1, 32>}, {transform_indices = @transform_3, window_bounds = array<i64: 33, 32>}]} {
    %c0 = arith.constant 0 : index
    %c0_0 = arith.constant 0 : index
    %0 = vector.load %arg1[%c0, %c0_0] : memref<33x32xf32, #tpu.memory_space<vmem>>, vector<33x32xf32>
    %c0_1 = arith.constant 0 : index
    %c0_2 = arith.constant 0 : index
    %1 = vector.load %arg2[%c0_1, %c0_2] : memref<32x32xf32, #tpu.memory_space<vmem>>, vector<32x32xf32>
    %cst = arith.constant dense<0.000000e+00> : vector<33x32xf32>
    %2 = tpu.matmul %0, %1, %cst {dimension_numbers = #tpu.dot_dimension_numbers<[1], [0], [0], [1], [0, 0, 1, 1], [], []>} : vector<33x32xf32>, vector<32x32xf32>, vector<33x32xf32> -> vector<33x32xf32>
    %c0_3 = arith.constant 0 : index
    %c0_4 = arith.constant 0 : index
    %3 = vector.load %arg3[%c0_3, %c0_4] : memref<1x32xf32, #tpu.memory_space<vmem>>, vector<1x32xf32>
    %4 = vector.broadcast %3 : vector<1x32xf32> to vector<33x32xf32>
    %5 = arith.addf %2, %4 : vector<33x32xf32>
    %c0_5 = arith.constant 0 : index
    %c0_6 = arith.constant 0 : index
    %6 = vector.load %arg4[%c0_5, %c0_6] : memref<33x32xf32, #tpu.memory_space<vmem>>, vector<33x32xf32>
    tpu.vector_store %arg4[%c0_5, %c0_6], %5 {strides = array<i32>} : memref<33x32xf32, #tpu.memory_space<vmem>>, vector<33x32xf32>,
    return
  }
  func.func @transform_0(%arg0: i32) -> (i32, i32) {
    %c0_i32 = arith.constant 0 : i32
    %c0_i32_0 = arith.constant 0 : i32
    return %arg0, %c0_i32 : i32, i32
  }
  func.func @transform_1(%arg0: i32) -> (i32, i32) {
    %c0_i32 = arith.constant 0 : i32
    %c0_i32_0 = arith.constant 0 : i32
    %c0_i32_1 = arith.constant 0 : i32
    return %c0_i32, %c0_i32_0 : i32, i32
  }
  func.func @transform_2(%arg0: i32) -> (i32, i32) {
    %c0_i32 = arith.constant 0 : i32
    %c0_i32_0 = arith.constant 0 : i32
    %c0_i32_1 = arith.constant 0 : i32
    return %c0_i32, %c0_i32_0 : i32, i32
  }
  func.func @transform_3(%arg0: i32) -> (i32, i32) {
    %c0_i32 = arith.constant 0 : i32
    %c0_i32_0 = arith.constant 0 : i32
    return %arg0, %c0_i32 : i32, i32
  }
}

module attributes {stable_mosaic.version = 11 : i64} {
  func.func @_rel_attn_kernel(%arg0: i32, %arg1: i32, %arg2: i32, %arg3: memref<2xi32, #tpu.memory_space<smem>>, %arg4: memref<1x8x32xf32, #tpu.memory_space<vmem>>, %arg5: memref<1x8x32xf32, #tpu.memory_space<vmem>>, %arg6: memref<1x8x32xf32, #tpu.memory_space<vmem>>, %arg7: memref<1x8x8x32xf32, #tpu.memory_space<vmem>>, %arg8: memref<32x32xf32, #tpu.memory_space<vmem>>, %arg9: memref<1x32xf32, #tpu.memory_space<vmem>>, %arg10: memref<1x8x32xf32, #tpu.memory_space<vmem>>, %arg11: memref<4x8x1xf32, #tpu.memory_space<vmem>>, %arg12: memref<4x8x1xf32, #tpu.memory_space<vmem>>, %arg13: memref<4x8x8xf32, #tpu.memory_space<vmem>>) attributes {dimension_semantics = [#tpu.dimension_semantics<parallel>, #tpu.dimension_semantics<parallel>, #tpu.dimension_semantics<arbitrary>], iteration_bounds = array<i64: 2, 1, 1>, scalar_prefetch = 1 : i64, scratch_operands = 3 : i64, tpu.core_type = #tpu.core_type<tc>, window_params = [{transform_indices = @transform_0, window_bounds = array<i64: 1, 8, 32>}, {transform_indices = @transform_1, window_bounds = array<i64: 1, 8, 32>}, {transform_indices = @transform_2, window_bounds = array<i64: 1, 8, 32>}, {transform_indices = @transform_3, window_bounds = array<i64: 1, 8, 8, 32>}, {pipeline_mode = #tpu.pipeline_mode<synchronous>, transform_indices = @transform_4, window_bounds = array<i64: 32, 32>}, {pipeline_mode = #tpu.pipeline_mode<synchronous>, transform_indices = @transform_5, window_bounds = array<i64: 1, 32>}, {transform_indices = @transform_6, window_bounds = array<i64: 1, 8, 32>}]} {
    %c0_i32 = arith.constant 0 : i32
    %0 = arith.cmpi eq, %arg2, %c0_i32 : i32
    %1 = arith.extui %0 : i1 to i32
    %c0_i32_0 = arith.constant 0 : i32
    %2 = arith.cmpi ne, %1, %c0_i32_0 : i32
    scf.if %2 {
      %cst_130 = arith.constant 0xFF800000 : f32
      %229 = vector.broadcast %cst_130 : f32 to vector<4x8x1xf32>
      %c0_131 = arith.constant 0 : index
      %c0_132 = arith.constant 0 : index
      %c0_133 = arith.constant 0 : index
      %230 = vector.load %arg11[%c0_131, %c0_132, %c0_133] : memref<4x8x1xf32, #tpu.memory_space<vmem>>, vector<4x8x1xf32>
      tpu.vector_store %arg11[%c0_131, %c0_132, %c0_133], %229 {strides = array<i32>} : memref<4x8x1xf32, #tpu.memory_space<vmem>>, vector<4x8x1xf32>,
      %cst_134 = arith.constant 0.000000e+00 : f32
      %231 = vector.broadcast %cst_134 : f32 to vector<4x8x1xf32>
      %c0_135 = arith.constant 0 : index
      %c0_136 = arith.constant 0 : index
      %c0_137 = arith.constant 0 : index
      %232 = vector.load %arg12[%c0_135, %c0_136, %c0_137] : memref<4x8x1xf32, #tpu.memory_space<vmem>>, vector<4x8x1xf32>
      tpu.vector_store %arg12[%c0_135, %c0_136, %c0_137], %231 {strides = array<i32>} : memref<4x8x1xf32, #tpu.memory_space<vmem>>, vector<4x8x1xf32>,
      %cst_138 = arith.constant 0.000000e+00 : f32
      %233 = vector.broadcast %cst_138 : f32 to vector<4x8x8xf32>
      %c0_139 = arith.constant 0 : index
      %c0_140 = arith.constant 0 : index
      %c0_141 = arith.constant 0 : index
      %234 = vector.load %arg13[%c0_139, %c0_140, %c0_141] : memref<4x8x8xf32, #tpu.memory_space<vmem>>, vector<4x8x8xf32>
      tpu.vector_store %arg13[%c0_139, %c0_140, %c0_141], %233 {strides = array<i32>} : memref<4x8x8xf32, #tpu.memory_space<vmem>>, vector<4x8x8xf32>,
    } else {
    }
    %c0 = arith.constant 0 : index
    %c0_1 = arith.constant 0 : index
    %c0_2 = arith.constant 0 : index
    %3 = vector.load %arg4[%c0, %c0_1, %c0_2] : memref<1x8x32xf32, #tpu.memory_space<vmem>>, vector<1x8x32xf32>
    %4 = vector.shape_cast %3 : vector<1x8x32xf32> to vector<8x32xf32>
    %c0_3 = arith.constant 0 : index
    %c0_4 = arith.constant 0 : index
    %c0_5 = arith.constant 0 : index
    %5 = vector.load %arg5[%c0_3, %c0_4, %c0_5] : memref<1x8x32xf32, #tpu.memory_space<vmem>>, vector<1x8x32xf32>
    %6 = vector.shape_cast %5 : vector<1x8x32xf32> to vector<8x32xf32>
    %c0_6 = arith.constant 0 : index
    %c0_7 = arith.constant 0 : index
    %c0_8 = arith.constant 0 : index
    %7 = vector.load %arg6[%c0_6, %c0_7, %c0_8] : memref<1x8x32xf32, #tpu.memory_space<vmem>>, vector<1x8x32xf32>
    %8 = vector.shape_cast %7 : vector<1x8x32xf32> to vector<8x32xf32>
    %c0_9 = arith.constant 0 : index
    %c0_10 = arith.constant 0 : index
    %c0_11 = arith.constant 0 : index
    %c0_12 = arith.constant 0 : index
    %9 = vector.load %arg7[%c0_9, %c0_10, %c0_11, %c0_12] : memref<1x8x8x32xf32, #tpu.memory_space<vmem>>, vector<1x8x8x32xf32>
    %10 = vector.shape_cast %9 : vector<1x8x8x32xf32> to vector<8x8x32xf32>
    %cst = arith.constant 0.000000e+00 : f32
    %11 = vector.broadcast %cst : f32 to vector<8x8x32xf32>
    %12 = arith.maximumf %10, %11 : vector<8x8x32xf32>
    %13 = arith.index_cast %arg0 : i32 to index
    %14 = memref.load %arg3[%13] : memref<2xi32, #tpu.memory_space<smem>>
    %c8_i32 = arith.constant 8 : i32
    %15 = arith.minsi %14, %c8_i32 : i32
    %c8_i32_13 = arith.constant 8 : i32
    %16 = arith.muli %arg2, %c8_i32_13 : i32
    %17 = tpu.iota {dimensions = array<i32: 1>} : vector<8x8xi32>
    %18 = vector.broadcast %16 : i32 to vector<8x8xi32>
    %19 = arith.addi %18, %17 : vector<8x8xi32>
    %20 = vector.broadcast %15 : i32 to vector<8x8xi32>
    %21 = arith.cmpi slt, %19, %20 : vector<8x8xi32>
    %22 = vector.extract_strided_slice %4 {offsets = [0, 0], sizes = [8, 8], strides = [1, 1]} : vector<8x32xf32> to vector<8x8xf32>
    %23 = vector.extract_strided_slice %6 {offsets = [0, 0], sizes = [8, 8], strides = [1, 1]} : vector<8x32xf32> to vector<8x8xf32>
    %24 = vector.extract_strided_slice %8 {offsets = [0, 0], sizes = [8, 8], strides = [1, 1]} : vector<8x32xf32> to vector<8x8xf32>
    %25 = tpu.transpose %23, [1, 0] : vector<8x8xf32> -> vector<8x8xf32>
    %cst_14 = arith.constant dense<0.000000e+00> : vector<8x8xf32>
    %26 = tpu.matmul %22, %25, %cst_14 {dimension_numbers = #tpu.dot_dimension_numbers<[1], [0], [0], [1], [0, 0, 1, 1], [], []>} : vector<8x8xf32>, vector<8x8xf32>, vector<8x8xf32> -> vector<8x8xf32>
    %c0_15 = arith.constant 0 : index
    %c0_16 = arith.constant 0 : index
    %27 = vector.load %arg8[%c0_15, %c0_16] : memref<32x32xf32, #tpu.memory_space<vmem>>, vector<8x32xf32>
    %cst_17 = arith.constant dense<0.000000e+00> : vector<8x32xf32>
    %28 = tpu.matmul %22, %27, %cst_17 {dimension_numbers = #tpu.dot_dimension_numbers<[1], [0], [0], [1], [0, 0, 1, 1], [], []>} : vector<8x8xf32>, vector<8x32xf32>, vector<8x32xf32> -> vector<8x32xf32>
    %c0_18 = arith.constant 0 : index
    %c0_19 = arith.constant 0 : index
    %29 = vector.load %arg9[%c0_18, %c0_19] : memref<1x32xf32, #tpu.memory_space<vmem>>, vector<1x8xf32>
    %30 = vector.broadcast %29 : vector<1x8xf32> to vector<8x8xf32>
    %31 = arith.mulf %22, %30 : vector<8x8xf32>
    %cst_20 = arith.constant dense<0.000000e+00> : vector<8xf32>
    %32 = vector.multi_reduction <add>, %31, %cst_20 [1] : vector<8x8xf32> to vector<8xf32>
    %33 = vector.shape_cast %32 : vector<8xf32> to vector<8x1xf32>
    %34 = vector.shape_cast %28 : vector<8x32xf32> to vector<8x1x32xf32>
    "tpu.trace_start"() <{level = 10 : i32, message = "ioc,ijc->ioj"}> : () -> ()
    %cst_21 = arith.constant dense<0.000000e+00> : vector<8x1x8xf32>
    %35 = tpu.matmul %34, %12, %cst_21 {dimension_numbers = #tpu.dot_dimension_numbers<[2], [2], [1], [1], [0, 0, 0, 1, 1, 1], [0], [0]>} : vector<8x1x32xf32>, vector<8x8x32xf32>, vector<8x1x8xf32> -> vector<8x1x8xf32>
    "tpu.trace_stop"() : () -> ()
    %36 = vector.shape_cast %35 : vector<8x1x8xf32> to vector<8x8xf32>
    %37 = arith.addf %26, %36 : vector<8x8xf32>
    %38 = vector.broadcast %33 : vector<8x1xf32> to vector<8x8xf32>
    %39 = arith.addf %37, %38 : vector<8x8xf32>
    %cst_22 = arith.constant -9.99999986E+14 : f32
    %40 = vector.broadcast %cst_22 : f32 to vector<8x8xf32>
    %41 = arith.select %21, %39, %40 : vector<8x8xi1>, vector<8x8xf32>
    %c0_23 = arith.constant 0 : index
    %c0_24 = arith.constant 0 : index
    %c0_25 = arith.constant 0 : index
    %42 = vector.load %arg11[%c0_23, %c0_24, %c0_25] : memref<4x8x1xf32, #tpu.memory_space<vmem>>, vector<1x8x1xf32>
    %43 = vector.shape_cast %42 : vector<1x8x1xf32> to vector<8x1xf32>
    %cst_26 = arith.constant dense<0xFF800000> : vector<8xf32>
    %44 = vector.multi_reduction <maximumf>, %41, %cst_26 [1] : vector<8x8xf32> to vector<8xf32>
    %45 = vector.shape_cast %44 : vector<8xf32> to vector<8x1xf32>
    %46 = arith.maximumf %43, %45 : vector<8x1xf32>
    %47 = arith.subf %43, %46 : vector<8x1xf32>
    %48 = math.exp %47 : vector<8x1xf32>
    %49 = vector.broadcast %46 : vector<8x1xf32> to vector<8x8xf32>
    %50 = arith.subf %41, %49 : vector<8x8xf32>
    %51 = math.exp %50 : vector<8x8xf32>
    %c0_27 = arith.constant 0 : index
    %c0_28 = arith.constant 0 : index
    %c0_29 = arith.constant 0 : index
    %52 = vector.load %arg12[%c0_27, %c0_28, %c0_29] : memref<4x8x1xf32, #tpu.memory_space<vmem>>, vector<1x8x1xf32>
    %53 = vector.shape_cast %52 : vector<1x8x1xf32> to vector<8x1xf32>
    %54 = arith.mulf %48, %53 : vector<8x1xf32>
    %cst_30 = arith.constant dense<0.000000e+00> : vector<8xf32>
    %55 = vector.multi_reduction <add>, %51, %cst_30 [1] : vector<8x8xf32> to vector<8xf32>
    %56 = vector.shape_cast %55 : vector<8xf32> to vector<8x1xf32>
    %57 = arith.addf %54, %56 : vector<8x1xf32>
    %c0_31 = arith.constant 0 : index
    %c0_32 = arith.constant 0 : index
    %c0_33 = arith.constant 0 : index
    %58 = vector.load %arg12[%c0_31, %c0_32, %c0_33] : memref<4x8x1xf32, #tpu.memory_space<vmem>>, vector<1x8x1xf32>
    %59 = vector.shape_cast %58 : vector<1x8x1xf32> to vector<8x1xf32>
    %60 = vector.shape_cast %57 : vector<8x1xf32> to vector<1x8x1xf32>
    tpu.vector_store %arg12[%c0_31, %c0_32, %c0_33], %60 {strides = array<i32>} : memref<4x8x1xf32, #tpu.memory_space<vmem>>, vector<1x8x1xf32>,
    %c0_34 = arith.constant 0 : index
    %c0_35 = arith.constant 0 : index
    %c0_36 = arith.constant 0 : index
    %61 = vector.load %arg13[%c0_34, %c0_35, %c0_36] : memref<4x8x8xf32, #tpu.memory_space<vmem>>, vector<1x8x8xf32>
    %62 = vector.shape_cast %61 : vector<1x8x8xf32> to vector<8x8xf32>
    %63 = vector.broadcast %48 : vector<8x1xf32> to vector<8x8xf32>
    %64 = arith.mulf %63, %62 : vector<8x8xf32>
    %cst_37 = arith.constant dense<0.000000e+00> : vector<8x8xf32>
    %65 = tpu.matmul %51, %24, %cst_37 {dimension_numbers = #tpu.dot_dimension_numbers<[1], [0], [0], [1], [0, 0, 1, 1], [], []>} : vector<8x8xf32>, vector<8x8xf32>, vector<8x8xf32> -> vector<8x8xf32>
    %66 = arith.addf %64, %65 : vector<8x8xf32>
    %c0_38 = arith.constant 0 : index
    %c0_39 = arith.constant 0 : index
    %c0_40 = arith.constant 0 : index
    %67 = vector.load %arg13[%c0_38, %c0_39, %c0_40] : memref<4x8x8xf32, #tpu.memory_space<vmem>>, vector<1x8x8xf32>
    %68 = vector.shape_cast %67 : vector<1x8x8xf32> to vector<8x8xf32>
    %69 = vector.shape_cast %66 : vector<8x8xf32> to vector<1x8x8xf32>
    tpu.vector_store %arg13[%c0_38, %c0_39, %c0_40], %69 {strides = array<i32>} : memref<4x8x8xf32, #tpu.memory_space<vmem>>, vector<1x8x8xf32>,
    %c0_41 = arith.constant 0 : index
    %c0_42 = arith.constant 0 : index
    %c0_43 = arith.constant 0 : index
    %70 = vector.load %arg11[%c0_41, %c0_42, %c0_43] : memref<4x8x1xf32, #tpu.memory_space<vmem>>, vector<1x8x1xf32>
    %71 = vector.shape_cast %70 : vector<1x8x1xf32> to vector<8x1xf32>
    %72 = vector.shape_cast %46 : vector<8x1xf32> to vector<1x8x1xf32>
    tpu.vector_store %arg11[%c0_41, %c0_42, %c0_43], %72 {strides = array<i32>} : memref<4x8x1xf32, #tpu.memory_space<vmem>>, vector<1x8x1xf32>,
    %73 = vector.extract_strided_slice %4 {offsets = [0, 8], sizes = [8, 8], strides = [1, 1]} : vector<8x32xf32> to vector<8x8xf32>
    %74 = vector.extract_strided_slice %6 {offsets = [0, 8], sizes = [8, 8], strides = [1, 1]} : vector<8x32xf32> to vector<8x8xf32>
    %75 = vector.extract_strided_slice %8 {offsets = [0, 8], sizes = [8, 8], strides = [1, 1]} : vector<8x32xf32> to vector<8x8xf32>
    %76 = tpu.transpose %74, [1, 0] : vector<8x8xf32> -> vector<8x8xf32>
    %cst_44 = arith.constant dense<0.000000e+00> : vector<8x8xf32>
    %77 = tpu.matmul %73, %76, %cst_44 {dimension_numbers = #tpu.dot_dimension_numbers<[1], [0], [0], [1], [0, 0, 1, 1], [], []>} : vector<8x8xf32>, vector<8x8xf32>, vector<8x8xf32> -> vector<8x8xf32>
    %c8 = arith.constant 8 : index
    %c0_45 = arith.constant 0 : index
    %78 = vector.load %arg8[%c8, %c0_45] : memref<32x32xf32, #tpu.memory_space<vmem>>, vector<8x32xf32>
    %cst_46 = arith.constant dense<0.000000e+00> : vector<8x32xf32>
    %79 = tpu.matmul %73, %78, %cst_46 {dimension_numbers = #tpu.dot_dimension_numbers<[1], [0], [0], [1], [0, 0, 1, 1], [], []>} : vector<8x8xf32>, vector<8x32xf32>, vector<8x32xf32> -> vector<8x32xf32>
    %c0_47 = arith.constant 0 : index
    %c8_48 = arith.constant 8 : index
    %80 = vector.load %arg9[%c0_47, %c8_48] : memref<1x32xf32, #tpu.memory_space<vmem>>, vector<1x8xf32>
    %81 = vector.broadcast %80 : vector<1x8xf32> to vector<8x8xf32>
    %82 = arith.mulf %73, %81 : vector<8x8xf32>
    %cst_49 = arith.constant dense<0.000000e+00> : vector<8xf32>
    %83 = vector.multi_reduction <add>, %82, %cst_49 [1] : vector<8x8xf32> to vector<8xf32>
    %84 = vector.shape_cast %83 : vector<8xf32> to vector<8x1xf32>
    %85 = vector.shape_cast %79 : vector<8x32xf32> to vector<8x1x32xf32>
    "tpu.trace_start"() <{level = 10 : i32, message = "ioc,ijc->ioj"}> : () -> ()
    %cst_50 = arith.constant dense<0.000000e+00> : vector<8x1x8xf32>
    %86 = tpu.matmul %85, %12, %cst_50 {dimension_numbers = #tpu.dot_dimension_numbers<[2], [2], [1], [1], [0, 0, 0, 1, 1, 1], [0], [0]>} : vector<8x1x32xf32>, vector<8x8x32xf32>, vector<8x1x8xf32> -> vector<8x1x8xf32>
    "tpu.trace_stop"() : () -> ()
    %87 = vector.shape_cast %86 : vector<8x1x8xf32> to vector<8x8xf32>
    %88 = arith.addf %77, %87 : vector<8x8xf32>
    %89 = vector.broadcast %84 : vector<8x1xf32> to vector<8x8xf32>
    %90 = arith.addf %88, %89 : vector<8x8xf32>
    %cst_51 = arith.constant -9.99999986E+14 : f32
    %91 = vector.broadcast %cst_51 : f32 to vector<8x8xf32>
    %92 = arith.select %21, %90, %91 : vector<8x8xi1>, vector<8x8xf32>
    %c1 = arith.constant 1 : index
    %c0_52 = arith.constant 0 : index
    %c0_53 = arith.constant 0 : index
    %93 = vector.load %arg11[%c1, %c0_52, %c0_53] : memref<4x8x1xf32, #tpu.memory_space<vmem>>, vector<1x8x1xf32>
    %94 = vector.shape_cast %93 : vector<1x8x1xf32> to vector<8x1xf32>
    %cst_54 = arith.constant dense<0xFF800000> : vector<8xf32>
    %95 = vector.multi_reduction <maximumf>, %92, %cst_54 [1] : vector<8x8xf32> to vector<8xf32>
    %96 = vector.shape_cast %95 : vector<8xf32> to vector<8x1xf32>
    %97 = arith.maximumf %94, %96 : vector<8x1xf32>
    %98 = arith.subf %94, %97 : vector<8x1xf32>
    %99 = math.exp %98 : vector<8x1xf32>
    %100 = vector.broadcast %97 : vector<8x1xf32> to vector<8x8xf32>
    %101 = arith.subf %92, %100 : vector<8x8xf32>
    %102 = math.exp %101 : vector<8x8xf32>
    %c1_55 = arith.constant 1 : index
    %c0_56 = arith.constant 0 : index
    %c0_57 = arith.constant 0 : index
    %103 = vector.load %arg12[%c1_55, %c0_56, %c0_57] : memref<4x8x1xf32, #tpu.memory_space<vmem>>, vector<1x8x1xf32>
    %104 = vector.shape_cast %103 : vector<1x8x1xf32> to vector<8x1xf32>
    %105 = arith.mulf %99, %104 : vector<8x1xf32>
    %cst_58 = arith.constant dense<0.000000e+00> : vector<8xf32>
    %106 = vector.multi_reduction <add>, %102, %cst_58 [1] : vector<8x8xf32> to vector<8xf32>
    %107 = vector.shape_cast %106 : vector<8xf32> to vector<8x1xf32>
    %108 = arith.addf %105, %107 : vector<8x1xf32>
    %c1_59 = arith.constant 1 : index
    %c0_60 = arith.constant 0 : index
    %c0_61 = arith.constant 0 : index
    %109 = vector.load %arg12[%c1_59, %c0_60, %c0_61] : memref<4x8x1xf32, #tpu.memory_space<vmem>>, vector<1x8x1xf32>
    %110 = vector.shape_cast %109 : vector<1x8x1xf32> to vector<8x1xf32>
    %111 = vector.shape_cast %108 : vector<8x1xf32> to vector<1x8x1xf32>
    tpu.vector_store %arg12[%c1_59, %c0_60, %c0_61], %111 {strides = array<i32>} : memref<4x8x1xf32, #tpu.memory_space<vmem>>, vector<1x8x1xf32>,
    %c1_62 = arith.constant 1 : index
    %c0_63 = arith.constant 0 : index
    %c0_64 = arith.constant 0 : index
    %112 = vector.load %arg13[%c1_62, %c0_63, %c0_64] : memref<4x8x8xf32, #tpu.memory_space<vmem>>, vector<1x8x8xf32>
    %113 = vector.shape_cast %112 : vector<1x8x8xf32> to vector<8x8xf32>
    %114 = vector.broadcast %99 : vector<8x1xf32> to vector<8x8xf32>
    %115 = arith.mulf %114, %113 : vector<8x8xf32>
    %cst_65 = arith.constant dense<0.000000e+00> : vector<8x8xf32>
    %116 = tpu.matmul %102, %75, %cst_65 {dimension_numbers = #tpu.dot_dimension_numbers<[1], [0], [0], [1], [0, 0, 1, 1], [], []>} : vector<8x8xf32>, vector<8x8xf32>, vector<8x8xf32> -> vector<8x8xf32>
    %117 = arith.addf %115, %116 : vector<8x8xf32>
    %c1_66 = arith.constant 1 : index
    %c0_67 = arith.constant 0 : index
    %c0_68 = arith.constant 0 : index
    %118 = vector.load %arg13[%c1_66, %c0_67, %c0_68] : memref<4x8x8xf32, #tpu.memory_space<vmem>>, vector<1x8x8xf32>
    %119 = vector.shape_cast %118 : vector<1x8x8xf32> to vector<8x8xf32>
    %120 = vector.shape_cast %117 : vector<8x8xf32> to vector<1x8x8xf32>
    tpu.vector_store %arg13[%c1_66, %c0_67, %c0_68], %120 {strides = array<i32>} : memref<4x8x8xf32, #tpu.memory_space<vmem>>, vector<1x8x8xf32>,
    %c1_69 = arith.constant 1 : index
    %c0_70 = arith.constant 0 : index
    %c0_71 = arith.constant 0 : index
    %121 = vector.load %arg11[%c1_69, %c0_70, %c0_71] : memref<4x8x1xf32, #tpu.memory_space<vmem>>, vector<1x8x1xf32>
    %122 = vector.shape_cast %121 : vector<1x8x1xf32> to vector<8x1xf32>
    %123 = vector.shape_cast %97 : vector<8x1xf32> to vector<1x8x1xf32>
    tpu.vector_store %arg11[%c1_69, %c0_70, %c0_71], %123 {strides = array<i32>} : memref<4x8x1xf32, #tpu.memory_space<vmem>>, vector<1x8x1xf32>,
    %124 = vector.extract_strided_slice %4 {offsets = [0, 16], sizes = [8, 8], strides = [1, 1]} : vector<8x32xf32> to vector<8x8xf32>
    %125 = vector.extract_strided_slice %6 {offsets = [0, 16], sizes = [8, 8], strides = [1, 1]} : vector<8x32xf32> to vector<8x8xf32>
    %126 = vector.extract_strided_slice %8 {offsets = [0, 16], sizes = [8, 8], strides = [1, 1]} : vector<8x32xf32> to vector<8x8xf32>
    %127 = tpu.transpose %125, [1, 0] : vector<8x8xf32> -> vector<8x8xf32>
    %cst_72 = arith.constant dense<0.000000e+00> : vector<8x8xf32>
    %128 = tpu.matmul %124, %127, %cst_72 {dimension_numbers = #tpu.dot_dimension_numbers<[1], [0], [0], [1], [0, 0, 1, 1], [], []>} : vector<8x8xf32>, vector<8x8xf32>, vector<8x8xf32> -> vector<8x8xf32>
    %c16 = arith.constant 16 : index
    %c0_73 = arith.constant 0 : index
    %129 = vector.load %arg8[%c16, %c0_73] : memref<32x32xf32, #tpu.memory_space<vmem>>, vector<8x32xf32>
    %cst_74 = arith.constant dense<0.000000e+00> : vector<8x32xf32>
    %130 = tpu.matmul %124, %129, %cst_74 {dimension_numbers = #tpu.dot_dimension_numbers<[1], [0], [0], [1], [0, 0, 1, 1], [], []>} : vector<8x8xf32>, vector<8x32xf32>, vector<8x32xf32> -> vector<8x32xf32>
    %c0_75 = arith.constant 0 : index
    %c16_76 = arith.constant 16 : index
    %131 = vector.load %arg9[%c0_75, %c16_76] : memref<1x32xf32, #tpu.memory_space<vmem>>, vector<1x8xf32>
    %132 = vector.broadcast %131 : vector<1x8xf32> to vector<8x8xf32>
    %133 = arith.mulf %124, %132 : vector<8x8xf32>
    %cst_77 = arith.constant dense<0.000000e+00> : vector<8xf32>
    %134 = vector.multi_reduction <add>, %133, %cst_77 [1] : vector<8x8xf32> to vector<8xf32>
    %135 = vector.shape_cast %134 : vector<8xf32> to vector<8x1xf32>
    %136 = vector.shape_cast %130 : vector<8x32xf32> to vector<8x1x32xf32>
    "tpu.trace_start"() <{level = 10 : i32, message = "ioc,ijc->ioj"}> : () -> ()
    %cst_78 = arith.constant dense<0.000000e+00> : vector<8x1x8xf32>
    %137 = tpu.matmul %136, %12, %cst_78 {dimension_numbers = #tpu.dot_dimension_numbers<[2], [2], [1], [1], [0, 0, 0, 1, 1, 1], [0], [0]>} : vector<8x1x32xf32>, vector<8x8x32xf32>, vector<8x1x8xf32> -> vector<8x1x8xf32>
    "tpu.trace_stop"() : () -> ()
    %138 = vector.shape_cast %137 : vector<8x1x8xf32> to vector<8x8xf32>
    %139 = arith.addf %128, %138 : vector<8x8xf32>
    %140 = vector.broadcast %135 : vector<8x1xf32> to vector<8x8xf32>
    %141 = arith.addf %139, %140 : vector<8x8xf32>
    %cst_79 = arith.constant -9.99999986E+14 : f32
    %142 = vector.broadcast %cst_79 : f32 to vector<8x8xf32>
    %143 = arith.select %21, %141, %142 : vector<8x8xi1>, vector<8x8xf32>
    %c2 = arith.constant 2 : index
    %c0_80 = arith.constant 0 : index
    %c0_81 = arith.constant 0 : index
    %144 = vector.load %arg11[%c2, %c0_80, %c0_81] : memref<4x8x1xf32, #tpu.memory_space<vmem>>, vector<1x8x1xf32>
    %145 = vector.shape_cast %144 : vector<1x8x1xf32> to vector<8x1xf32>
    %cst_82 = arith.constant dense<0xFF800000> : vector<8xf32>
    %146 = vector.multi_reduction <maximumf>, %143, %cst_82 [1] : vector<8x8xf32> to vector<8xf32>
    %147 = vector.shape_cast %146 : vector<8xf32> to vector<8x1xf32>
    %148 = arith.maximumf %145, %147 : vector<8x1xf32>
    %149 = arith.subf %145, %148 : vector<8x1xf32>
    %150 = math.exp %149 : vector<8x1xf32>
    %151 = vector.broadcast %148 : vector<8x1xf32> to vector<8x8xf32>
    %152 = arith.subf %143, %151 : vector<8x8xf32>
    %153 = math.exp %152 : vector<8x8xf32>
    %c2_83 = arith.constant 2 : index
    %c0_84 = arith.constant 0 : index
    %c0_85 = arith.constant 0 : index
    %154 = vector.load %arg12[%c2_83, %c0_84, %c0_85] : memref<4x8x1xf32, #tpu.memory_space<vmem>>, vector<1x8x1xf32>
    %155 = vector.shape_cast %154 : vector<1x8x1xf32> to vector<8x1xf32>
    %156 = arith.mulf %150, %155 : vector<8x1xf32>
    %cst_86 = arith.constant dense<0.000000e+00> : vector<8xf32>
    %157 = vector.multi_reduction <add>, %153, %cst_86 [1] : vector<8x8xf32> to vector<8xf32>
    %158 = vector.shape_cast %157 : vector<8xf32> to vector<8x1xf32>
    %159 = arith.addf %156, %158 : vector<8x1xf32>
    %c2_87 = arith.constant 2 : index
    %c0_88 = arith.constant 0 : index
    %c0_89 = arith.constant 0 : index
    %160 = vector.load %arg12[%c2_87, %c0_88, %c0_89] : memref<4x8x1xf32, #tpu.memory_space<vmem>>, vector<1x8x1xf32>
    %161 = vector.shape_cast %160 : vector<1x8x1xf32> to vector<8x1xf32>
    %162 = vector.shape_cast %159 : vector<8x1xf32> to vector<1x8x1xf32>
    tpu.vector_store %arg12[%c2_87, %c0_88, %c0_89], %162 {strides = array<i32>} : memref<4x8x1xf32, #tpu.memory_space<vmem>>, vector<1x8x1xf32>,
    %c2_90 = arith.constant 2 : index
    %c0_91 = arith.constant 0 : index
    %c0_92 = arith.constant 0 : index
    %163 = vector.load %arg13[%c2_90, %c0_91, %c0_92] : memref<4x8x8xf32, #tpu.memory_space<vmem>>, vector<1x8x8xf32>
    %164 = vector.shape_cast %163 : vector<1x8x8xf32> to vector<8x8xf32>
    %165 = vector.broadcast %150 : vector<8x1xf32> to vector<8x8xf32>
    %166 = arith.mulf %165, %164 : vector<8x8xf32>
    %cst_93 = arith.constant dense<0.000000e+00> : vector<8x8xf32>
    %167 = tpu.matmul %153, %126, %cst_93 {dimension_numbers = #tpu.dot_dimension_numbers<[1], [0], [0], [1], [0, 0, 1, 1], [], []>} : vector<8x8xf32>, vector<8x8xf32>, vector<8x8xf32> -> vector<8x8xf32>
    %168 = arith.addf %166, %167 : vector<8x8xf32>
    %c2_94 = arith.constant 2 : index
    %c0_95 = arith.constant 0 : index
    %c0_96 = arith.constant 0 : index
    %169 = vector.load %arg13[%c2_94, %c0_95, %c0_96] : memref<4x8x8xf32, #tpu.memory_space<vmem>>, vector<1x8x8xf32>
    %170 = vector.shape_cast %169 : vector<1x8x8xf32> to vector<8x8xf32>
    %171 = vector.shape_cast %168 : vector<8x8xf32> to vector<1x8x8xf32>
    tpu.vector_store %arg13[%c2_94, %c0_95, %c0_96], %171 {strides = array<i32>} : memref<4x8x8xf32, #tpu.memory_space<vmem>>, vector<1x8x8xf32>,
    %c2_97 = arith.constant 2 : index
    %c0_98 = arith.constant 0 : index
    %c0_99 = arith.constant 0 : index
    %172 = vector.load %arg11[%c2_97, %c0_98, %c0_99] : memref<4x8x1xf32, #tpu.memory_space<vmem>>, vector<1x8x1xf32>
    %173 = vector.shape_cast %172 : vector<1x8x1xf32> to vector<8x1xf32>
    %174 = vector.shape_cast %148 : vector<8x1xf32> to vector<1x8x1xf32>
    tpu.vector_store %arg11[%c2_97, %c0_98, %c0_99], %174 {strides = array<i32>} : memref<4x8x1xf32, #tpu.memory_space<vmem>>, vector<1x8x1xf32>,
    %175 = vector.extract_strided_slice %4 {offsets = [0, 24], sizes = [8, 8], strides = [1, 1]} : vector<8x32xf32> to vector<8x8xf32>
    %176 = vector.extract_strided_slice %6 {offsets = [0, 24], sizes = [8, 8], strides = [1, 1]} : vector<8x32xf32> to vector<8x8xf32>
    %177 = vector.extract_strided_slice %8 {offsets = [0, 24], sizes = [8, 8], strides = [1, 1]} : vector<8x32xf32> to vector<8x8xf32>
    %178 = tpu.transpose %176, [1, 0] : vector<8x8xf32> -> vector<8x8xf32>
    %cst_100 = arith.constant dense<0.000000e+00> : vector<8x8xf32>
    %179 = tpu.matmul %175, %178, %cst_100 {dimension_numbers = #tpu.dot_dimension_numbers<[1], [0], [0], [1], [0, 0, 1, 1], [], []>} : vector<8x8xf32>, vector<8x8xf32>, vector<8x8xf32> -> vector<8x8xf32>
    %c24 = arith.constant 24 : index
    %c0_101 = arith.constant 0 : index
    %180 = vector.load %arg8[%c24, %c0_101] : memref<32x32xf32, #tpu.memory_space<vmem>>, vector<8x32xf32>
    %cst_102 = arith.constant dense<0.000000e+00> : vector<8x32xf32>
    %181 = tpu.matmul %175, %180, %cst_102 {dimension_numbers = #tpu.dot_dimension_numbers<[1], [0], [0], [1], [0, 0, 1, 1], [], []>} : vector<8x8xf32>, vector<8x32xf32>, vector<8x32xf32> -> vector<8x32xf32>
    %c0_103 = arith.constant 0 : index
    %c24_104 = arith.constant 24 : index
    %182 = vector.load %arg9[%c0_103, %c24_104] : memref<1x32xf32, #tpu.memory_space<vmem>>, vector<1x8xf32>
    %183 = vector.broadcast %182 : vector<1x8xf32> to vector<8x8xf32>
    %184 = arith.mulf %175, %183 : vector<8x8xf32>
    %cst_105 = arith.constant dense<0.000000e+00> : vector<8xf32>
    %185 = vector.multi_reduction <add>, %184, %cst_105 [1] : vector<8x8xf32> to vector<8xf32>
    %186 = vector.shape_cast %185 : vector<8xf32> to vector<8x1xf32>
    %187 = vector.shape_cast %181 : vector<8x32xf32> to vector<8x1x32xf32>
    "tpu.trace_start"() <{level = 10 : i32, message = "ioc,ijc->ioj"}> : () -> ()
    %cst_106 = arith.constant dense<0.000000e+00> : vector<8x1x8xf32>
    %188 = tpu.matmul %187, %12, %cst_106 {dimension_numbers = #tpu.dot_dimension_numbers<[2], [2], [1], [1], [0, 0, 0, 1, 1, 1], [0], [0]>} : vector<8x1x32xf32>, vector<8x8x32xf32>, vector<8x1x8xf32> -> vector<8x1x8xf32>
    "tpu.trace_stop"() : () -> ()
    %189 = vector.shape_cast %188 : vector<8x1x8xf32> to vector<8x8xf32>
    %190 = arith.addf %179, %189 : vector<8x8xf32>
    %191 = vector.broadcast %186 : vector<8x1xf32> to vector<8x8xf32>
    %192 = arith.addf %190, %191 : vector<8x8xf32>
    %cst_107 = arith.constant -9.99999986E+14 : f32
    %193 = vector.broadcast %cst_107 : f32 to vector<8x8xf32>
    %194 = arith.select %21, %192, %193 : vector<8x8xi1>, vector<8x8xf32>
    %c3 = arith.constant 3 : index
    %c0_108 = arith.constant 0 : index
    %c0_109 = arith.constant 0 : index
    %195 = vector.load %arg11[%c3, %c0_108, %c0_109] : memref<4x8x1xf32, #tpu.memory_space<vmem>>, vector<1x8x1xf32>
    %196 = vector.shape_cast %195 : vector<1x8x1xf32> to vector<8x1xf32>
    %cst_110 = arith.constant dense<0xFF800000> : vector<8xf32>
    %197 = vector.multi_reduction <maximumf>, %194, %cst_110 [1] : vector<8x8xf32> to vector<8xf32>
    %198 = vector.shape_cast %197 : vector<8xf32> to vector<8x1xf32>
    %199 = arith.maximumf %196, %198 : vector<8x1xf32>
    %200 = arith.subf %196, %199 : vector<8x1xf32>
    %201 = math.exp %200 : vector<8x1xf32>
    %202 = vector.broadcast %199 : vector<8x1xf32> to vector<8x8xf32>
    %203 = arith.subf %194, %202 : vector<8x8xf32>
    %204 = math.exp %203 : vector<8x8xf32>
    %c3_111 = arith.constant 3 : index
    %c0_112 = arith.constant 0 : index
    %c0_113 = arith.constant 0 : index
    %205 = vector.load %arg12[%c3_111, %c0_112, %c0_113] : memref<4x8x1xf32, #tpu.memory_space<vmem>>, vector<1x8x1xf32>
    %206 = vector.shape_cast %205 : vector<1x8x1xf32> to vector<8x1xf32>
    %207 = arith.mulf %201, %206 : vector<8x1xf32>
    %cst_114 = arith.constant dense<0.000000e+00> : vector<8xf32>
    %208 = vector.multi_reduction <add>, %204, %cst_114 [1] : vector<8x8xf32> to vector<8xf32>
    %209 = vector.shape_cast %208 : vector<8xf32> to vector<8x1xf32>
    %210 = arith.addf %207, %209 : vector<8x1xf32>
    %c3_115 = arith.constant 3 : index
    %c0_116 = arith.constant 0 : index
    %c0_117 = arith.constant 0 : index
    %211 = vector.load %arg12[%c3_115, %c0_116, %c0_117] : memref<4x8x1xf32, #tpu.memory_space<vmem>>, vector<1x8x1xf32>
    %212 = vector.shape_cast %211 : vector<1x8x1xf32> to vector<8x1xf32>
    %213 = vector.shape_cast %210 : vector<8x1xf32> to vector<1x8x1xf32>
    tpu.vector_store %arg12[%c3_115, %c0_116, %c0_117], %213 {strides = array<i32>} : memref<4x8x1xf32, #tpu.memory_space<vmem>>, vector<1x8x1xf32>,
    %c3_118 = arith.constant 3 : index
    %c0_119 = arith.constant 0 : index
    %c0_120 = arith.constant 0 : index
    %214 = vector.load %arg13[%c3_118, %c0_119, %c0_120] : memref<4x8x8xf32, #tpu.memory_space<vmem>>, vector<1x8x8xf32>
    %215 = vector.shape_cast %214 : vector<1x8x8xf32> to vector<8x8xf32>
    %216 = vector.broadcast %201 : vector<8x1xf32> to vector<8x8xf32>
    %217 = arith.mulf %216, %215 : vector<8x8xf32>
    %cst_121 = arith.constant dense<0.000000e+00> : vector<8x8xf32>
    %218 = tpu.matmul %204, %177, %cst_121 {dimension_numbers = #tpu.dot_dimension_numbers<[1], [0], [0], [1], [0, 0, 1, 1], [], []>} : vector<8x8xf32>, vector<8x8xf32>, vector<8x8xf32> -> vector<8x8xf32>
    %219 = arith.addf %217, %218 : vector<8x8xf32>
    %c3_122 = arith.constant 3 : index
    %c0_123 = arith.constant 0 : index
    %c0_124 = arith.constant 0 : index
    %220 = vector.load %arg13[%c3_122, %c0_123, %c0_124] : memref<4x8x8xf32, #tpu.memory_space<vmem>>, vector<1x8x8xf32>
    %221 = vector.shape_cast %220 : vector<1x8x8xf32> to vector<8x8xf32>
    %222 = vector.shape_cast %219 : vector<8x8xf32> to vector<1x8x8xf32>
    tpu.vector_store %arg13[%c3_122, %c0_123, %c0_124], %222 {strides = array<i32>} : memref<4x8x8xf32, #tpu.memory_space<vmem>>, vector<1x8x8xf32>,
    %c3_125 = arith.constant 3 : index
    %c0_126 = arith.constant 0 : index
    %c0_127 = arith.constant 0 : index
    %223 = vector.load %arg11[%c3_125, %c0_126, %c0_127] : memref<4x8x1xf32, #tpu.memory_space<vmem>>, vector<1x8x1xf32>
    %224 = vector.shape_cast %223 : vector<1x8x1xf32> to vector<8x1xf32>
    %225 = vector.shape_cast %199 : vector<8x1xf32> to vector<1x8x1xf32>
    tpu.vector_store %arg11[%c3_125, %c0_126, %c0_127], %225 {strides = array<i32>} : memref<4x8x1xf32, #tpu.memory_space<vmem>>, vector<1x8x1xf32>,
    %c0_i32_128 = arith.constant 0 : i32
    %226 = arith.cmpi eq, %arg2, %c0_i32_128 : i32
    %227 = arith.extui %226 : i1 to i32
    %c0_i32_129 = arith.constant 0 : i32
    %228 = arith.cmpi ne, %227, %c0_i32_129 : i32
    scf.if %228 {
      %c0_130 = arith.constant 0 : index
      %c0_131 = arith.constant 0 : index
      %c0_132 = arith.constant 0 : index
      %229 = vector.load %arg12[%c0_130, %c0_131, %c0_132] : memref<4x8x1xf32, #tpu.memory_space<vmem>>, vector<1x8x1xf32>
      %230 = vector.shape_cast %229 : vector<1x8x1xf32> to vector<8x1xf32>
      %231 = tpu.reciprocal %230 {approx = true} : vector<8x1xf32> -> vector<8x1xf32>
      %c0_133 = arith.constant 0 : index
      %c0_134 = arith.constant 0 : index
      %c0_135 = arith.constant 0 : index
      %232 = vector.load %arg13[%c0_133, %c0_134, %c0_135] : memref<4x8x8xf32, #tpu.memory_space<vmem>>, vector<1x8x8xf32>
      %233 = vector.shape_cast %232 : vector<1x8x8xf32> to vector<8x8xf32>
      %234 = vector.broadcast %231 : vector<8x1xf32> to vector<8x8xf32>
      %235 = arith.mulf %233, %234 : vector<8x8xf32>
      %c1_136 = arith.constant 1 : index
      %c0_137 = arith.constant 0 : index
      %c0_138 = arith.constant 0 : index
      %236 = vector.load %arg12[%c1_136, %c0_137, %c0_138] : memref<4x8x1xf32, #tpu.memory_space<vmem>>, vector<1x8x1xf32>
      %237 = vector.shape_cast %236 : vector<1x8x1xf32> to vector<8x1xf32>
      %238 = tpu.reciprocal %237 {approx = true} : vector<8x1xf32> -> vector<8x1xf32>
      %c1_139 = arith.constant 1 : index
      %c0_140 = arith.constant 0 : index
      %c0_141 = arith.constant 0 : index
      %239 = vector.load %arg13[%c1_139, %c0_140, %c0_141] : memref<4x8x8xf32, #tpu.memory_space<vmem>>, vector<1x8x8xf32>
      %240 = vector.shape_cast %239 : vector<1x8x8xf32> to vector<8x8xf32>
      %241 = vector.broadcast %238 : vector<8x1xf32> to vector<8x8xf32>
      %242 = arith.mulf %240, %241 : vector<8x8xf32>
      %c2_142 = arith.constant 2 : index
      %c0_143 = arith.constant 0 : index
      %c0_144 = arith.constant 0 : index
      %243 = vector.load %arg12[%c2_142, %c0_143, %c0_144] : memref<4x8x1xf32, #tpu.memory_space<vmem>>, vector<1x8x1xf32>
      %244 = vector.shape_cast %243 : vector<1x8x1xf32> to vector<8x1xf32>
      %245 = tpu.reciprocal %244 {approx = true} : vector<8x1xf32> -> vector<8x1xf32>
      %c2_145 = arith.constant 2 : index
      %c0_146 = arith.constant 0 : index
      %c0_147 = arith.constant 0 : index
      %246 = vector.load %arg13[%c2_145, %c0_146, %c0_147] : memref<4x8x8xf32, #tpu.memory_space<vmem>>, vector<1x8x8xf32>
      %247 = vector.shape_cast %246 : vector<1x8x8xf32> to vector<8x8xf32>
      %248 = vector.broadcast %245 : vector<8x1xf32> to vector<8x8xf32>
      %249 = arith.mulf %247, %248 : vector<8x8xf32>
      %c3_148 = arith.constant 3 : index
      %c0_149 = arith.constant 0 : index
      %c0_150 = arith.constant 0 : index
      %250 = vector.load %arg12[%c3_148, %c0_149, %c0_150] : memref<4x8x1xf32, #tpu.memory_space<vmem>>, vector<1x8x1xf32>
      %251 = vector.shape_cast %250 : vector<1x8x1xf32> to vector<8x1xf32>
      %252 = tpu.reciprocal %251 {approx = true} : vector<8x1xf32> -> vector<8x1xf32>
      %c3_151 = arith.constant 3 : index
      %c0_152 = arith.constant 0 : index
      %c0_153 = arith.constant 0 : index
      %253 = vector.load %arg13[%c3_151, %c0_152, %c0_153] : memref<4x8x8xf32, #tpu.memory_space<vmem>>, vector<1x8x8xf32>
      %254 = vector.shape_cast %253 : vector<1x8x8xf32> to vector<8x8xf32>
      %255 = vector.broadcast %252 : vector<8x1xf32> to vector<8x8xf32>
      %256 = arith.mulf %254, %255 : vector<8x8xf32>
      %257 = tpu.concatenate %235, %242, %249, %256 in 1 : vector<8x8xf32>, vector<8x8xf32>, vector<8x8xf32>, vector<8x8xf32> -> vector<8x32xf32>
      %c0_154 = arith.constant 0 : index
      %c0_155 = arith.constant 0 : index
      %c0_156 = arith.constant 0 : index
      %258 = vector.load %arg10[%c0_154, %c0_155, %c0_156] : memref<1x8x32xf32, #tpu.memory_space<vmem>>, vector<1x8x32xf32>
      %259 = vector.shape_cast %258 : vector<1x8x32xf32> to vector<8x32xf32>
      %260 = vector.shape_cast %257 : vector<8x32xf32> to vector<1x8x32xf32>
      tpu.vector_store %arg10[%c0_154, %c0_155, %c0_156], %260 {strides = array<i32>} : memref<1x8x32xf32, #tpu.memory_space<vmem>>, vector<1x8x32xf32>,
    } else {
    }
    return
  }
  func.func @transform_0(%arg0: i32, %arg1: i32, %arg2: i32, %arg3: memref<2xi32, #tpu.memory_space<smem>>) -> (i32, i32, i32) {
    %c0_i32 = arith.constant 0 : i32
    %c0_i32_0 = arith.constant 0 : i32
    return %arg0, %arg1, %c0_i32 : i32, i32, i32
  }
  func.func @transform_1(%arg0: i32, %arg1: i32, %arg2: i32, %arg3: memref<2xi32, #tpu.memory_space<smem>>) -> (i32, i32, i32) {
    %c0_i32 = arith.constant 0 : i32
    %c0_i32_0 = arith.constant 0 : i32
    return %arg0, %arg2, %c0_i32 : i32, i32, i32
  }
  func.func @transform_2(%arg0: i32, %arg1: i32, %arg2: i32, %arg3: memref<2xi32, #tpu.memory_space<smem>>) -> (i32, i32, i32) {
    %c0_i32 = arith.constant 0 : i32
    %c0_i32_0 = arith.constant 0 : i32
    return %arg0, %arg2, %c0_i32 : i32, i32, i32
  }
  func.func @transform_3(%arg0: i32, %arg1: i32, %arg2: i32, %arg3: memref<2xi32, #tpu.memory_space<smem>>) -> (i32, i32, i32, i32) {
    %c0_i32 = arith.constant 0 : i32
    %c0_i32_0 = arith.constant 0 : i32
    return %arg0, %arg1, %arg2, %c0_i32 : i32, i32, i32, i32
  }
  func.func @transform_4(%arg0: i32, %arg1: i32, %arg2: i32, %arg3: memref<2xi32, #tpu.memory_space<smem>>) -> (i32, i32) {
    %c0_i32 = arith.constant 0 : i32
    %c0_i32_0 = arith.constant 0 : i32
    %c0_i32_1 = arith.constant 0 : i32
    return %c0_i32, %c0_i32_0 : i32, i32
  }
  func.func @transform_5(%arg0: i32, %arg1: i32, %arg2: i32, %arg3: memref<2xi32, #tpu.memory_space<smem>>) -> (i32, i32) {
    %c0_i32 = arith.constant 0 : i32
    %c0_i32_0 = arith.constant 0 : i32
    %c0_i32_1 = arith.constant 0 : i32
    return %c0_i32, %c0_i32_0 : i32, i32
  }
  func.func @transform_6(%arg0: i32, %arg1: i32, %arg2: i32, %arg3: memref<2xi32, #tpu.memory_space<smem>>) -> (i32, i32, i32) {
    %c0_i32 = arith.constant 0 : i32
    %c0_i32_0 = arith.constant 0 : i32
    return %arg0, %arg1, %c0_i32 : i32, i32, i32
  }
}

module attributes {stable_mosaic.version = 11 : i64} {
  func.func @_linear_kernel(%arg0: i32, %arg1: memref<16x32xf32, #tpu.memory_space<vmem>>, %arg2: memref<32x32xf32, #tpu.memory_space<vmem>>, %arg3: memref<1x32xf32, #tpu.memory_space<vmem>>, %arg4: memref<16x32xf32, #tpu.memory_space<vmem>>) attributes {dimension_semantics = [#tpu.dimension_semantics<parallel>], iteration_bounds = array<i64: 1>, scalar_prefetch = 0 : i64, scratch_operands = 0 : i64, tpu.core_type = #tpu.core_type<tc>, window_params = [{transform_indices = @transform_0, window_bounds = array<i64: 16, 32>}, {pipeline_mode = #tpu.pipeline_mode<synchronous>, transform_indices = @transform_1, window_bounds = array<i64: 32, 32>}, {pipeline_mode = #tpu.pipeline_mode<synchronous>, transform_indices = @transform_2, window_bounds = array<i64: 1, 32>}, {transform_indices = @transform_3, window_bounds = array<i64: 16, 32>}]} {
    %c0 = arith.constant 0 : index
    %c0_0 = arith.constant 0 : index
    %0 = vector.load %arg1[%c0, %c0_0] : memref<16x32xf32, #tpu.memory_space<vmem>>, vector<16x32xf32>
    %c0_1 = arith.constant 0 : index
    %c0_2 = arith.constant 0 : index
    %1 = vector.load %arg2[%c0_1, %c0_2] : memref<32x32xf32, #tpu.memory_space<vmem>>, vector<32x32xf32>
    %cst = arith.constant dense<0.000000e+00> : vector<16x32xf32>
    %2 = tpu.matmul %0, %1, %cst {dimension_numbers = #tpu.dot_dimension_numbers<[1], [0], [0], [1], [0, 0, 1, 1], [], []>} : vector<16x32xf32>, vector<32x32xf32>, vector<16x32xf32> -> vector<16x32xf32>
    %c0_3 = arith.constant 0 : index
    %c0_4 = arith.constant 0 : index
    %3 = vector.load %arg3[%c0_3, %c0_4] : memref<1x32xf32, #tpu.memory_space<vmem>>, vector<1x32xf32>
    %4 = vector.broadcast %3 : vector<1x32xf32> to vector<16x32xf32>
    %5 = arith.addf %2, %4 : vector<16x32xf32>
    %c0_5 = arith.constant 0 : index
    %c0_6 = arith.constant 0 : index
    %6 = vector.load %arg4[%c0_5, %c0_6] : memref<16x32xf32, #tpu.memory_space<vmem>>, vector<16x32xf32>
    tpu.vector_store %arg4[%c0_5, %c0_6], %5 {strides = array<i32>} : memref<16x32xf32, #tpu.memory_space<vmem>>, vector<16x32xf32>,
    return
  }
  func.func @transform_0(%arg0: i32) -> (i32, i32) {
    %c0_i32 = arith.constant 0 : i32
    %c0_i32_0 = arith.constant 0 : i32
    return %arg0, %c0_i32 : i32, i32
  }
  func.func @transform_1(%arg0: i32) -> (i32, i32) {
    %c0_i32 = arith.constant 0 : i32
    %c0_i32_0 = arith.constant 0 : i32
    %c0_i32_1 = arith.constant 0 : i32
    return %c0_i32, %c0_i32_0 : i32, i32
  }
  func.func @transform_2(%arg0: i32) -> (i32, i32) {
    %c0_i32 = arith.constant 0 : i32
    %c0_i32_0 = arith.constant 0 : i32
    %c0_i32_1 = arith.constant 0 : i32
    return %c0_i32, %c0_i32_0 : i32, i32
  }
  func.func @transform_3(%arg0: i32) -> (i32, i32) {
    %c0_i32 = arith.constant 0 : i32
    %c0_i32_0 = arith.constant 0 : i32
    return %arg0, %c0_i32 : i32, i32
  }
}

</mosaic_0001>

<llo_original>
// kernel: transformer_encoder_forward.9
$region0: #{transformer_encoder_forward.9}
  #allocation0 [shape = 'u32[]', space=smem, size = 0x4, offset = 0x4, fixed_abs, tag = 'smem constant byte address 0x4 - core index']
  #allocation1 [shape = 'u32[144,128]{1,0:T(1,128)}', space=vmem, size = 0x12000, scoped, tag = 'internal scratch']
  %s0 = inlined_call_operand.vmem [shape: f32[16,32], index: 0, kind: input, shape index: {}]
  %s1 = inlined_call_operand.vmem [shape: f32[32,32], index: 1, kind: input, shape index: {}]
  %s2 = inlined_call_operand.vmem [shape: f32[1,32], index: 2, kind: input, shape index: {}]
  %s3 = inlined_call_operand.vmem [shape: f32[16,32], index: 3, kind: output, shape index: {}]
  %s4 = sld [smem:[#allocation0]]
  $region22: #{transformer_encoder_forward.9} parent=0
    _
  %s6 = ssub.s32 1, %s4
  %s7 = scalar_select 0, %s6, %s4
  // Predicated region
  $region2: #{transformer_encoder_forward.9} parent=0 // pred_check
    _
  $region3: #{transformer_encoder_forward.9} parent=0 // pred_check_branch
    %9 = sbr.rel (0) target = $region5
  $region4: #{transformer_encoder_forward.9} parent=0 // pred_region
    _
  $region5: #{transformer_encoder_forward.9} parent=0 // pred_fallthru
    _
  // Predicated region
  $region6: #{transformer_encoder_forward.9} parent=0 // pred_check
    _
  $region7: #{transformer_encoder_forward.9} parent=0 // pred_check_branch
    %11 = sbr.rel (0) target = $region9
  $region8: #{transformer_encoder_forward.9} parent=0 // pred_region
    _
  $region9: #{transformer_encoder_forward.9} parent=0 // pred_fallthru
    _
  // Predicated region
  $region10: #{transformer_encoder_forward.9} parent=0 // pred_check
    _
  $region11: #{transformer_encoder_forward.9} parent=0 // pred_check_branch
    %13 = sbr.rel (0) target = $region13
  $region12: #{transformer_encoder_forward.9} parent=0 // pred_region
    _
  $region13: #{transformer_encoder_forward.9} parent=0 // pred_fallthru
    _
  %v14 = vld [vmem:[%s0] sm:$0xff]
  %v15 = vld [vmem:[%s0 + $0x8] sm:$0xff]
  %v16 = vld [vmem:[%s1] sm:$0xff]
  %v17 = vld [vmem:[%s1 + $0x8] sm:$0xff]
  %v18 = vld [vmem:[%s1 + $0x10] sm:$0xff]
  %v19 = vld [vmem:[%s1 + $0x18] sm:$0xff]
  %v20 = vld [vmem:[%s2] sm:$0x1]
  %v22 = vlaneseq
  %v23 = vshrl.u32 %v22, 7
  %v24 = vsub.s32 0, %v23
  %v25 = vrot.slane %v20, %v24
  %vm27 = vcmask 261120
  %v29 = vsel %vm27, %v14, 0
  %v32 = vsel %vm27, %v15, 0
  %34 = vmatprep.subr.mxu0 0.0
  %35 = vmatpush1.msra.mxu0 %v16
  %36 = vmatprep.subr.mxu0 0.0
  %37 = vmatpush1.msra.mxu0 %v17
  %38 = vmatprep.subr.mxu0 0.0
  %39 = vmatpush1.msra.mxu0 %v18
  %40 = vmatprep.subr.mxu0 0.0
  %41 = vmatpush1.msra.mxu0 %v19
  %42 = vmatprep.subr.mxu0 0.0
  %43 = vmatpush1.msra.mxu0 0.0
  %44 = vmatprep.subr.mxu0 0.0
  %45 = vmatpush1.msra.mxu0 0.0
  %46 = vmatprep.subr.mxu0 0.0
  %47 = vmatpush1.msra.mxu0 0.0
  %48 = vmatprep.subr.mxu0 0.0
  %49 = vmatpush1.msra.mxu0 0.0
  %50 = vmatprep.subr.mxu0 0.0
  %51 = vmatpush1.msra.mxu0 0.0
  %52 = vmatprep.subr.mxu0 0.0
  %53 = vmatpush1.msra.mxu0 0.0
  %54 = vmatprep.subr.mxu0 0.0
  %55 = vmatpush1.msra.mxu0 0.0
  %56 = vmatprep.subr.mxu0 0.0
  %57 = vmatpush1.msra.mxu0 0.0
  %58 = vmatprep.subr.mxu0 0.0
  %59 = vmatpush1.msra.mxu0 0.0
  %60 = vmatprep.subr.mxu0 0.0
  %61 = vmatpush1.msra.mxu0 0.0
  %62 = vmatprep.subr.mxu0 0.0
  %63 = vmatpush1.msra.mxu0 0.0
  %64 = vmatprep.subr.mxu0 0.0
  %65 = vmatpush1.msra.mxu0 0.0
  %66 = vmatprep.subr.mxu0 0.0
  %67 = vmatpush1.msra.mxu0 0.0
  %68 = vmatprep.subr.mxu0 0.0
  %69 = vmatpush1.msra.mxu0 0.0
  %70 = vmatprep.subr.mxu0 0.0
  %71 = vmatpush1.msra.mxu0 0.0
  %72 = vmatprep.subr.mxu0 0.0
  %73 = vmatpush1.msra.mxu0 0.0
  %74 = vmatprep.subr.mxu0 0.0
  %75 = vmatpush1.msra.mxu0 0.0
  %76 = vmatprep.subr.mxu0 0.0
  %77 = vmatpush1.msra.mxu0 0.0
  %78 = vmatprep.subr.mxu0 0.0
  %79 = vmatpush1.msra.mxu0 0.0
  %80 = vmatprep.subr.mxu0 0.0
  %81 = vmatpush1.msra.mxu0 0.0
  %82 = vmatprep.subr.mxu0 0.0
  %83 = vmatpush1.msra.mxu0 0.0
  %84 = vmatprep.subr.mxu0 0.0
  %85 = vmatpush1.msra.mxu0 0.0
  %86 = vmatprep.subr.mxu0 0.0
  %87 = vmatpush1.msra.mxu0 0.0
  %88 = vmatprep.subr.mxu0 0.0
  %89 = vmatpush1.msra.mxu0 0.0
  %90 = vmatprep.subr.mxu0 0.0
  %91 = vmatpush1.msra.mxu0 0.0
  %92 = vmatprep.subr.mxu0 0.0
  %93 = vmatpush1.msra.mxu0 0.0
  %94 = vmatprep.subr.mxu0 0.0
  %95 = vmatpush1.msra.mxu0 0.0
  %96 = vmatprep.subr.mxu0 0.0
  %97 = vmatpush1.msra.mxu0 0.0
  %98 = vmatprep.mubr.f32.mxu0 0.0
  %99 = vmatmul.mubr.f32.gmra.mrb[0].mxu0 %v29
  %v100 = vpop.f32.mrb[0].mxu0
  %v101 = vadd.f32 %v25, %v100
  %v102 = vpop.f32.mrb[0].mxu0
  %103 = vmatprep.mubr.f32.mxu0 0.0
  %104 = vmatmul.mubr.f32.gmra.mrb[0].mxu0 %v32
  %v105 = vpop.f32.mrb[0].mxu0
  %v106 = vadd.f32 %v25, %v105
  %v107 = vpop.f32.mrb[0].mxu0
  %108 = vdwg.mxu0
  %109 = vst.msk [vmem:[%s3] sm:$0xff] %vm27, %v101
  %110 = vst.msk [vmem:[%s3 + $0x8] sm:$0xff] %vm27, %v106
  // Predicated region
  $region14: #{transformer_encoder_forward.9} parent=0 // pred_check
    _
  $region15: #{transformer_encoder_forward.9} parent=0 // pred_check_branch
    %112 = sbr.rel (0) target = $region17
  $region16: #{transformer_encoder_forward.9} parent=0 // pred_region
    _
  $region17: #{transformer_encoder_forward.9} parent=0 // pred_fallthru
    _
  // Predicated region
  $region18: #{transformer_encoder_forward.9} parent=0 // pred_check
    _
  $region19: #{transformer_encoder_forward.9} parent=0 // pred_check_branch
    %114 = sbr.rel (0) target = $region21
  $region20: #{transformer_encoder_forward.9} parent=0 // pred_region
    _
  $region21: #{transformer_encoder_forward.9} parent=0 // pred_fallthru
    _

// kernel: transformer_encoder_forward.7
$region0: #{transformer_encoder_forward.7}
  #allocation0 [shape = 'u32[]', space=smem, size = 0x4, offset = 0x4, fixed_abs, tag = 'smem constant byte address 0x4 - core index']
  #allocation1 [shape = 'u32[144,128]{1,0:T(1,128)}', space=vmem, size = 0x12000, scoped, tag = 'internal scratch']
  %s0 = inlined_call_operand.vmem [shape: f32[33,32], index: 0, kind: input, shape index: {}]
  %s1 = inlined_call_operand.vmem [shape: f32[32,32], index: 1, kind: input, shape index: {}]
  %s2 = inlined_call_operand.vmem [shape: f32[1,32], index: 2, kind: input, shape index: {}]
  %s3 = inlined_call_operand.vmem [shape: f32[33,32], index: 3, kind: output, shape index: {}]
  %s4 = sld [smem:[#allocation0]]
  $region22: #{transformer_encoder_forward.7} parent=0
    _
  %s6 = ssub.s32 1, %s4
  %s7 = scalar_select 0, %s6, %s4
  // Predicated region
  $region2: #{transformer_encoder_forward.7} parent=0 // pred_check
    _
  $region3: #{transformer_encoder_forward.7} parent=0 // pred_check_branch
    %9 = sbr.rel (0) target = $region5
  $region4: #{transformer_encoder_forward.7} parent=0 // pred_region
    _
  $region5: #{transformer_encoder_forward.7} parent=0 // pred_fallthru
    _
  // Predicated region
  $region6: #{transformer_encoder_forward.7} parent=0 // pred_check
    _
  $region7: #{transformer_encoder_forward.7} parent=0 // pred_check_branch
    %11 = sbr.rel (0) target = $region9
  $region8: #{transformer_encoder_forward.7} parent=0 // pred_region
    _
  $region9: #{transformer_encoder_forward.7} parent=0 // pred_fallthru
    _
  // Predicated region
  $region10: #{transformer_encoder_forward.7} parent=0 // pred_check
    _
  $region11: #{transformer_encoder_forward.7} parent=0 // pred_check_branch
    %13 = sbr.rel (0) target = $region13
  $region12: #{transformer_encoder_forward.7} parent=0 // pred_region
    _
  $region13: #{transformer_encoder_forward.7} parent=0 // pred_fallthru
    _
  %v14 = vld [vmem:[%s0] sm:$0xff]
  %v15 = vld [vmem:[%s0 + $0x8] sm:$0xff]
  %v16 = vld [vmem:[%s0 + $0x10] sm:$0xff]
  %v17 = vld [vmem:[%s0 + $0x18] sm:$0xff]
  %v18 = vld [vmem:[%s0 + $0x20] sm:$0x1]
  %v19 = vld [vmem:[%s1] sm:$0xff]
  %v20 = vld [vmem:[%s1 + $0x8] sm:$0xff]
  %v21 = vld [vmem:[%s1 + $0x10] sm:$0xff]
  %v22 = vld [vmem:[%s1 + $0x18] sm:$0xff]
  %v23 = vld [vmem:[%s2] sm:$0x1]
  %v25 = vlaneseq
  %v26 = vshrl.u32 %v25, 7
  %v27 = vsub.s32 0, %v26
  %v28 = vrot.slane %v23, %v27
  %vm30 = vcmask 261120
  %v32 = vsel %vm30, %v14, 0
  %v35 = vsel %vm30, %v15, 0
  %v38 = vsel %vm30, %v16, 0
  %v41 = vsel %vm30, %v17, 0
  %v44 = vsel %vm30, %v18, 0
  %46 = vmatprep.subr.mxu0 0.0
  %47 = vmatpush1.msra.mxu0 %v19
  %48 = vmatprep.subr.mxu0 0.0
  %49 = vmatpush1.msra.mxu0 %v20
  %50 = vmatprep.subr.mxu0 0.0
  %51 = vmatpush1.msra.mxu0 %v21
  %52 = vmatprep.subr.mxu0 0.0
  %53 = vmatpush1.msra.mxu0 %v22
  %54 = vmatprep.subr.mxu0 0.0
  %55 = vmatpush1.msra.mxu0 0.0
  %56 = vmatprep.subr.mxu0 0.0
  %57 = vmatpush1.msra.mxu0 0.0
  %58 = vmatprep.subr.mxu0 0.0
  %59 = vmatpush1.msra.mxu0 0.0
  %60 = vmatprep.subr.mxu0 0.0
  %61 = vmatpush1.msra.mxu0 0.0
  %62 = vmatprep.subr.mxu0 0.0
  %63 = vmatpush1.msra.mxu0 0.0
  %64 = vmatprep.subr.mxu0 0.0
  %65 = vmatpush1.msra.mxu0 0.0
  %66 = vmatprep.subr.mxu0 0.0
  %67 = vmatpush1.msra.mxu0 0.0
  %68 = vmatprep.subr.mxu0 0.0
  %69 = vmatpush1.msra.mxu0 0.0
  %70 = vmatprep.subr.mxu0 0.0
  %71 = vmatpush1.msra.mxu0 0.0
  %72 = vmatprep.subr.mxu0 0.0
  %73 = vmatpush1.msra.mxu0 0.0
  %74 = vmatprep.subr.mxu0 0.0
  %75 = vmatpush1.msra.mxu0 0.0
  %76 = vmatprep.subr.mxu0 0.0
  %77 = vmatpush1.msra.mxu0 0.0
  %78 = vmatprep.subr.mxu0 0.0
  %79 = vmatpush1.msra.mxu0 0.0
  %80 = vmatprep.subr.mxu0 0.0
  %81 = vmatpush1.msra.mxu0 0.0
  %82 = vmatprep.subr.mxu0 0.0
  %83 = vmatpush1.msra.mxu0 0.0
  %84 = vmatprep.subr.mxu0 0.0
  %85 = vmatpush1.msra.mxu0 0.0
  %86 = vmatprep.subr.mxu0 0.0
  %87 = vmatpush1.msra.mxu0 0.0
  %88 = vmatprep.subr.mxu0 0.0
  %89 = vmatpush1.msra.mxu0 0.0
  %90 = vmatprep.subr.mxu0 0.0
  %91 = vmatpush1.msra.mxu0 0.0
  %92 = vmatprep.subr.mxu0 0.0
  %93 = vmatpush1.msra.mxu0 0.0
  %94 = vmatprep.subr.mxu0 0.0
  %95 = vmatpush1.msra.mxu0 0.0
  %96 = vmatprep.subr.mxu0 0.0
  %97 = vmatpush1.msra.mxu0 0.0
  %98 = vmatprep.subr.mxu0 0.0
  %99 = vmatpush1.msra.mxu0 0.0
  %100 = vmatprep.subr.mxu0 0.0
  %101 = vmatpush1.msra.mxu0 0.0
  %102 = vmatprep.subr.mxu0 0.0
  %103 = vmatpush1.msra.mxu0 0.0
  %104 = vmatprep.subr.mxu0 0.0
  %105 = vmatpush1.msra.mxu0 0.0
  %106 = vmatprep.subr.mxu0 0.0
  %107 = vmatpush1.msra.mxu0 0.0
  %108 = vmatprep.subr.mxu0 0.0
  %109 = vmatpush1.msra.mxu0 0.0
  %110 = vmatprep.mubr.f32.mxu0 0.0
  %111 = vmatmul.mubr.f32.gmra.mrb[0].mxu0 %v32
  %v112 = vpop.f32.mrb[0].mxu0
  %v113 = vadd.f32 %v28, %v112
  %v114 = vpop.f32.mrb[0].mxu0
  %115 = vmatprep.mubr.f32.mxu0 0.0
  %116 = vmatmul.mubr.f32.gmra.mrb[0].mxu0 %v35
  %v117 = vpop.f32.mrb[0].mxu0
  %v118 = vadd.f32 %v28, %v117
  %v119 = vpop.f32.mrb[0].mxu0
  %120 = vmatprep.mubr.f32.mxu0 0.0
  %121 = vmatmul.mubr.f32.gmra.mrb[0].mxu0 %v38
  %v122 = vpop.f32.mrb[0].mxu0
  %v123 = vadd.f32 %v28, %v122
  %v124 = vpop.f32.mrb[0].mxu0
  %125 = vmatprep.mubr.f32.mxu0 0.0
  %126 = vmatmul.mubr.f32.gmra.mrb[0].mxu0 %v41
  %v127 = vpop.f32.mrb[0].mxu0
  %v128 = vadd.f32 %v28, %v127
  %v129 = vpop.f32.mrb[0].mxu0
  %130 = vmatprep.mubr.f32.mxu0 0.0
  %131 = vmatmul.mubr.f32.gmra.mrb[0].mxu0 %v44
  %v132 = vpop.f32.mrb[0].mxu0
  %v133 = vadd.f32 %v28, %v132
  %v134 = vpop.f32.mrb[0].mxu0
  %135 = vdwg.mxu0
  %136 = vst.msk [vmem:[%s3] sm:$0xff] %vm30, %v113
  %137 = vst.msk [vmem:[%s3 + $0x8] sm:$0xff] %vm30, %v118
  %138 = vst.msk [vmem:[%s3 + $0x10] sm:$0xff] %vm30, %v123
  %139 = vst.msk [vmem:[%s3 + $0x18] sm:$0xff] %vm30, %v128
  %vm140 = vcmask 253952
  %141 = vst.msk [vmem:[%s3 + $0x20] sm:$0x1] %vm140, %v133
  // Predicated region
  $region14: #{transformer_encoder_forward.7} parent=0 // pred_check
    _
  $region15: #{transformer_encoder_forward.7} parent=0 // pred_check_branch
    %143 = sbr.rel (0) target = $region17
  $region16: #{transformer_encoder_forward.7} parent=0 // pred_region
    _
  $region17: #{transformer_encoder_forward.7} parent=0 // pred_fallthru
    _
  // Predicated region
  $region18: #{transformer_encoder_forward.7} parent=0 // pred_check
    _
  $region19: #{transformer_encoder_forward.7} parent=0 // pred_check_branch
    %145 = sbr.rel (0) target = $region21
  $region20: #{transformer_encoder_forward.7} parent=0 // pred_region
    _
  $region21: #{transformer_encoder_forward.7} parent=0 // pred_fallthru
    _

// kernel: transformer_encoder_forward.11
$region0: #{transformer_encoder_forward.11}
  #allocation0 [shape = 'u32[]', space=smem, size = 0x4, offset = 0x4, fixed_abs, tag = 'smem constant byte address 0x4 - core index']
  #allocation1 [shape = 'u32[144,128]{1,0:T(1,128)}', space=vmem, size = 0x12000, scoped, tag = 'internal scratch']
  #allocation2 [shape = 'f32[4,8,1]{2,1,0:T(8,128)}', space=vmem, size = 0x4000, scoped, tag = 'scratch operand']
  #allocation3 [shape = 'f32[4,8,1]{2,1,0:T(8,128)}', space=vmem, size = 0x4000, scoped, tag = 'scratch operand']
  #allocation4 [shape = 'f32[4,8,8]{2,1,0:T(8,128)}', space=vmem, size = 0x4000, scoped, tag = 'scratch operand']
  #allocation5 [shape = 's32[1]{0}', space=sflag, size = 0x4, scoped, tag = 'scoped memory for transformer_encoder_forward.11']
  #allocation6 [shape = 'u8[512]{0}', space=smem, size = 0x200, scoped, tag = 'prefetched SMEM operand 0']
  %s0 = inlined_call_operand.vmem [shape: s32[2], index: 0, kind: input, shape index: {}]
  %s1 = inlined_call_operand.vmem [shape: f32[2,8,32], index: 1, kind: input, shape index: {}]
  %s2 = inlined_call_operand.vmem [shape: f32[2,8,32], index: 2, kind: input, shape index: {}]
  %s3 = inlined_call_operand.vmem [shape: f32[2,8,32], index: 3, kind: input, shape index: {}]
  %s4 = inlined_call_operand.vmem [shape: f32[2,8,8,32], index: 4, kind: input, shape index: {}]
  %s5 = inlined_call_operand.vmem [shape: f32[32,32], index: 5, kind: input, shape index: {}]
  %s6 = inlined_call_operand.vmem [shape: f32[1,32], index: 6, kind: input, shape index: {}]
  %s7 = inlined_call_operand.hbm [shape: f32[2,8,32], index: 7, kind: output, shape index: {}]
  %s8 = sld [smem:[#allocation0]]
  $region65: #{transformer_encoder_forward.11} parent=0
    _
  %s10 = ssub.s32 1, %s8
  %s11 = scalar_select 0, %s10, %s8
  %s12 = sshll.u32 %s0, 4
  %s13 = int_to_ptr.vmem [resolvable:$true] %s12
  %15 = dma.vmem_to_smem %s13, 16, [#allocation6], [#allocation5]
  %16 = dma.done [#allocation5], 16
  %17 = sfence
  $region1: #{transformer_encoder_forward.11} parent=0
    #allocation7 [shape = 'u8[8192]{0}', space=vmem, size = 0x2000, scoped, tag = 'output window, operand 0']
    #allocation8 [shape = 's32[2]{0}', space=sflag, size = 0x8, scoped, tag = 'scoped memory for transformer_encoder_forward.11']
    %18 = vsyncpa [#allocation8], 0
    %s19 = scalar_lea.sflag [#allocation8], 1
    %20 = vsyncpa %s19, 0
    loop: start=0, step=1, limit=4
    $region2: #{transformer_encoder_forward.11} parent=1 // loop_pre_header
      _
    $region3: #{transformer_encoder_forward.11} parent=1 // loop_header
      %s22 = sphi 0, %s26
      %p23 = scmp.ge.s32.totalorder %s22, 4
      %s29 = sphi 0, %s48
      %s30 = sphi 0, %s44
      %s31 = sphi 0, %s40
      %s32 = sphi 0, %s29
      %s33 = sphi 0, %s30
      %s34 = sphi 0, %s31
      %s35 = sphi 0, %s32
      %s36 = sphi 0, %s33
      %s37 = sphi 0, %s34
      %s53 = sphi 0, %s55
      %s56 = sphi 0, %s53
      %s57 = sphi 0, %s56
      %s73 = sphi 0, %s57
      %s81 = sphi 0, %s83
      %s84 = sphi 0, %s81
      %s85 = sphi 0, %s84
      %s101 = sphi 0, %s85
      %s109 = sphi 0, %s111
      %s112 = sphi 0, %s109
      %s113 = sphi 0, %s112
      %s129 = sphi 0, %s113
      %s139 = sphi 0, %s141
      %s142 = sphi 0, %s139
      %s143 = sphi 0, %s142
      %s159 = sphi 0, %s143
      %s163 = sphi 0, %s163
      %s165 = sphi 0, %s163
      %s166 = sphi 0, %s165
      %s180 = sphi 0, %s166
      %s184 = sphi 0, %s184
      %s186 = sphi 0, %s184
      %s187 = sphi 0, %s186
      %s201 = sphi 0, %s187
      %s209 = sphi 0, %s211
      %s212 = sphi 0, %s209
      %s213 = sphi 0, %s212
      %s229 = sphi 0, %s213
    $region4: #{transformer_encoder_forward.11} parent=1 // loop_header_branch
      %25 = sbr.rel (%p23) target = $region8
    $region5: #{transformer_encoder_forward.11} parent=1 // loop_body
      %s27 = ssub.s32 %s22, 1
      %s28 = ssub.s32 %s22, 2
      %s38 = sadd.s32 1, %s31
      %p39 = scmp.ge.s32.totalorder %s38, 1
      %s40 = scalar_select %p39, 0, %s38
      %s41 = sadd.s32 1, %s30
      %s42 = scalar_select %p39, %s41, %s30
      %p43 = scmp.ge.s32.totalorder %s42, 1
      %s44 = scalar_select %p43, 0, %s42
      %s45 = sadd.s32 1, %s29
      %s46 = scalar_select %p43, %s45, %s29
      %p47 = scmp.ge.s32.totalorder %s46, 2
      %s48 = scalar_select %p47, 0, %s46
      %s49 = ssub.s32 %s29, %s48
      %s50 = ssub.s32 %s30, %s44
      %s51 = sor.u32 %s49, %s50
      %p52 = scmp.eq.s32.totalorder %s51, 0
      %s54 = sadd.s32 %s53, 1
      %s55 = scalar_select %p52, %s53, %s54
      %p58 = pneg %p52
      %p59 = scmp.eq.s32.totalorder %s22, 1
      %p60 = por %p58, %p59
      %p61 = scmp.ne.s32.totalorder %s53, %s56
      %p62 = scmp.eq.s32.totalorder %s22, 0
      %p63 = por %p61, %p62
      %p64 = scmp.ne.s32.totalorder %s53, %s56
      %p65 = scmp.eq.s32.totalorder %s27, 1
      %p66 = por %p64, %p65
      %p67 = scmp.ne.s32.totalorder %s56, %s57
      %p68 = scmp.eq.s32.totalorder %s27, 0
      %p69 = por %p67, %p68
      %p70 = scmp.ne.s32.totalorder %s56, %s57
      %p71 = scmp.eq.s32.totalorder %s28, 1
      %p72 = por %p70, %p71
      %p74 = scmp.ne.s32.totalorder %s57, %s73
      %p75 = scmp.eq.s32.totalorder %s28, 0
      %p76 = por %p74, %p75
      %s77 = ssub.s32 %s29, %s48
      %s78 = ssub.s32 %s31, %s40
      %s79 = sor.u32 %s77, %s78
      %p80 = scmp.eq.s32.totalorder %s79, 0
      %s82 = sadd.s32 %s81, 1
      %s83 = scalar_select %p80, %s81, %s82
      %p86 = pneg %p80
      %p87 = scmp.eq.s32.totalorder %s22, 1
      %p88 = por %p86, %p87
      %p89 = scmp.ne.s32.totalorder %s81, %s84
      %p90 = scmp.eq.s32.totalorder %s22, 0
      %p91 = por %p89, %p90
      %p92 = scmp.ne.s32.totalorder %s81, %s84
      %p93 = scmp.eq.s32.totalorder %s27, 1
      %p94 = por %p92, %p93
      %p95 = scmp.ne.s32.totalorder %s84, %s85
      %p96 = scmp.eq.s32.totalorder %s27, 0
      %p97 = por %p95, %p96
      %p98 = scmp.ne.s32.totalorder %s84, %s85
      %p99 = scmp.eq.s32.totalorder %s28, 1
      %p100 = por %p98, %p99
      %p102 = scmp.ne.s32.totalorder %s85, %s101
      %p103 = scmp.eq.s32.totalorder %s28, 0
      %p104 = por %p102, %p103
      %s105 = ssub.s32 %s29, %s48
      %s106 = ssub.s32 %s31, %s40
      %s107 = sor.u32 %s105, %s106
      %p108 = scmp.eq.s32.totalorder %s107, 0
      %s110 = sadd.s32 %s109, 1
      %s111 = scalar_select %p108, %s109, %s110
      %p114 = pneg %p108
      %p115 = scmp.eq.s32.totalorder %s22, 1
      %p116 = por %p114, %p115
      %p117 = scmp.ne.s32.totalorder %s109, %s112
      %p118 = scmp.eq.s32.totalorder %s22, 0
      %p119 = por %p117, %p118
      %p120 = scmp.ne.s32.totalorder %s109, %s112
      %p121 = scmp.eq.s32.totalorder %s27, 1
      %p122 = por %p120, %p121
      %p123 = scmp.ne.s32.totalorder %s112, %s113
      %p124 = scmp.eq.s32.totalorder %s27, 0
      %p125 = por %p123, %p124
      %p126 = scmp.ne.s32.totalorder %s112, %s113
      %p127 = scmp.eq.s32.totalorder %s28, 1
      %p128 = por %p126, %p127
      %p130 = scmp.ne.s32.totalorder %s113, %s129
      %p131 = scmp.eq.s32.totalorder %s28, 0
      %p132 = por %p130, %p131
      %s133 = ssub.s32 %s29, %s48
      %s134 = ssub.s32 %s30, %s44
      %s135 = sor.u32 %s133, %s134
      %s136 = ssub.s32 %s31, %s40
      %s137 = sor.u32 %s135, %s136
      %p138 = scmp.eq.s32.totalorder %s137, 0
      %s140 = sadd.s32 %s139, 1
      %s141 = scalar_select %p138, %s139, %s140
      %p144 = pneg %p138
      %p145 = scmp.eq.s32.totalorder %s22, 1
      %p146 = por %p144, %p145
      %p147 = scmp.ne.s32.totalorder %s139, %s142
      %p148 = scmp.eq.s32.totalorder %s22, 0
      %p149 = por %p147, %p148
      %p150 = scmp.ne.s32.totalorder %s139, %s142
      %p151 = scmp.eq.s32.totalorder %s27, 1
      %p152 = por %p150, %p151
      %p153 = scmp.ne.s32.totalorder %s142, %s143
      %p154 = scmp.eq.s32.totalorder %s27, 0
      %p155 = por %p153, %p154
      %p156 = scmp.ne.s32.totalorder %s142, %s143
      %p157 = scmp.eq.s32.totalorder %s28, 1
      %p158 = por %p156, %p157
      %p160 = scmp.ne.s32.totalorder %s143, %s159
      %p161 = scmp.eq.s32.totalorder %s28, 0
      %p162 = por %p160, %p161
      %s164 = sadd.s32 %s163, 1
      %p167 = scmp.eq.s32.totalorder %s22, 1
      %p168 = scmp.ne.s32.totalorder %s163, %s165
      %p169 = scmp.eq.s32.totalorder %s22, 0
      %p170 = por %p168, %p169
      %p171 = scmp.ne.s32.totalorder %s163, %s165
      %p172 = scmp.eq.s32.totalorder %s27, 1
      %p173 = por %p171, %p172
      %p174 = scmp.ne.s32.totalorder %s165, %s166
      %p175 = scmp.eq.s32.totalorder %s27, 0
      %p176 = por %p174, %p175
      %p177 = scmp.ne.s32.totalorder %s165, %s166
      %p178 = scmp.eq.s32.totalorder %s28, 1
      %p179 = por %p177, %p178
      %p181 = scmp.ne.s32.totalorder %s166, %s180
      %p182 = scmp.eq.s32.totalorder %s28, 0
      %p183 = por %p181, %p182
      %s185 = sadd.s32 %s184, 1
      %p188 = scmp.eq.s32.totalorder %s22, 1
      %p189 = scmp.ne.s32.totalorder %s184, %s186
      %p190 = scmp.eq.s32.totalorder %s22, 0
      %p191 = por %p189, %p190
      %p192 = scmp.ne.s32.totalorder %s184, %s186
      %p193 = scmp.eq.s32.totalorder %s27, 1
      %p194 = por %p192, %p193
      %p195 = scmp.ne.s32.totalorder %s186, %s187
      %p196 = scmp.eq.s32.totalorder %s27, 0
      %p197 = por %p195, %p196
      %p198 = scmp.ne.s32.totalorder %s186, %s187
      %p199 = scmp.eq.s32.totalorder %s28, 1
      %p200 = por %p198, %p199
      %p202 = scmp.ne.s32.totalorder %s187, %s201
      %p203 = scmp.eq.s32.totalorder %s28, 0
      %p204 = por %p202, %p203
      %s205 = ssub.s32 %s29, %s48
      %s206 = ssub.s32 %s30, %s44
      %s207 = sor.u32 %s205, %s206
      %p208 = scmp.eq.s32.totalorder %s207, 0
      %s210 = sadd.s32 %s209, 1
      %s211 = scalar_select %p208, %s209, %s210
      %p214 = pneg %p208
      %p215 = scmp.eq.s32.totalorder %s22, 1
      %p216 = por %p214, %p215
      %p217 = scmp.ne.s32.totalorder %s209, %s212
      %p218 = scmp.eq.s32.totalorder %s22, 0
      %p219 = por %p217, %p218
      %p220 = scmp.ne.s32.totalorder %s209, %s212
      %p221 = scmp.eq.s32.totalorder %s27, 1
      %p222 = por %p220, %p221
      %p223 = scmp.ne.s32.totalorder %s212, %s213
      %p224 = scmp.eq.s32.totalorder %s27, 0
      %p225 = por %p223, %p224
      %p226 = scmp.ne.s32.totalorder %s212, %s213
      %p227 = scmp.eq.s32.totalorder %s28, 1
      %p228 = por %p226, %p227
      %p230 = scmp.ne.s32.totalorder %s213, %s229
      %p231 = scmp.eq.s32.totalorder %s28, 0
      %p232 = por %p230, %p231
      %p233 = scmp.le.s32.totalorder 1, %s22
      %p234 = scmp.lt.s32.totalorder %s22, 3
      %p235 = pnand %p233, %p234
      %p236 = pneg %p235
      // Predicated region
      $region9: #{transformer_encoder_forward.11} parent=5 // pred_check
        _
      $region10: #{transformer_encoder_forward.11} parent=5 // pred_check_branch
        %238 = sbr.rel (%p235) target = $region12
      $region11: #{transformer_encoder_forward.11} parent=5 // pred_region
        %s239 = ssub.s32 %s22, 1
        // Predicated region
        $region13: #{transformer_encoder_forward.11} parent=11 // pred_check
          %p240 = pneg %p176
        $region14: #{transformer_encoder_forward.11} parent=11 // pred_check_branch
          %242 = sbr.rel (%p240) target = $region16
        $region15: #{transformer_encoder_forward.11} parent=11 // pred_region
          _
        $region16: #{transformer_encoder_forward.11} parent=11 // pred_fallthru
          _
        // Predicated region
        $region17: #{transformer_encoder_forward.11} parent=11 // pred_check
          %p243 = pneg %p197
        $region18: #{transformer_encoder_forward.11} parent=11 // pred_check_branch
          %245 = sbr.rel (%p243) target = $region20
        $region19: #{transformer_encoder_forward.11} parent=11 // pred_region
          _
        $region20: #{transformer_encoder_forward.11} parent=11 // pred_fallthru
          _
      $region12: #{transformer_encoder_forward.11} parent=5 // pred_fallthru
        _
      %p246 = scmp.lt.s32.totalorder %s22, 2
      // Predicated region
      $region21: #{transformer_encoder_forward.11} parent=5 // pred_check
        %p247 = pneg %p246
      $region22: #{transformer_encoder_forward.11} parent=5 // pred_check_branch
        %249 = sbr.rel (%p247) target = $region24
      $region23: #{transformer_encoder_forward.11} parent=5 // pred_region
        // Predicated region
        $region25: #{transformer_encoder_forward.11} parent=23 // pred_check
          %p250 = pneg %p63
        $region26: #{transformer_encoder_forward.11} parent=23 // pred_check_branch
          %252 = sbr.rel (%p250) target = $region28
        $region27: #{transformer_encoder_forward.11} parent=23 // pred_region
          %p253 = scmp.lt.s32.totalorder %s29, 1
          %s254 = scalar_select %p253, %s29, 1
          %p255 = scmp.lt.s32.totalorder %s30, 0
          %s256 = scalar_select %p255, %s30, 0
          %s257 = sadd.s32 %s256, %s254
          %s258 = smul.addr %s257, 8
          %s259 = scalar_lea.vmem %s1, %s258
        $region28: #{transformer_encoder_forward.11} parent=23 // pred_fallthru
          _
        // Predicated region
        $region29: #{transformer_encoder_forward.11} parent=23 // pred_check
          %p260 = pneg %p91
        $region30: #{transformer_encoder_forward.11} parent=23 // pred_check_branch
          %262 = sbr.rel (%p260) target = $region32
        $region31: #{transformer_encoder_forward.11} parent=23 // pred_region
          %p263 = scmp.lt.s32.totalorder %s29, 1
          %s264 = scalar_select %p263, %s29, 1
          %p265 = scmp.lt.s32.totalorder %s31, 0
          %s266 = scalar_select %p265, %s31, 0
          %s267 = sadd.s32 %s266, %s264
          %s268 = smul.addr %s267, 8
          %s269 = scalar_lea.vmem %s2, %s268
        $region32: #{transformer_encoder_forward.11} parent=23 // pred_fallthru
          _
        // Predicated region
        $region33: #{transformer_encoder_forward.11} parent=23 // pred_check
          %p270 = pneg %p119
        $region34: #{transformer_encoder_forward.11} parent=23 // pred_check_branch
          %272 = sbr.rel (%p270) target = $region36
        $region35: #{transformer_encoder_forward.11} parent=23 // pred_region
          %p273 = scmp.lt.s32.totalorder %s29, 1
          %s274 = scalar_select %p273, %s29, 1
          %p275 = scmp.lt.s32.totalorder %s31, 0
          %s276 = scalar_select %p275, %s31, 0
          %s277 = sadd.s32 %s276, %s274
          %s278 = smul.addr %s277, 8
          %s279 = scalar_lea.vmem %s3, %s278
        $region36: #{transformer_encoder_forward.11} parent=23 // pred_fallthru
          _
        // Predicated region
        $region37: #{transformer_encoder_forward.11} parent=23 // pred_check
          %p280 = pneg %p149
        $region38: #{transformer_encoder_forward.11} parent=23 // pred_check_branch
          %282 = sbr.rel (%p280) target = $region40
        $region39: #{transformer_encoder_forward.11} parent=23 // pred_region
          %s283 = smul.u32 8, %s30
          %p284 = scmp.lt.s32.totalorder %s29, 1
          %s285 = scalar_select %p284, %s29, 1
          %p286 = scmp.lt.s32.totalorder %s283, 7
          %s287 = scalar_select %p286, %s283, 7
          %p288 = scmp.lt.s32.totalorder %s31, 0
          %s289 = scalar_select %p288, %s31, 0
          %s290 = sadd.s32 %s289, %s287
          %s291 = smul.addr %s285, 8
          %s292 = sadd.s32 %s290, %s291
          %s293 = smul.addr %s292, 8
          %s294 = scalar_lea.vmem %s4, %s293
          %s295 = smul.u32 8, %s30
        $region40: #{transformer_encoder_forward.11} parent=23 // pred_fallthru
          _
      $region24: #{transformer_encoder_forward.11} parent=5 // pred_fallthru
        _
      %p296 = scmp.le.s32.totalorder 1, %s22
      %p297 = scmp.lt.s32.totalorder %s22, 3
      %p298 = pnand %p296, %p297
      %p299 = pneg %p298
      // Predicated region
      $region41: #{transformer_encoder_forward.11} parent=5 // pred_check
        _
      $region42: #{transformer_encoder_forward.11} parent=5 // pred_check_branch
        %301 = sbr.rel (%p298) target = $region44
      $region43: #{transformer_encoder_forward.11} parent=5 // pred_region
        %s302 = ssub.s32 %s22, 1
        %p303 = scmp.lt.s32.totalorder %s32, 1
        %s304 = scalar_select %p303, %s32, 1
        %p305 = scmp.lt.s32.totalorder %s33, 0
        %s306 = scalar_select %p305, %s33, 0
        %s307 = sadd.s32 %s306, %s304
        %s308 = smul.addr %s307, 8
        %s309 = scalar_lea.vmem %s1, %s308
        %p310 = pneg %p69
        %p311 = pneg %p66
        %p312 = scmp.lt.s32.totalorder %s32, 1
        %s313 = scalar_select %p312, %s32, 1
        %p314 = scmp.lt.s32.totalorder %s34, 0
        %s315 = scalar_select %p314, %s34, 0
        %s316 = sadd.s32 %s315, %s313
        %s317 = smul.addr %s316, 8
        %s318 = scalar_lea.vmem %s2, %s317
        %p319 = pneg %p97
        %p320 = pneg %p94
        %p321 = scmp.lt.s32.totalorder %s32, 1
        %s322 = scalar_select %p321, %s32, 1
        %p323 = scmp.lt.s32.totalorder %s34, 0
        %s324 = scalar_select %p323, %s34, 0
        %s325 = sadd.s32 %s324, %s322
        %s326 = smul.addr %s325, 8
        %s327 = scalar_lea.vmem %s3, %s326
        %p328 = pneg %p125
        %p329 = pneg %p122
        %s330 = smul.u32 8, %s33
        %p331 = scmp.lt.s32.totalorder %s32, 1
        %s332 = scalar_select %p331, %s32, 1
        %p333 = scmp.lt.s32.totalorder %s330, 7
        %s334 = scalar_select %p333, %s330, 7
        %p335 = scmp.lt.s32.totalorder %s34, 0
        %s336 = scalar_select %p335, %s34, 0
        %s337 = sadd.s32 %s336, %s334
        %s338 = smul.addr %s332, 8
        %s339 = sadd.s32 %s337, %s338
        %s340 = smul.addr %s339, 8
        %s341 = scalar_lea.vmem %s4, %s340
        %p342 = pneg %p155
        %p343 = pneg %p152
        %p344 = pneg %p176
        %p345 = pneg %p173
        %p346 = pneg %p197
        %p347 = pneg %p194
        %p348 = pneg %p225
        %p349 = pneg %p222
        %s350 = sand.u32 %s212, 1
        %s351 = scalar_lea.sflag [#allocation8], %s350
        %s352 = sand.u32 %s212, 1
        %s353 = smul.addr %s352, 8
        %s354 = scalar_lea.vmem [#allocation7], %s353
        %p355 = scmp.lt.s32.totalorder %s32, 1
        %s356 = scalar_select %p355, %s32, 1
        %p357 = scmp.lt.s32.totalorder %s33, 0
        %s358 = scalar_select %p357, %s33, 0
        %s359 = sadd.s32 %s358, %s356
        %s360 = smul.addr %s359, 8
        %s361 = scalar_lea.vmem %s1, %s360
        %p362 = scmp.lt.s32.totalorder %s32, 1
        %s363 = scalar_select %p362, %s32, 1
        %p364 = scmp.lt.s32.totalorder %s34, 0
        %s365 = scalar_select %p364, %s34, 0
        %s366 = sadd.s32 %s365, %s363
        %s367 = smul.addr %s366, 8
        %s368 = scalar_lea.vmem %s2, %s367
        %p369 = scmp.lt.s32.totalorder %s32, 1
        %s370 = scalar_select %p369, %s32, 1
        %p371 = scmp.lt.s32.totalorder %s34, 0
        %s372 = scalar_select %p371, %s34, 0
        %s373 = sadd.s32 %s372, %s370
        %s374 = smul.addr %s373, 8
        %s375 = scalar_lea.vmem %s3, %s374
        %s376 = smul.u32 8, %s33
        %p377 = scmp.lt.s32.totalorder %s32, 1
        %s378 = scalar_select %p377, %s32, 1
        %p379 = scmp.lt.s32.totalorder %s376, 7
        %s380 = scalar_select %p379, %s376, 7
        %p381 = scmp.lt.s32.totalorder %s34, 0
        %s382 = scalar_select %p381, %s34, 0
        %s383 = sadd.s32 %s382, %s380
        %s384 = smul.addr %s378, 8
        %s385 = sadd.s32 %s383, %s384
        %s386 = smul.addr %s385, 8
        %s387 = scalar_lea.vmem %s4, %s386
        %s388 = smul.u32 8, %s33
        %p389 = scmp.eq.s32.totalorder %s34, 0
        // Predicated region
        $region45: #{transformer_encoder_forward.11} parent=43 // pred_check
          %p390 = pneg %p389
        $region46: #{transformer_encoder_forward.11} parent=43 // pred_check_branch
          %392 = sbr.rel (%p390) target = $region48
        $region47: #{transformer_encoder_forward.11} parent=43 // pred_region
          %vm393 = vcmask 7168
          %394 = vst.msk [vmem:[#allocation2] sm:$0xff] %vm393, -inf
          %395 = vst.msk [vmem:[#allocation2 + $0x8] sm:$0xff] %vm393, -inf
          %396 = vst.msk [vmem:[#allocation2 + $0x10] sm:$0xff] %vm393, -inf
          %397 = vst.msk [vmem:[#allocation2 + $0x18] sm:$0xff] %vm393, -inf
          %398 = vst.msk [vmem:[#allocation3] sm:$0xff] %vm393, 0.0
          %399 = vst.msk [vmem:[#allocation3 + $0x8] sm:$0xff] %vm393, 0.0
          %400 = vst.msk [vmem:[#allocation3 + $0x10] sm:$0xff] %vm393, 0.0
          %401 = vst.msk [vmem:[#allocation3 + $0x18] sm:$0xff] %vm393, 0.0
          %vm402 = vcmask 64512
          %403 = vst.msk [vmem:[#allocation4] sm:$0xff] %vm402, 0.0
          %404 = vst.msk [vmem:[#allocation4 + $0x8] sm:$0xff] %vm402, 0.0
          %405 = vst.msk [vmem:[#allocation4 + $0x10] sm:$0xff] %vm402, 0.0
          %406 = vst.msk [vmem:[#allocation4 + $0x18] sm:$0xff] %vm402, 0.0
        $region48: #{transformer_encoder_forward.11} parent=43 // pred_fallthru
          _
        %v407 = vld [vmem:[%s361] sm:$0xff]
        %v408 = vld [vmem:[%s368] sm:$0xff]
        %v409 = vld [vmem:[%s375] sm:$0xff]
        %v410 = vld [vmem:[%s387] sm:$0xff]
        %v411 = vld [vmem:[%s387 + $0x8] sm:$0xff]
        %v412 = vld [vmem:[%s387 + $0x10] sm:$0xff]
        %v413 = vld [vmem:[%s387 + $0x18] sm:$0xff]
        %v414 = vld [vmem:[%s387 + $0x20] sm:$0xff]
        %v415 = vld [vmem:[%s387 + $0x28] sm:$0xff]
        %v416 = vld [vmem:[%s387 + $0x30] sm:$0xff]
        %v417 = vld [vmem:[%s387 + $0x38] sm:$0xff]
        %v418 = vmax.f32 %v410, 0.0
        %v419 = vmax.f32 %v411, 0.0
        %v420 = vmax.f32 %v412, 0.0
        %v421 = vmax.f32 %v413, 0.0
        %v422 = vmax.f32 %v414, 0.0
        %v423 = vmax.f32 %v415, 0.0
        %v424 = vmax.f32 %v416, 0.0
        %v425 = vmax.f32 %v417, 0.0
        %s426 = sld [smem:[#allocation6 + %s32]]
        %p427 = scmp.lt.s32.totalorder %s426, 8
        %s428 = scalar_select %p427, %s426, 8
        %s429 = smul.u32 %s34, 8
        %v430 = vlaneseq
        %v431 = vand.u32 %v430, 127
        %v432 = vstv %s429
        %v433 = vadd.s32 %v432, %v431
        %v434 = vstv %s428
        %vm435 = vcmp.lt.s32.totalorder %v433, %v434
        %v436 = vld [vmem:[%s5] sm:$0xff]
        %vm437 = vcmask 64512
        %v439 = vsel %vm437, %v407, 0
        %441 = vmatprep.subr.mxu0 0.0
        %442 = vmatpush1.msra.mxu0 %v436
        %443 = vmatprep.subr.mxu0 0.0
        %444 = vmatpush1.msra.mxu0 0.0
        %445 = vmatprep.subr.mxu0 0.0
        %446 = vmatpush1.msra.mxu0 0.0
        %447 = vmatprep.subr.mxu0 0.0
        %448 = vmatpush1.msra.mxu0 0.0
        %449 = vmatprep.subr.mxu0 0.0
        %450 = vmatpush1.msra.mxu0 0.0
        %451 = vmatprep.subr.mxu0 0.0
        %452 = vmatpush1.msra.mxu0 0.0
        %453 = vmatprep.subr.mxu0 0.0
        %454 = vmatpush1.msra.mxu0 0.0
        %455 = vmatprep.subr.mxu0 0.0
        %456 = vmatpush1.msra.mxu0 0.0
        %457 = vmatprep.subr.mxu0 0.0
        %458 = vmatpush1.msra.mxu0 0.0
        %459 = vmatprep.subr.mxu0 0.0
        %460 = vmatpush1.msra.mxu0 0.0
        %461 = vmatprep.subr.mxu0 0.0
        %462 = vmatpush1.msra.mxu0 0.0
        %463 = vmatprep.subr.mxu0 0.0
        %464 = vmatpush1.msra.mxu0 0.0
        %465 = vmatprep.subr.mxu0 0.0
        %466 = vmatpush1.msra.mxu0 0.0
        %467 = vmatprep.subr.mxu0 0.0
        %468 = vmatpush1.msra.mxu0 0.0
        %469 = vmatprep.subr.mxu0 0.0
        %470 = vmatpush1.msra.mxu0 0.0
        %471 = vmatprep.subr.mxu0 0.0
        %472 = vmatpush1.msra.mxu0 0.0
        %473 = vmatprep.subr.mxu0 0.0
        %474 = vmatpush1.msra.mxu0 0.0
        %475 = vmatprep.subr.mxu0 0.0
        %476 = vmatpush1.msra.mxu0 0.0
        %477 = vmatprep.subr.mxu0 0.0
        %478 = vmatpush1.msra.mxu0 0.0
        %479 = vmatprep.subr.mxu0 0.0
        %480 = vmatpush1.msra.mxu0 0.0
        %481 = vmatprep.subr.mxu0 0.0
        %482 = vmatpush1.msra.mxu0 0.0
        %483 = vmatprep.subr.mxu0 0.0
        %484 = vmatpush1.msra.mxu0 0.0
        %485 = vmatprep.subr.mxu0 0.0
        %486 = vmatpush1.msra.mxu0 0.0
        %487 = vmatprep.subr.mxu0 0.0
        %488 = vmatpush1.msra.mxu0 0.0
        %489 = vmatprep.subr.mxu0 0.0
        %490 = vmatpush1.msra.mxu0 0.0
        %491 = vmatprep.subr.mxu0 0.0
        %492 = vmatpush1.msra.mxu0 0.0
        %493 = vmatprep.subr.mxu0 0.0
        %494 = vmatpush1.msra.mxu0 0.0
        %495 = vmatprep.subr.mxu0 0.0
        %496 = vmatpush1.msra.mxu0 0.0
        %497 = vmatprep.subr.mxu0 0.0
        %498 = vmatpush1.msra.mxu0 0.0
        %499 = vmatprep.subr.mxu0 0.0
        %500 = vmatpush1.msra.mxu0 0.0
        %501 = vmatprep.subr.mxu0 0.0
        %502 = vmatpush1.msra.mxu0 0.0
        %503 = vmatprep.subr.mxu0 0.0
        %504 = vmatpush1.msra.mxu0 0.0
        %505 = vmatprep.mubr.f32.mxu0 0.0
        %506 = vmatmul.mubr.f32.gmra.mrb[0].mxu0 %v439
        %v507 = vpop.f32.mrb[0].mxu0
        %v508 = vadd.f32 0.0, %v507
        %v509 = vpop.f32.mrb[0].mxu0
        %510 = vdwg.mxu0
        %v511 = vld [vmem:[%s6] sm:$0x1]
        %v513 = vlaneseq
        %v514 = vshrl.u32 %v513, 7
        %v515 = vsub.s32 0, %v514
        %v516 = vrot.slane %v511, %v515
        %v518 = vmul.f32 %v407, %v516
        %v519 = vsel %vm437, %v518, 0.0
        %520 = vadd.xlane.f32.xlu0 %v519
        %v521 = vpop.xlane.xlu0 %520
        %v523 = vcombine.high %v508, %v508
        %v525 = vunpack.c.l.s4 1966171168
        %v526 = vunpack.c.0.s8 %v525
        %v527 = vlaneseq
        %v528 = vshrl.u32 %v527, 7
        %v529 = vsub.s32 %v526, %v528
        %v530 = vrot.slane %v508, %v529
        %v532 = vunpack.c.l.s4 1966171168
        %v533 = vunpack.c.0.s8 %v532
        %v534 = vlaneseq
        %v535 = vshrl.u32 %v534, 7
        %v536 = vsub.s32 %v533, %v535
        %v537 = vrot.slane %v523, %v536
        %v538 = vcombine.high %v530, %v530
        %v539 = vcombine.high %v537, %v537
        %v541 = vunpack.c.l.s4 1966171168
        %v542 = vunpack.c.0.s8 %v541
        %v543 = vlaneseq
        %v544 = vshrl.u32 %v543, 7
        %v545 = vsub.s32 %v542, %v544
        %v546 = vrot.slane %v530, %v545
        %v548 = vunpack.c.l.s4 1966171168
        %v549 = vunpack.c.0.s8 %v548
        %v550 = vlaneseq
        %v551 = vshrl.u32 %v550, 7
        %v552 = vsub.s32 %v549, %v551
        %v553 = vrot.slane %v537, %v552
        %v555 = vunpack.c.l.s4 1966171168
        %v556 = vunpack.c.0.s8 %v555
        %v557 = vlaneseq
        %v558 = vshrl.u32 %v557, 7
        %v559 = vsub.s32 %v556, %v558
        %v560 = vrot.slane %v538, %v559
        %v562 = vunpack.c.l.s4 1966171168
        %v563 = vunpack.c.0.s8 %v562
        %v564 = vlaneseq
        %v565 = vshrl.u32 %v564, 7
        %v566 = vsub.s32 %v563, %v565
        %v567 = vrot.slane %v539, %v566
        %v568 = vcombine.high %v546, %v546
        %v569 = vcombine.high %v553, %v553
        %v570 = vcombine.high %v560, %v560
        %v571 = vcombine.high %v567, %v567
        %vm572 = vcmask 261120
        %v573 = vsel %vm572, %v546, 0
        %v576 = vsel %vm572, %v418, 0
        %578 = vmatprep.subr.mxu0 0.0
        %579 = vmatpush1.xpose.msra.mxu0 %v576
        %580 = vmatprep.subr.mxu0 0.0
        %581 = vmatpush1.xpose.msra.mxu0 0.0
        %582 = vmatprep.subr.mxu0 0.0
        %583 = vmatpush1.xpose.msra.mxu0 0.0
        %584 = vmatprep.subr.mxu0 0.0
        %585 = vmatpush1.xpose.msra.mxu0 0.0
        %586 = vmatprep.subr.mxu0 0.0
        %587 = vmatpush1.xpose.msra.mxu0 0.0
        %588 = vmatprep.subr.mxu0 0.0
        %589 = vmatpush1.xpose.msra.mxu0 0.0
        %590 = vmatprep.subr.mxu0 0.0
        %591 = vmatpush1.xpose.msra.mxu0 0.0
        %592 = vmatprep.subr.mxu0 0.0
        %593 = vmatpush1.xpose.msra.mxu0 0.0
        %594 = vmatprep.subr.mxu0 0.0
        %595 = vmatpush1.xpose.msra.mxu0 0.0
        %596 = vmatprep.subr.mxu0 0.0
        %597 = vmatpush1.xpose.msra.mxu0 0.0
        %598 = vmatprep.subr.mxu0 0.0
        %599 = vmatpush1.xpose.msra.mxu0 0.0
        %600 = vmatprep.subr.mxu0 0.0
        %601 = vmatpush1.xpose.msra.mxu0 0.0
        %602 = vmatprep.subr.mxu0 0.0
        %603 = vmatpush1.xpose.msra.mxu0 0.0
        %604 = vmatprep.subr.mxu0 0.0
        %605 = vmatpush1.xpose.msra.mxu0 0.0
        %606 = vmatprep.subr.mxu0 0.0
        %607 = vmatpush1.xpose.msra.mxu0 0.0
        %608 = vmatprep.subr.mxu0 0.0
        %609 = vmatpush1.xpose.msra.mxu0 0.0
        %610 = vmatprep.subr.mxu0 0.0
        %611 = vmatpush1.xpose.msra.mxu0 0.0
        %612 = vmatprep.subr.mxu0 0.0
        %613 = vmatpush1.xpose.msra.mxu0 0.0
        %614 = vmatprep.subr.mxu0 0.0
        %615 = vmatpush1.xpose.msra.mxu0 0.0
        %616 = vmatprep.subr.mxu0 0.0
        %617 = vmatpush1.xpose.msra.mxu0 0.0
        %618 = vmatprep.subr.mxu0 0.0
        %619 = vmatpush1.xpose.msra.mxu0 0.0
        %620 = vmatprep.subr.mxu0 0.0
        %621 = vmatpush1.xpose.msra.mxu0 0.0
        %622 = vmatprep.subr.mxu0 0.0
        %623 = vmatpush1.xpose.msra.mxu0 0.0
        %624 = vmatprep.subr.mxu0 0.0
        %625 = vmatpush1.xpose.msra.mxu0 0.0
        %626 = vmatprep.subr.mxu0 0.0
        %627 = vmatpush1.xpose.msra.mxu0 0.0
        %628 = vmatprep.subr.mxu0 0.0
        %629 = vmatpush1.xpose.msra.mxu0 0.0
        %630 = vmatprep.subr.mxu0 0.0
        %631 = vmatpush1.xpose.msra.mxu0 0.0
        %632 = vmatprep.subr.mxu0 0.0
        %633 = vmatpush1.xpose.msra.mxu0 0.0
        %634 = vmatprep.subr.mxu0 0.0
        %635 = vmatpush1.xpose.msra.mxu0 0.0
        %636 = vmatprep.subr.mxu0 0.0
        %637 = vmatpush1.xpose.msra.mxu0 0.0
        %638 = vmatprep.subr.mxu0 0.0
        %639 = vmatpush1.xpose.msra.mxu0 0.0
        %640 = vmatprep.subr.mxu0 0.0
        %641 = vmatpush1.xpose.msra.mxu0 0.0
        %642 = vmatprep.mubr.f32.mxu0 0.0
        %643 = vmatmul.mubr.f32.gmra.mrb[0].mxu0 %v573
        %v644 = vpop.f32.mrb[0].mxu0
        %v645 = vadd.f32 0.0, %v644
        %v646 = vpop.f32.mrb[0].mxu0
        %647 = vdwg.mxu0
        %v648 = vsel %vm572, %v560, 0
        %v651 = vsel %vm572, %v419, 0
        %653 = vmatprep.subr.mxu0 0.0
        %654 = vmatpush1.xpose.msra.mxu0 %v651
        %655 = vmatprep.subr.mxu0 0.0
        %656 = vmatpush1.xpose.msra.mxu0 0.0
        %657 = vmatprep.subr.mxu0 0.0
        %658 = vmatpush1.xpose.msra.mxu0 0.0
        %659 = vmatprep.subr.mxu0 0.0
        %660 = vmatpush1.xpose.msra.mxu0 0.0
        %661 = vmatprep.subr.mxu0 0.0
        %662 = vmatpush1.xpose.msra.mxu0 0.0
        %663 = vmatprep.subr.mxu0 0.0
        %664 = vmatpush1.xpose.msra.mxu0 0.0
        %665 = vmatprep.subr.mxu0 0.0
        %666 = vmatpush1.xpose.msra.mxu0 0.0
        %667 = vmatprep.subr.mxu0 0.0
        %668 = vmatpush1.xpose.msra.mxu0 0.0
        %669 = vmatprep.subr.mxu0 0.0
        %670 = vmatpush1.xpose.msra.mxu0 0.0
        %671 = vmatprep.subr.mxu0 0.0
        %672 = vmatpush1.xpose.msra.mxu0 0.0
        %673 = vmatprep.subr.mxu0 0.0
        %674 = vmatpush1.xpose.msra.mxu0 0.0
        %675 = vmatprep.subr.mxu0 0.0
        %676 = vmatpush1.xpose.msra.mxu0 0.0
        %677 = vmatprep.subr.mxu0 0.0
        %678 = vmatpush1.xpose.msra.mxu0 0.0
        %679 = vmatprep.subr.mxu0 0.0
        %680 = vmatpush1.xpose.msra.mxu0 0.0
        %681 = vmatprep.subr.mxu0 0.0
        %682 = vmatpush1.xpose.msra.mxu0 0.0
        %683 = vmatprep.subr.mxu0 0.0
        %684 = vmatpush1.xpose.msra.mxu0 0.0
        %685 = vmatprep.subr.mxu0 0.0
        %686 = vmatpush1.xpose.msra.mxu0 0.0
        %687 = vmatprep.subr.mxu0 0.0
        %688 = vmatpush1.xpose.msra.mxu0 0.0
        %689 = vmatprep.subr.mxu0 0.0
        %690 = vmatpush1.xpose.msra.mxu0 0.0
        %691 = vmatprep.subr.mxu0 0.0
        %692 = vmatpush1.xpose.msra.mxu0 0.0
        %693 = vmatprep.subr.mxu0 0.0
        %694 = vmatpush1.xpose.msra.mxu0 0.0
        %695 = vmatprep.subr.mxu0 0.0
        %696 = vmatpush1.xpose.msra.mxu0 0.0
        %697 = vmatprep.subr.mxu0 0.0
        %698 = vmatpush1.xpose.msra.mxu0 0.0
        %699 = vmatprep.subr.mxu0 0.0
        %700 = vmatpush1.xpose.msra.mxu0 0.0
        %701 = vmatprep.subr.mxu0 0.0
        %702 = vmatpush1.xpose.msra.mxu0 0.0
        %703 = vmatprep.subr.mxu0 0.0
        %704 = vmatpush1.xpose.msra.mxu0 0.0
        %705 = vmatprep.subr.mxu0 0.0
        %706 = vmatpush1.xpose.msra.mxu0 0.0
        %707 = vmatprep.subr.mxu0 0.0
        %708 = vmatpush1.xpose.msra.mxu0 0.0
        %709 = vmatprep.subr.mxu0 0.0
        %710 = vmatpush1.xpose.msra.mxu0 0.0
        %711 = vmatprep.subr.mxu0 0.0
        %712 = vmatpush1.xpose.msra.mxu0 0.0
        %713 = vmatprep.subr.mxu0 0.0
        %714 = vmatpush1.xpose.msra.mxu0 0.0
        %715 = vmatprep.subr.mxu0 0.0
        %716 = vmatpush1.xpose.msra.mxu0 0.0
        %717 = vmatprep.mubr.f32.mxu0 0.0
        %718 = vmatmul.mubr.f32.gmra.mrb[0].mxu0 %v648
        %v719 = vpop.f32.mrb[0].mxu0
        %v720 = vadd.f32 0.0, %v719
        %v721 = vpop.f32.mrb[0].mxu0
        %722 = vdwg.mxu0
        %v723 = vsel %vm572, %v568, 0
        %v726 = vsel %vm572, %v420, 0
        %728 = vmatprep.subr.mxu0 0.0
        %729 = vmatpush1.xpose.msra.mxu0 %v726
        %730 = vmatprep.subr.mxu0 0.0
        %731 = vmatpush1.xpose.msra.mxu0 0.0
        %732 = vmatprep.subr.mxu0 0.0
        %733 = vmatpush1.xpose.msra.mxu0 0.0
        %734 = vmatprep.subr.mxu0 0.0
        %735 = vmatpush1.xpose.msra.mxu0 0.0
        %736 = vmatprep.subr.mxu0 0.0
        %737 = vmatpush1.xpose.msra.mxu0 0.0
        %738 = vmatprep.subr.mxu0 0.0
        %739 = vmatpush1.xpose.msra.mxu0 0.0
        %740 = vmatprep.subr.mxu0 0.0
        %741 = vmatpush1.xpose.msra.mxu0 0.0
        %742 = vmatprep.subr.mxu0 0.0
        %743 = vmatpush1.xpose.msra.mxu0 0.0
        %744 = vmatprep.subr.mxu0 0.0
        %745 = vmatpush1.xpose.msra.mxu0 0.0
        %746 = vmatprep.subr.mxu0 0.0
        %747 = vmatpush1.xpose.msra.mxu0 0.0
        %748 = vmatprep.subr.mxu0 0.0
        %749 = vmatpush1.xpose.msra.mxu0 0.0
        %750 = vmatprep.subr.mxu0 0.0
        %751 = vmatpush1.xpose.msra.mxu0 0.0
        %752 = vmatprep.subr.mxu0 0.0
        %753 = vmatpush1.xpose.msra.mxu0 0.0
        %754 = vmatprep.subr.mxu0 0.0
        %755 = vmatpush1.xpose.msra.mxu0 0.0
        %756 = vmatprep.subr.mxu0 0.0
        %757 = vmatpush1.xpose.msra.mxu0 0.0
        %758 = vmatprep.subr.mxu0 0.0
        %759 = vmatpush1.xpose.msra.mxu0 0.0
        %760 = vmatprep.subr.mxu0 0.0
        %761 = vmatpush1.xpose.msra.mxu0 0.0
        %762 = vmatprep.subr.mxu0 0.0
        %763 = vmatpush1.xpose.msra.mxu0 0.0
        %764 = vmatprep.subr.mxu0 0.0
        %765 = vmatpush1.xpose.msra.mxu0 0.0
        %766 = vmatprep.subr.mxu0 0.0
        %767 = vmatpush1.xpose.msra.mxu0 0.0
        %768 = vmatprep.subr.mxu0 0.0
        %769 = vmatpush1.xpose.msra.mxu0 0.0
        %770 = vmatprep.subr.mxu0 0.0
        %771 = vmatpush1.xpose.msra.mxu0 0.0
        %772 = vmatprep.subr.mxu0 0.0
        %773 = vmatpush1.xpose.msra.mxu0 0.0
        %774 = vmatprep.subr.mxu0 0.0
        %775 = vmatpush1.xpose.msra.mxu0 0.0
        %776 = vmatprep.subr.mxu0 0.0
        %777 = vmatpush1.xpose.msra.mxu0 0.0
        %778 = vmatprep.subr.mxu0 0.0
        %779 = vmatpush1.xpose.msra.mxu0 0.0
        %780 = vmatprep.subr.mxu0 0.0
        %781 = vmatpush1.xpose.msra.mxu0 0.0
        %782 = vmatprep.subr.mxu0 0.0
        %783 = vmatpush1.xpose.msra.mxu0 0.0
        %784 = vmatprep.subr.mxu0 0.0
        %785 = vmatpush1.xpose.msra.mxu0 0.0
        %786 = vmatprep.subr.mxu0 0.0
        %787 = vmatpush1.xpose.msra.mxu0 0.0
        %788 = vmatprep.subr.mxu0 0.0
        %789 = vmatpush1.xpose.msra.mxu0 0.0
        %790 = vmatprep.subr.mxu0 0.0
        %791 = vmatpush1.xpose.msra.mxu0 0.0
        %792 = vmatprep.mubr.f32.mxu0 0.0
        %793 = vmatmul.mubr.f32.gmra.mrb[0].mxu0 %v723
        %v794 = vpop.f32.mrb[0].mxu0
        %v795 = vadd.f32 0.0, %v794
        %v796 = vpop.f32.mrb[0].mxu0
        %797 = vdwg.mxu0
        %v798 = vsel %vm572, %v570, 0
        %v801 = vsel %vm572, %v421, 0
        %803 = vmatprep.subr.mxu0 0.0
        %804 = vmatpush1.xpose.msra.mxu0 %v801
        %805 = vmatprep.subr.mxu0 0.0
        %806 = vmatpush1.xpose.msra.mxu0 0.0
        %807 = vmatprep.subr.mxu0 0.0
        %808 = vmatpush1.xpose.msra.mxu0 0.0
        %809 = vmatprep.subr.mxu0 0.0
        %810 = vmatpush1.xpose.msra.mxu0 0.0
        %811 = vmatprep.subr.mxu0 0.0
        %812 = vmatpush1.xpose.msra.mxu0 0.0
        %813 = vmatprep.subr.mxu0 0.0
        %814 = vmatpush1.xpose.msra.mxu0 0.0
        %815 = vmatprep.subr.mxu0 0.0
        %816 = vmatpush1.xpose.msra.mxu0 0.0
        %817 = vmatprep.subr.mxu0 0.0
        %818 = vmatpush1.xpose.msra.mxu0 0.0
        %819 = vmatprep.subr.mxu0 0.0
        %820 = vmatpush1.xpose.msra.mxu0 0.0
        %821 = vmatprep.subr.mxu0 0.0
        %822 = vmatpush1.xpose.msra.mxu0 0.0
        %823 = vmatprep.subr.mxu0 0.0
        %824 = vmatpush1.xpose.msra.mxu0 0.0
        %825 = vmatprep.subr.mxu0 0.0
        %826 = vmatpush1.xpose.msra.mxu0 0.0
        %827 = vmatprep.subr.mxu0 0.0
        %828 = vmatpush1.xpose.msra.mxu0 0.0
        %829 = vmatprep.subr.mxu0 0.0
        %830 = vmatpush1.xpose.msra.mxu0 0.0
        %831 = vmatprep.subr.mxu0 0.0
        %832 = vmatpush1.xpose.msra.mxu0 0.0
        %833 = vmatprep.subr.mxu0 0.0
        %834 = vmatpush1.xpose.msra.mxu0 0.0
        %835 = vmatprep.subr.mxu0 0.0
        %836 = vmatpush1.xpose.msra.mxu0 0.0
        %837 = vmatprep.subr.mxu0 0.0
        %838 = vmatpush1.xpose.msra.mxu0 0.0
        %839 = vmatprep.subr.mxu0 0.0
        %840 = vmatpush1.xpose.msra.mxu0 0.0
        %841 = vmatprep.subr.mxu0 0.0
        %842 = vmatpush1.xpose.msra.mxu0 0.0
        %843 = vmatprep.subr.mxu0 0.0
        %844 = vmatpush1.xpose.msra.mxu0 0.0
        %845 = vmatprep.subr.mxu0 0.0
        %846 = vmatpush1.xpose.msra.mxu0 0.0
        %847 = vmatprep.subr.mxu0 0.0
        %848 = vmatpush1.xpose.msra.mxu0 0.0
        %849 = vmatprep.subr.mxu0 0.0
        %850 = vmatpush1.xpose.msra.mxu0 0.0
        %851 = vmatprep.subr.mxu0 0.0
        %852 = vmatpush1.xpose.msra.mxu0 0.0
        %853 = vmatprep.subr.mxu0 0.0
        %854 = vmatpush1.xpose.msra.mxu0 0.0
        %855 = vmatprep.subr.mxu0 0.0
        %856 = vmatpush1.xpose.msra.mxu0 0.0
        %857 = vmatprep.subr.mxu0 0.0
        %858 = vmatpush1.xpose.msra.mxu0 0.0
        %859 = vmatprep.subr.mxu0 0.0
        %860 = vmatpush1.xpose.msra.mxu0 0.0
        %861 = vmatprep.subr.mxu0 0.0
        %862 = vmatpush1.xpose.msra.mxu0 0.0
        %863 = vmatprep.subr.mxu0 0.0
        %864 = vmatpush1.xpose.msra.mxu0 0.0
        %865 = vmatprep.subr.mxu0 0.0
        %866 = vmatpush1.xpose.msra.mxu0 0.0
        %867 = vmatprep.mubr.f32.mxu0 0.0
        %868 = vmatmul.mubr.f32.gmra.mrb[0].mxu0 %v798
        %v869 = vpop.f32.mrb[0].mxu0
        %v870 = vadd.f32 0.0, %v869
        %v871 = vpop.f32.mrb[0].mxu0
        %872 = vdwg.mxu0
        %v873 = vsel %vm572, %v553, 0
        %v876 = vsel %vm572, %v422, 0
        %878 = vmatprep.subr.mxu0 0.0
        %879 = vmatpush1.xpose.msra.mxu0 %v876
        %880 = vmatprep.subr.mxu0 0.0
        %881 = vmatpush1.xpose.msra.mxu0 0.0
        %882 = vmatprep.subr.mxu0 0.0
        %883 = vmatpush1.xpose.msra.mxu0 0.0
        %884 = vmatprep.subr.mxu0 0.0
        %885 = vmatpush1.xpose.msra.mxu0 0.0
        %886 = vmatprep.subr.mxu0 0.0
        %887 = vmatpush1.xpose.msra.mxu0 0.0
        %888 = vmatprep.subr.mxu0 0.0
        %889 = vmatpush1.xpose.msra.mxu0 0.0
        %890 = vmatprep.subr.mxu0 0.0
        %891 = vmatpush1.xpose.msra.mxu0 0.0
        %892 = vmatprep.subr.mxu0 0.0
        %893 = vmatpush1.xpose.msra.mxu0 0.0
        %894 = vmatprep.subr.mxu0 0.0
        %895 = vmatpush1.xpose.msra.mxu0 0.0
        %896 = vmatprep.subr.mxu0 0.0
        %897 = vmatpush1.xpose.msra.mxu0 0.0
        %898 = vmatprep.subr.mxu0 0.0
        %899 = vmatpush1.xpose.msra.mxu0 0.0
        %900 = vmatprep.subr.mxu0 0.0
        %901 = vmatpush1.xpose.msra.mxu0 0.0
        %902 = vmatprep.subr.mxu0 0.0
        %903 = vmatpush1.xpose.msra.mxu0 0.0
        %904 = vmatprep.subr.mxu0 0.0
        %905 = vmatpush1.xpose.msra.mxu0 0.0
        %906 = vmatprep.subr.mxu0 0.0
        %907 = vmatpush1.xpose.msra.mxu0 0.0
        %908 = vmatprep.subr.mxu0 0.0
        %909 = vmatpush1.xpose.msra.mxu0 0.0
        %910 = vmatprep.subr.mxu0 0.0
        %911 = vmatpush1.xpose.msra.mxu0 0.0
        %912 = vmatprep.subr.mxu0 0.0
        %913 = vmatpush1.xpose.msra.mxu0 0.0
        %914 = vmatprep.subr.mxu0 0.0
        %915 = vmatpush1.xpose.msra.mxu0 0.0
        %916 = vmatprep.subr.mxu0 0.0
        %917 = vmatpush1.xpose.msra.mxu0 0.0
        %918 = vmatprep.subr.mxu0 0.0
        %919 = vmatpush1.xpose.msra.mxu0 0.0
        %920 = vmatprep.subr.mxu0 0.0
        %921 = vmatpush1.xpose.msra.mxu0 0.0
        %922 = vmatprep.subr.mxu0 0.0
        %923 = vmatpush1.xpose.msra.mxu0 0.0
        %924 = vmatprep.subr.mxu0 0.0
        %925 = vmatpush1.xpose.msra.mxu0 0.0
        %926 = vmatprep.subr.mxu0 0.0
        %927 = vmatpush1.xpose.msra.mxu0 0.0
        %928 = vmatprep.subr.mxu0 0.0
        %929 = vmatpush1.xpose.msra.mxu0 0.0
        %930 = vmatprep.subr.mxu0 0.0
        %931 = vmatpush1.xpose.msra.mxu0 0.0
        %932 = vmatprep.subr.mxu0 0.0
        %933 = vmatpush1.xpose.msra.mxu0 0.0
        %934 = vmatprep.subr.mxu0 0.0
        %935 = vmatpush1.xpose.msra.mxu0 0.0
        %936 = vmatprep.subr.mxu0 0.0
        %937 = vmatpush1.xpose.msra.mxu0 0.0
        %938 = vmatprep.subr.mxu0 0.0
        %939 = vmatpush1.xpose.msra.mxu0 0.0
        %940 = vmatprep.subr.mxu0 0.0
        %941 = vmatpush1.xpose.msra.mxu0 0.0
        %942 = vmatprep.mubr.f32.mxu0 0.0
        %943 = vmatmul.mubr.f32.gmra.mrb[0].mxu0 %v873
        %v944 = vpop.f32.mrb[0].mxu0
        %v945 = vadd.f32 0.0, %v944
        %v946 = vpop.f32.mrb[0].mxu0
        %947 = vdwg.mxu0
        %v948 = vsel %vm572, %v567, 0
        %v951 = vsel %vm572, %v423, 0
        %953 = vmatprep.subr.mxu0 0.0
        %954 = vmatpush1.xpose.msra.mxu0 %v951
        %955 = vmatprep.subr.mxu0 0.0
        %956 = vmatpush1.xpose.msra.mxu0 0.0
        %957 = vmatprep.subr.mxu0 0.0
        %958 = vmatpush1.xpose.msra.mxu0 0.0
        %959 = vmatprep.subr.mxu0 0.0
        %960 = vmatpush1.xpose.msra.mxu0 0.0
        %961 = vmatprep.subr.mxu0 0.0
        %962 = vmatpush1.xpose.msra.mxu0 0.0
        %963 = vmatprep.subr.mxu0 0.0
        %964 = vmatpush1.xpose.msra.mxu0 0.0
        %965 = vmatprep.subr.mxu0 0.0
        %966 = vmatpush1.xpose.msra.mxu0 0.0
        %967 = vmatprep.subr.mxu0 0.0
        %968 = vmatpush1.xpose.msra.mxu0 0.0
        %969 = vmatprep.subr.mxu0 0.0
        %970 = vmatpush1.xpose.msra.mxu0 0.0
        %971 = vmatprep.subr.mxu0 0.0
        %972 = vmatpush1.xpose.msra.mxu0 0.0
        %973 = vmatprep.subr.mxu0 0.0
        %974 = vmatpush1.xpose.msra.mxu0 0.0
        %975 = vmatprep.subr.mxu0 0.0
        %976 = vmatpush1.xpose.msra.mxu0 0.0
        %977 = vmatprep.subr.mxu0 0.0
        %978 = vmatpush1.xpose.msra.mxu0 0.0
        %979 = vmatprep.subr.mxu0 0.0
        %980 = vmatpush1.xpose.msra.mxu0 0.0
        %981 = vmatprep.subr.mxu0 0.0
        %982 = vmatpush1.xpose.msra.mxu0 0.0
        %983 = vmatprep.subr.mxu0 0.0
        %984 = vmatpush1.xpose.msra.mxu0 0.0
        %985 = vmatprep.subr.mxu0 0.0
        %986 = vmatpush1.xpose.msra.mxu0 0.0
        %987 = vmatprep.subr.mxu0 0.0
        %988 = vmatpush1.xpose.msra.mxu0 0.0
        %989 = vmatprep.subr.mxu0 0.0
        %990 = vmatpush1.xpose.msra.mxu0 0.0
        %991 = vmatprep.subr.mxu0 0.0
        %992 = vmatpush1.xpose.msra.mxu0 0.0
        %993 = vmatprep.subr.mxu0 0.0
        %994 = vmatpush1.xpose.msra.mxu0 0.0
        %995 = vmatprep.subr.mxu0 0.0
        %996 = vmatpush1.xpose.msra.mxu0 0.0
        %997 = vmatprep.subr.mxu0 0.0
        %998 = vmatpush1.xpose.msra.mxu0 0.0
        %999 = vmatprep.subr.mxu0 0.0
        %1000 = vmatpush1.xpose.msra.mxu0 0.0
        %1001 = vmatprep.subr.mxu0 0.0
        %1002 = vmatpush1.xpose.msra.mxu0 0.0
        %1003 = vmatprep.subr.mxu0 0.0
        %1004 = vmatpush1.xpose.msra.mxu0 0.0
        %1005 = vmatprep.subr.mxu0 0.0
        %1006 = vmatpush1.xpose.msra.mxu0 0.0
        %1007 = vmatprep.subr.mxu0 0.0
        %1008 = vmatpush1.xpose.msra.mxu0 0.0
        %1009 = vmatprep.subr.mxu0 0.0
        %1010 = vmatpush1.xpose.msra.mxu0 0.0
        %1011 = vmatprep.subr.mxu0 0.0
        %1012 = vmatpush1.xpose.msra.mxu0 0.0
        %1013 = vmatprep.subr.mxu0 0.0
        %1014 = vmatpush1.xpose.msra.mxu0 0.0
        %1015 = vmatprep.subr.mxu0 0.0
        %1016 = vmatpush1.xpose.msra.mxu0 0.0
        %1017 = vmatprep.mubr.f32.mxu0 0.0
        %1018 = vmatmul.mubr.f32.gmra.mrb[0].mxu0 %v948
        %v1019 = vpop.f32.mrb[0].mxu0
        %v1020 = vadd.f32 0.0, %v1019
        %v1021 = vpop.f32.mrb[0].mxu0
        %1022 = vdwg.mxu0
        %v1023 = vsel %vm572, %v569, 0
        %v1026 = vsel %vm572, %v424, 0
        %1028 = vmatprep.subr.mxu0 0.0
        %1029 = vmatpush1.xpose.msra.mxu0 %v1026
        %1030 = vmatprep.subr.mxu0 0.0
        %1031 = vmatpush1.xpose.msra.mxu0 0.0
        %1032 = vmatprep.subr.mxu0 0.0
        %1033 = vmatpush1.xpose.msra.mxu0 0.0
        %1034 = vmatprep.subr.mxu0 0.0
        %1035 = vmatpush1.xpose.msra.mxu0 0.0
        %1036 = vmatprep.subr.mxu0 0.0
        %1037 = vmatpush1.xpose.msra.mxu0 0.0
        %1038 = vmatprep.subr.mxu0 0.0
        %1039 = vmatpush1.xpose.msra.mxu0 0.0
        %1040 = vmatprep.subr.mxu0 0.0
        %1041 = vmatpush1.xpose.msra.mxu0 0.0
        %1042 = vmatprep.subr.mxu0 0.0
        %1043 = vmatpush1.xpose.msra.mxu0 0.0
        %1044 = vmatprep.subr.mxu0 0.0
        %1045 = vmatpush1.xpose.msra.mxu0 0.0
        %1046 = vmatprep.subr.mxu0 0.0
        %1047 = vmatpush1.xpose.msra.mxu0 0.0
        %1048 = vmatprep.subr.mxu0 0.0
        %1049 = vmatpush1.xpose.msra.mxu0 0.0
        %1050 = vmatprep.subr.mxu0 0.0
        %1051 = vmatpush1.xpose.msra.mxu0 0.0
        %1052 = vmatprep.subr.mxu0 0.0
        %1053 = vmatpush1.xpose.msra.mxu0 0.0
        %1054 = vmatprep.subr.mxu0 0.0
        %1055 = vmatpush1.xpose.msra.mxu0 0.0
        %1056 = vmatprep.subr.mxu0 0.0
        %1057 = vmatpush1.xpose.msra.mxu0 0.0
        %1058 = vmatprep.subr.mxu0 0.0
        %1059 = vmatpush1.xpose.msra.mxu0 0.0
        %1060 = vmatprep.subr.mxu0 0.0
        %1061 = vmatpush1.xpose.msra.mxu0 0.0
        %1062 = vmatprep.subr.mxu0 0.0
        %1063 = vmatpush1.xpose.msra.mxu0 0.0
        %1064 = vmatprep.subr.mxu0 0.0
        %1065 = vmatpush1.xpose.msra.mxu0 0.0
        %1066 = vmatprep.subr.mxu0 0.0
        %1067 = vmatpush1.xpose.msra.mxu0 0.0
        %1068 = vmatprep.subr.mxu0 0.0
        %1069 = vmatpush1.xpose.msra.mxu0 0.0
        %1070 = vmatprep.subr.mxu0 0.0
        %1071 = vmatpush1.xpose.msra.mxu0 0.0
        %1072 = vmatprep.subr.mxu0 0.0
        %1073 = vmatpush1.xpose.msra.mxu0 0.0
        %1074 = vmatprep.subr.mxu0 0.0
        %1075 = vmatpush1.xpose.msra.mxu0 0.0
        %1076 = vmatprep.subr.mxu0 0.0
        %1077 = vmatpush1.xpose.msra.mxu0 0.0
        %1078 = vmatprep.subr.mxu0 0.0
        %1079 = vmatpush1.xpose.msra.mxu0 0.0
        %1080 = vmatprep.subr.mxu0 0.0
        %1081 = vmatpush1.xpose.msra.mxu0 0.0
        %1082 = vmatprep.subr.mxu0 0.0
        %1083 = vmatpush1.xpose.msra.mxu0 0.0
        %1084 = vmatprep.subr.mxu0 0.0
        %1085 = vmatpush1.xpose.msra.mxu0 0.0
        %1086 = vmatprep.subr.mxu0 0.0
        %1087 = vmatpush1.xpose.msra.mxu0 0.0
        %1088 = vmatprep.subr.mxu0 0.0
        %1089 = vmatpush1.xpose.msra.mxu0 0.0
        %1090 = vmatprep.subr.mxu0 0.0
        %1091 = vmatpush1.xpose.msra.mxu0 0.0
        %1092 = vmatprep.mubr.f32.mxu0 0.0
        %1093 = vmatmul.mubr.f32.gmra.mrb[0].mxu0 %v1023
        %v1094 = vpop.f32.mrb[0].mxu0
        %v1095 = vadd.f32 0.0, %v1094
        %v1096 = vpop.f32.mrb[0].mxu0
        %1097 = vdwg.mxu0
        %v1098 = vsel %vm572, %v571, 0
        %v1101 = vsel %vm572, %v425, 0
        %1103 = vmatprep.subr.mxu0 0.0
        %1104 = vmatpush1.xpose.msra.mxu0 %v1101
        %1105 = vmatprep.subr.mxu0 0.0
        %1106 = vmatpush1.xpose.msra.mxu0 0.0
        %1107 = vmatprep.subr.mxu0 0.0
        %1108 = vmatpush1.xpose.msra.mxu0 0.0
        %1109 = vmatprep.subr.mxu0 0.0
        %1110 = vmatpush1.xpose.msra.mxu0 0.0
        %1111 = vmatprep.subr.mxu0 0.0
        %1112 = vmatpush1.xpose.msra.mxu0 0.0
        %1113 = vmatprep.subr.mxu0 0.0
        %1114 = vmatpush1.xpose.msra.mxu0 0.0
        %1115 = vmatprep.subr.mxu0 0.0
        %1116 = vmatpush1.xpose.msra.mxu0 0.0
        %1117 = vmatprep.subr.mxu0 0.0
        %1118 = vmatpush1.xpose.msra.mxu0 0.0
        %1119 = vmatprep.subr.mxu0 0.0
        %1120 = vmatpush1.xpose.msra.mxu0 0.0
        %1121 = vmatprep.subr.mxu0 0.0
        %1122 = vmatpush1.xpose.msra.mxu0 0.0
        %1123 = vmatprep.subr.mxu0 0.0
        %1124 = vmatpush1.xpose.msra.mxu0 0.0
        %1125 = vmatprep.subr.mxu0 0.0
        %1126 = vmatpush1.xpose.msra.mxu0 0.0
        %1127 = vmatprep.subr.mxu0 0.0
        %1128 = vmatpush1.xpose.msra.mxu0 0.0
        %1129 = vmatprep.subr.mxu0 0.0
        %1130 = vmatpush1.xpose.msra.mxu0 0.0
        %1131 = vmatprep.subr.mxu0 0.0
        %1132 = vmatpush1.xpose.msra.mxu0 0.0
        %1133 = vmatprep.subr.mxu0 0.0
        %1134 = vmatpush1.xpose.msra.mxu0 0.0
        %1135 = vmatprep.subr.mxu0 0.0
        %1136 = vmatpush1.xpose.msra.mxu0 0.0
        %1137 = vmatprep.subr.mxu0 0.0
        %1138 = vmatpush1.xpose.msra.mxu0 0.0
        %1139 = vmatprep.subr.mxu0 0.0
        %1140 = vmatpush1.xpose.msra.mxu0 0.0
        %1141 = vmatprep.subr.mxu0 0.0
        %1142 = vmatpush1.xpose.msra.mxu0 0.0
        %1143 = vmatprep.subr.mxu0 0.0
        %1144 = vmatpush1.xpose.msra.mxu0 0.0
        %1145 = vmatprep.subr.mxu0 0.0
        %1146 = vmatpush1.xpose.msra.mxu0 0.0
        %1147 = vmatprep.subr.mxu0 0.0
        %1148 = vmatpush1.xpose.msra.mxu0 0.0
        %1149 = vmatprep.subr.mxu0 0.0
        %1150 = vmatpush1.xpose.msra.mxu0 0.0
        %1151 = vmatprep.subr.mxu0 0.0
        %1152 = vmatpush1.xpose.msra.mxu0 0.0
        %1153 = vmatprep.subr.mxu0 0.0
        %1154 = vmatpush1.xpose.msra.mxu0 0.0
        %1155 = vmatprep.subr.mxu0 0.0
        %1156 = vmatpush1.xpose.msra.mxu0 0.0
        %1157 = vmatprep.subr.mxu0 0.0
        %1158 = vmatpush1.xpose.msra.mxu0 0.0
        %1159 = vmatprep.subr.mxu0 0.0
        %1160 = vmatpush1.xpose.msra.mxu0 0.0
        %1161 = vmatprep.subr.mxu0 0.0
        %1162 = vmatpush1.xpose.msra.mxu0 0.0
        %1163 = vmatprep.subr.mxu0 0.0
        %1164 = vmatpush1.xpose.msra.mxu0 0.0
        %1165 = vmatprep.subr.mxu0 0.0
        %1166 = vmatpush1.xpose.msra.mxu0 0.0
        %1167 = vmatprep.mubr.f32.mxu0 0.0
        %1168 = vmatmul.mubr.f32.gmra.mrb[0].mxu0 %v1098
        %v1169 = vpop.f32.mrb[0].mxu0
        %v1170 = vadd.f32 0.0, %v1169
        %v1171 = vpop.f32.mrb[0].mxu0
        %1172 = vdwg.mxu0
        %v1181 = vrot.slane %v720, 7
        %vm1182 = vcmask 1041409
        %v1183 = vsel %vm1182, %v1181, %v645
        %v1184 = vrot.slane %v795, 6
        %vm1185 = vcmask 1042434
        %v1186 = vsel %vm1185, %v1184, %v1183
        %v1187 = vrot.slane %v870, 5
        %vm1188 = vcmask 1043459
        %v1189 = vsel %vm1188, %v1187, %v1186
        %v1190 = vrot.slane %v945, 4
        %vm1191 = vcmask 1044484
        %v1192 = vsel %vm1191, %v1190, %v1189
        %v1193 = vrot.slane %v1020, 3
        %vm1194 = vcmask 1045509
        %v1195 = vsel %vm1194, %v1193, %v1192
        %v1196 = vrot.slane %v1095, 2
        %vm1197 = vcmask 1046534
        %v1198 = vsel %vm1197, %v1196, %v1195
        %v1199 = vrot.slane %v1170, 1
        %vm1200 = vcmask 1047559
        %v1201 = vsel %vm1200, %v1199, %v1198
        %v1204 = vsel %vm437, %v408, 0
        %1206 = vmatprep.subr.mxu0 0.0
        %1207 = vmatpush1.xpose.msra.mxu0 %v1204
        %1208 = vmatprep.subr.mxu0 0.0
        %1209 = vmatpush1.xpose.msra.mxu0 0.0
        %1210 = vmatprep.subr.mxu0 0.0
        %1211 = vmatpush1.xpose.msra.mxu0 0.0
        %1212 = vmatprep.subr.mxu0 0.0
        %1213 = vmatpush1.xpose.msra.mxu0 0.0
        %1214 = vmatprep.subr.mxu0 0.0
        %1215 = vmatpush1.xpose.msra.mxu0 0.0
        %1216 = vmatprep.subr.mxu0 0.0
        %1217 = vmatpush1.xpose.msra.mxu0 0.0
        %1218 = vmatprep.subr.mxu0 0.0
        %1219 = vmatpush1.xpose.msra.mxu0 0.0
        %1220 = vmatprep.subr.mxu0 0.0
        %1221 = vmatpush1.xpose.msra.mxu0 0.0
        %1222 = vmatprep.subr.mxu0 0.0
        %1223 = vmatpush1.xpose.msra.mxu0 0.0
        %1224 = vmatprep.subr.mxu0 0.0
        %1225 = vmatpush1.xpose.msra.mxu0 0.0
        %1226 = vmatprep.subr.mxu0 0.0
        %1227 = vmatpush1.xpose.msra.mxu0 0.0
        %1228 = vmatprep.subr.mxu0 0.0
        %1229 = vmatpush1.xpose.msra.mxu0 0.0
        %1230 = vmatprep.subr.mxu0 0.0
        %1231 = vmatpush1.xpose.msra.mxu0 0.0
        %1232 = vmatprep.subr.mxu0 0.0
        %1233 = vmatpush1.xpose.msra.mxu0 0.0
        %1234 = vmatprep.subr.mxu0 0.0
        %1235 = vmatpush1.xpose.msra.mxu0 0.0
        %1236 = vmatprep.subr.mxu0 0.0
        %1237 = vmatpush1.xpose.msra.mxu0 0.0
        %1238 = vmatprep.subr.mxu0 0.0
        %1239 = vmatpush1.xpose.msra.mxu0 0.0
        %1240 = vmatprep.subr.mxu0 0.0
        %1241 = vmatpush1.xpose.msra.mxu0 0.0
        %1242 = vmatprep.subr.mxu0 0.0
        %1243 = vmatpush1.xpose.msra.mxu0 0.0
        %1244 = vmatprep.subr.mxu0 0.0
        %1245 = vmatpush1.xpose.msra.mxu0 0.0
        %1246 = vmatprep.subr.mxu0 0.0
        %1247 = vmatpush1.xpose.msra.mxu0 0.0
        %1248 = vmatprep.subr.mxu0 0.0
        %1249 = vmatpush1.xpose.msra.mxu0 0.0
        %1250 = vmatprep.subr.mxu0 0.0
        %1251 = vmatpush1.xpose.msra.mxu0 0.0
        %1252 = vmatprep.subr.mxu0 0.0
        %1253 = vmatpush1.xpose.msra.mxu0 0.0
        %1254 = vmatprep.subr.mxu0 0.0
        %1255 = vmatpush1.xpose.msra.mxu0 0.0
        %1256 = vmatprep.subr.mxu0 0.0
        %1257 = vmatpush1.xpose.msra.mxu0 0.0
        %1258 = vmatprep.subr.mxu0 0.0
        %1259 = vmatpush1.xpose.msra.mxu0 0.0
        %1260 = vmatprep.subr.mxu0 0.0
        %1261 = vmatpush1.xpose.msra.mxu0 0.0
        %1262 = vmatprep.subr.mxu0 0.0
        %1263 = vmatpush1.xpose.msra.mxu0 0.0
        %1264 = vmatprep.subr.mxu0 0.0
        %1265 = vmatpush1.xpose.msra.mxu0 0.0
        %1266 = vmatprep.subr.mxu0 0.0
        %1267 = vmatpush1.xpose.msra.mxu0 0.0
        %1268 = vmatprep.subr.mxu0 0.0
        %1269 = vmatpush1.xpose.msra.mxu0 0.0
        %1270 = vmatprep.mubr.f32.mxu0 0.0
        %1271 = vmatmul.mubr.f32.gmra.mrb[0].mxu0 %v439
        %v1272 = vpop.f32.mrb[0].mxu0
        %v1273 = vadd.f32 %v1201, %v1272
        %v1274 = vpop.f32.mrb[0].mxu0
        %1275 = vdwg.mxu0
        %v1276 = vadd.f32 %v1273, %v521
        %v1277 = vsel %vm435, %v1276, -1e+15
        %v1278 = vld [vmem:[#allocation2] sm:$0xff]
        %v1279 = vsel %vm437, %v1277, -inf
        %1280 = vmax.xlane.f32.xlu0 %v1279
        %v1281 = vpop.xlane.xlu0 %1280
        %v1282 = vmax.f32 %v1278, %v1281
        %v1283 = vsub.f32 %v1278, %v1282
        %v1284 = vmul.f32 %v1283, 1.442695
        %v1285 = vpow.pop %v1284
        %1287 = vset.pattern.permute.xlu0 0
        %1288 = vperm.xlu0 %1287, %v1282
        %v1289 = vpop.permute.xlu0 %1288
        %v1291 = vsub.f32 %v1277, %v1289
        %v1292 = vmul.f32 %v1291, 1.442695
        %v1293 = vpow.pop %v1292
        %v1294 = vld [vmem:[#allocation3] sm:$0xff]
        %v1295 = vmul.f32 %v1285, %v1294
        %v1296 = vsel %vm437, %v1293, 0.0
        %1297 = vadd.xlane.f32.xlu0 %v1296
        %v1298 = vpop.xlane.xlu0 %1297
        %v1299 = vadd.f32 %v1295, %v1298
        %vm1300 = vcmask 7168
        %1301 = vst.msk [vmem:[#allocation3] sm:$0xff] %vm1300, %v1299
        %v1302 = vld [vmem:[#allocation4] sm:$0xff]
        %1304 = vset.pattern.permute.xlu0 0
        %1305 = vperm.xlu0 %1304, %v1285
        %v1306 = vpop.permute.xlu0 %1305
        %v1308 = vmul.f32 %v1306, %v1302
        %v1310 = vsel %vm437, %v1293, 0
        %1312 = vmatprep.subr.mxu0 0.0
        %1313 = vmatpush1.msra.mxu0 %v409
        %1314 = vmatprep.subr.mxu0 0.0
        %1315 = vmatpush1.msra.mxu0 0.0
        %1316 = vmatprep.subr.mxu0 0.0
        %1317 = vmatpush1.msra.mxu0 0.0
        %1318 = vmatprep.subr.mxu0 0.0
        %1319 = vmatpush1.msra.mxu0 0.0
        %1320 = vmatprep.subr.mxu0 0.0
        %1321 = vmatpush1.msra.mxu0 0.0
        %1322 = vmatprep.subr.mxu0 0.0
        %1323 = vmatpush1.msra.mxu0 0.0
        %1324 = vmatprep.subr.mxu0 0.0
        %1325 = vmatpush1.msra.mxu0 0.0
        %1326 = vmatprep.subr.mxu0 0.0
        %1327 = vmatpush1.msra.mxu0 0.0
        %1328 = vmatprep.subr.mxu0 0.0
        %1329 = vmatpush1.msra.mxu0 0.0
        %1330 = vmatprep.subr.mxu0 0.0
        %1331 = vmatpush1.msra.mxu0 0.0
        %1332 = vmatprep.subr.mxu0 0.0
        %1333 = vmatpush1.msra.mxu0 0.0
        %1334 = vmatprep.subr.mxu0 0.0
        %1335 = vmatpush1.msra.mxu0 0.0
        %1336 = vmatprep.subr.mxu0 0.0
        %1337 = vmatpush1.msra.mxu0 0.0
        %1338 = vmatprep.subr.mxu0 0.0
        %1339 = vmatpush1.msra.mxu0 0.0
        %1340 = vmatprep.subr.mxu0 0.0
        %1341 = vmatpush1.msra.mxu0 0.0
        %1342 = vmatprep.subr.mxu0 0.0
        %1343 = vmatpush1.msra.mxu0 0.0
        %1344 = vmatprep.subr.mxu0 0.0
        %1345 = vmatpush1.msra.mxu0 0.0
        %1346 = vmatprep.subr.mxu0 0.0
        %1347 = vmatpush1.msra.mxu0 0.0
        %1348 = vmatprep.subr.mxu0 0.0
        %1349 = vmatpush1.msra.mxu0 0.0
        %1350 = vmatprep.subr.mxu0 0.0
        %1351 = vmatpush1.msra.mxu0 0.0
        %1352 = vmatprep.subr.mxu0 0.0
        %1353 = vmatpush1.msra.mxu0 0.0
        %1354 = vmatprep.subr.mxu0 0.0
        %1355 = vmatpush1.msra.mxu0 0.0
        %1356 = vmatprep.subr.mxu0 0.0
        %1357 = vmatpush1.msra.mxu0 0.0
        %1358 = vmatprep.subr.mxu0 0.0
        %1359 = vmatpush1.msra.mxu0 0.0
        %1360 = vmatprep.subr.mxu0 0.0
        %1361 = vmatpush1.msra.mxu0 0.0
        %1362 = vmatprep.subr.mxu0 0.0
        %1363 = vmatpush1.msra.mxu0 0.0
        %1364 = vmatprep.subr.mxu0 0.0
        %1365 = vmatpush1.msra.mxu0 0.0
        %1366 = vmatprep.subr.mxu0 0.0
        %1367 = vmatpush1.msra.mxu0 0.0
        %1368 = vmatprep.subr.mxu0 0.0
        %1369 = vmatpush1.msra.mxu0 0.0
        %1370 = vmatprep.subr.mxu0 0.0
        %1371 = vmatpush1.msra.mxu0 0.0
        %1372 = vmatprep.subr.mxu0 0.0
        %1373 = vmatpush1.msra.mxu0 0.0
        %1374 = vmatprep.subr.mxu0 0.0
        %1375 = vmatpush1.msra.mxu0 0.0
        %1376 = vmatprep.mubr.f32.mxu0 0.0
        %1377 = vmatmul.mubr.f32.gmra.mrb[0].mxu0 %v1310
        %v1378 = vpop.f32.mrb[0].mxu0
        %v1379 = vadd.f32 0.0, %v1378
        %v1380 = vpop.f32.mrb[0].mxu0
        %1381 = vdwg.mxu0
        %v1382 = vadd.f32 %v1308, %v1379
        %1383 = vst.msk [vmem:[#allocation4] sm:$0xff] %vm437, %v1382
        %1384 = vst.msk [vmem:[#allocation2] sm:$0xff] %vm1300, %v1282
        %v1385 = vld [vmem:[%s5 + $0x8] sm:$0xff]
        %1386 = vrot.lane.b32.xlu0 %v407, 120
        %v1387 = vpop.permute.xlu0 %1386
        %v1388 = vsel %vm437, %v1387, 0
        %1390 = vmatprep.subr.mxu0 0.0
        %1391 = vmatpush1.msra.mxu0 %v1385
        %1392 = vmatprep.subr.mxu0 0.0
        %1393 = vmatpush1.msra.mxu0 0.0
        %1394 = vmatprep.subr.mxu0 0.0
        %1395 = vmatpush1.msra.mxu0 0.0
        %1396 = vmatprep.subr.mxu0 0.0
        %1397 = vmatpush1.msra.mxu0 0.0
        %1398 = vmatprep.subr.mxu0 0.0
        %1399 = vmatpush1.msra.mxu0 0.0
        %1400 = vmatprep.subr.mxu0 0.0
        %1401 = vmatpush1.msra.mxu0 0.0
        %1402 = vmatprep.subr.mxu0 0.0
        %1403 = vmatpush1.msra.mxu0 0.0
        %1404 = vmatprep.subr.mxu0 0.0
        %1405 = vmatpush1.msra.mxu0 0.0
        %1406 = vmatprep.subr.mxu0 0.0
        %1407 = vmatpush1.msra.mxu0 0.0
        %1408 = vmatprep.subr.mxu0 0.0
        %1409 = vmatpush1.msra.mxu0 0.0
        %1410 = vmatprep.subr.mxu0 0.0
        %1411 = vmatpush1.msra.mxu0 0.0
        %1412 = vmatprep.subr.mxu0 0.0
        %1413 = vmatpush1.msra.mxu0 0.0
        %1414 = vmatprep.subr.mxu0 0.0
        %1415 = vmatpush1.msra.mxu0 0.0
        %1416 = vmatprep.subr.mxu0 0.0
        %1417 = vmatpush1.msra.mxu0 0.0
        %1418 = vmatprep.subr.mxu0 0.0
        %1419 = vmatpush1.msra.mxu0 0.0
        %1420 = vmatprep.subr.mxu0 0.0
        %1421 = vmatpush1.msra.mxu0 0.0
        %1422 = vmatprep.subr.mxu0 0.0
        %1423 = vmatpush1.msra.mxu0 0.0
        %1424 = vmatprep.subr.mxu0 0.0
        %1425 = vmatpush1.msra.mxu0 0.0
        %1426 = vmatprep.subr.mxu0 0.0
        %1427 = vmatpush1.msra.mxu0 0.0
        %1428 = vmatprep.subr.mxu0 0.0
        %1429 = vmatpush1.msra.mxu0 0.0
        %1430 = vmatprep.subr.mxu0 0.0
        %1431 = vmatpush1.msra.mxu0 0.0
        %1432 = vmatprep.subr.mxu0 0.0
        %1433 = vmatpush1.msra.mxu0 0.0
        %1434 = vmatprep.subr.mxu0 0.0
        %1435 = vmatpush1.msra.mxu0 0.0
        %1436 = vmatprep.subr.mxu0 0.0
        %1437 = vmatpush1.msra.mxu0 0.0
        %1438 = vmatprep.subr.mxu0 0.0
        %1439 = vmatpush1.msra.mxu0 0.0
        %1440 = vmatprep.subr.mxu0 0.0
        %1441 = vmatpush1.msra.mxu0 0.0
        %1442 = vmatprep.subr.mxu0 0.0
        %1443 = vmatpush1.msra.mxu0 0.0
        %1444 = vmatprep.subr.mxu0 0.0
        %1445 = vmatpush1.msra.mxu0 0.0
        %1446 = vmatprep.subr.mxu0 0.0
        %1447 = vmatpush1.msra.mxu0 0.0
        %1448 = vmatprep.subr.mxu0 0.0
        %1449 = vmatpush1.msra.mxu0 0.0
        %1450 = vmatprep.subr.mxu0 0.0
        %1451 = vmatpush1.msra.mxu0 0.0
        %1452 = vmatprep.subr.mxu0 0.0
        %1453 = vmatpush1.msra.mxu0 0.0
        %1454 = vmatprep.mubr.f32.mxu0 0.0
        %1455 = vmatmul.mubr.f32.gmra.mrb[0].mxu0 %v1388
        %v1456 = vpop.f32.mrb[0].mxu0
        %v1457 = vadd.f32 0.0, %v1456
        %v1458 = vpop.f32.mrb[0].mxu0
        %1459 = vdwg.mxu0
        %v1460 = vld [vmem:[%s6] sm:$0x1]
        %v1462 = vlaneseq
        %v1463 = vshrl.u32 %v1462, 7
        %v1464 = vsub.s32 0, %v1463
        %v1465 = vrot.slane %v1460, %v1464
        %v1467 = vmul.f32 %v407, %v1465
        %1469 = vrot.lane.b32.xlu0 %v1467, 120
        %v1470 = vpop.permute.xlu0 %1469
        %v1472 = vsel %vm437, %v1470, 0.0
        %1473 = vadd.xlane.f32.xlu0 %v1472
        %v1474 = vpop.xlane.xlu0 %1473
        %v1476 = vcombine.high %v1457, %v1457
        %v1478 = vunpack.c.l.s4 1966171168
        %v1479 = vunpack.c.0.s8 %v1478
        %v1480 = vlaneseq
        %v1481 = vshrl.u32 %v1480, 7
        %v1482 = vsub.s32 %v1479, %v1481
        %v1483 = vrot.slane %v1457, %v1482
        %v1485 = vunpack.c.l.s4 1966171168
        %v1486 = vunpack.c.0.s8 %v1485
        %v1487 = vlaneseq
        %v1488 = vshrl.u32 %v1487, 7
        %v1489 = vsub.s32 %v1486, %v1488
        %v1490 = vrot.slane %v1476, %v1489
        %v1491 = vcombine.high %v1483, %v1483
        %v1492 = vcombine.high %v1490, %v1490
        %v1494 = vunpack.c.l.s4 1966171168
        %v1495 = vunpack.c.0.s8 %v1494
        %v1496 = vlaneseq
        %v1497 = vshrl.u32 %v1496, 7
        %v1498 = vsub.s32 %v1495, %v1497
        %v1499 = vrot.slane %v1483, %v1498
        %v1501 = vunpack.c.l.s4 1966171168
        %v1502 = vunpack.c.0.s8 %v1501
        %v1503 = vlaneseq
        %v1504 = vshrl.u32 %v1503, 7
        %v1505 = vsub.s32 %v1502, %v1504
        %v1506 = vrot.slane %v1490, %v1505
        %v1508 = vunpack.c.l.s4 1966171168
        %v1509 = vunpack.c.0.s8 %v1508
        %v1510 = vlaneseq
        %v1511 = vshrl.u32 %v1510, 7
        %v1512 = vsub.s32 %v1509, %v1511
        %v1513 = vrot.slane %v1491, %v1512
        %v1515 = vunpack.c.l.s4 1966171168
        %v1516 = vunpack.c.0.s8 %v1515
        %v1517 = vlaneseq
        %v1518 = vshrl.u32 %v1517, 7
        %v1519 = vsub.s32 %v1516, %v1518
        %v1520 = vrot.slane %v1492, %v1519
        %v1521 = vcombine.high %v1499, %v1499
        %v1522 = vcombine.high %v1506, %v1506
        %v1523 = vcombine.high %v1513, %v1513
        %v1524 = vcombine.high %v1520, %v1520
        %v1525 = vsel %vm572, %v1499, 0
        %1527 = vmatprep.subr.mxu0 0.0
        %1528 = vmatpush1.xpose.msra.mxu0 %v576
        %1529 = vmatprep.subr.mxu0 0.0
        %1530 = vmatpush1.xpose.msra.mxu0 0.0
        %1531 = vmatprep.subr.mxu0 0.0
        %1532 = vmatpush1.xpose.msra.mxu0 0.0
        %1533 = vmatprep.subr.mxu0 0.0
        %1534 = vmatpush1.xpose.msra.mxu0 0.0
        %1535 = vmatprep.subr.mxu0 0.0
        %1536 = vmatpush1.xpose.msra.mxu0 0.0
        %1537 = vmatprep.subr.mxu0 0.0
        %1538 = vmatpush1.xpose.msra.mxu0 0.0
        %1539 = vmatprep.subr.mxu0 0.0
        %1540 = vmatpush1.xpose.msra.mxu0 0.0
        %1541 = vmatprep.subr.mxu0 0.0
        %1542 = vmatpush1.xpose.msra.mxu0 0.0
        %1543 = vmatprep.subr.mxu0 0.0
        %1544 = vmatpush1.xpose.msra.mxu0 0.0
        %1545 = vmatprep.subr.mxu0 0.0
        %1546 = vmatpush1.xpose.msra.mxu0 0.0
        %1547 = vmatprep.subr.mxu0 0.0
        %1548 = vmatpush1.xpose.msra.mxu0 0.0
        %1549 = vmatprep.subr.mxu0 0.0
        %1550 = vmatpush1.xpose.msra.mxu0 0.0
        %1551 = vmatprep.subr.mxu0 0.0
        %1552 = vmatpush1.xpose.msra.mxu0 0.0
        %1553 = vmatprep.subr.mxu0 0.0
        %1554 = vmatpush1.xpose.msra.mxu0 0.0
        %1555 = vmatprep.subr.mxu0 0.0
        %1556 = vmatpush1.xpose.msra.mxu0 0.0
        %1557 = vmatprep.subr.mxu0 0.0
        %1558 = vmatpush1.xpose.msra.mxu0 0.0
        %1559 = vmatprep.subr.mxu0 0.0
        %1560 = vmatpush1.xpose.msra.mxu0 0.0
        %1561 = vmatprep.subr.mxu0 0.0
        %1562 = vmatpush1.xpose.msra.mxu0 0.0
        %1563 = vmatprep.subr.mxu0 0.0
        %1564 = vmatpush1.xpose.msra.mxu0 0.0
        %1565 = vmatprep.subr.mxu0 0.0
        %1566 = vmatpush1.xpose.msra.mxu0 0.0
        %1567 = vmatprep.subr.mxu0 0.0
        %1568 = vmatpush1.xpose.msra.mxu0 0.0
        %1569 = vmatprep.subr.mxu0 0.0
        %1570 = vmatpush1.xpose.msra.mxu0 0.0
        %1571 = vmatprep.subr.mxu0 0.0
        %1572 = vmatpush1.xpose.msra.mxu0 0.0
        %1573 = vmatprep.subr.mxu0 0.0
        %1574 = vmatpush1.xpose.msra.mxu0 0.0
        %1575 = vmatprep.subr.mxu0 0.0
        %1576 = vmatpush1.xpose.msra.mxu0 0.0
        %1577 = vmatprep.subr.mxu0 0.0
        %1578 = vmatpush1.xpose.msra.mxu0 0.0
        %1579 = vmatprep.subr.mxu0 0.0
        %1580 = vmatpush1.xpose.msra.mxu0 0.0
        %1581 = vmatprep.subr.mxu0 0.0
        %1582 = vmatpush1.xpose.msra.mxu0 0.0
        %1583 = vmatprep.subr.mxu0 0.0
        %1584 = vmatpush1.xpose.msra.mxu0 0.0
        %1585 = vmatprep.subr.mxu0 0.0
        %1586 = vmatpush1.xpose.msra.mxu0 0.0
        %1587 = vmatprep.subr.mxu0 0.0
        %1588 = vmatpush1.xpose.msra.mxu0 0.0
        %1589 = vmatprep.subr.mxu0 0.0
        %1590 = vmatpush1.xpose.msra.mxu0 0.0
        %1591 = vmatprep.mubr.f32.mxu0 0.0
        %1592 = vmatmul.mubr.f32.gmra.mrb[0].mxu0 %v1525
        %v1593 = vpop.f32.mrb[0].mxu0
        %v1594 = vadd.f32 0.0, %v1593
        %v1595 = vpop.f32.mrb[0].mxu0
        %1596 = vdwg.mxu0
        %v1597 = vsel %vm572, %v1513, 0
        %1599 = vmatprep.subr.mxu0 0.0
        %1600 = vmatpush1.xpose.msra.mxu0 %v651
        %1601 = vmatprep.subr.mxu0 0.0
        %1602 = vmatpush1.xpose.msra.mxu0 0.0
        %1603 = vmatprep.subr.mxu0 0.0
        %1604 = vmatpush1.xpose.msra.mxu0 0.0
        %1605 = vmatprep.subr.mxu0 0.0
        %1606 = vmatpush1.xpose.msra.mxu0 0.0
        %1607 = vmatprep.subr.mxu0 0.0
        %1608 = vmatpush1.xpose.msra.mxu0 0.0
        %1609 = vmatprep.subr.mxu0 0.0
        %1610 = vmatpush1.xpose.msra.mxu0 0.0
        %1611 = vmatprep.subr.mxu0 0.0
        %1612 = vmatpush1.xpose.msra.mxu0 0.0
        %1613 = vmatprep.subr.mxu0 0.0
        %1614 = vmatpush1.xpose.msra.mxu0 0.0
        %1615 = vmatprep.subr.mxu0 0.0
        %1616 = vmatpush1.xpose.msra.mxu0 0.0
        %1617 = vmatprep.subr.mxu0 0.0
        %1618 = vmatpush1.xpose.msra.mxu0 0.0
        %1619 = vmatprep.subr.mxu0 0.0
        %1620 = vmatpush1.xpose.msra.mxu0 0.0
        %1621 = vmatprep.subr.mxu0 0.0
        %1622 = vmatpush1.xpose.msra.mxu0 0.0
        %1623 = vmatprep.subr.mxu0 0.0
        %1624 = vmatpush1.xpose.msra.mxu0 0.0
        %1625 = vmatprep.subr.mxu0 0.0
        %1626 = vmatpush1.xpose.msra.mxu0 0.0
        %1627 = vmatprep.subr.mxu0 0.0
        %1628 = vmatpush1.xpose.msra.mxu0 0.0
        %1629 = vmatprep.subr.mxu0 0.0
        %1630 = vmatpush1.xpose.msra.mxu0 0.0
        %1631 = vmatprep.subr.mxu0 0.0
        %1632 = vmatpush1.xpose.msra.mxu0 0.0
        %1633 = vmatprep.subr.mxu0 0.0
        %1634 = vmatpush1.xpose.msra.mxu0 0.0
        %1635 = vmatprep.subr.mxu0 0.0
        %1636 = vmatpush1.xpose.msra.mxu0 0.0
        %1637 = vmatprep.subr.mxu0 0.0
        %1638 = vmatpush1.xpose.msra.mxu0 0.0
        %1639 = vmatprep.subr.mxu0 0.0
        %1640 = vmatpush1.xpose.msra.mxu0 0.0
        %1641 = vmatprep.subr.mxu0 0.0
        %1642 = vmatpush1.xpose.msra.mxu0 0.0
        %1643 = vmatprep.subr.mxu0 0.0
        %1644 = vmatpush1.xpose.msra.mxu0 0.0
        %1645 = vmatprep.subr.mxu0 0.0
        %1646 = vmatpush1.xpose.msra.mxu0 0.0
        %1647 = vmatprep.subr.mxu0 0.0
        %1648 = vmatpush1.xpose.msra.mxu0 0.0
        %1649 = vmatprep.subr.mxu0 0.0
        %1650 = vmatpush1.xpose.msra.mxu0 0.0
        %1651 = vmatprep.subr.mxu0 0.0
        %1652 = vmatpush1.xpose.msra.mxu0 0.0
        %1653 = vmatprep.subr.mxu0 0.0
        %1654 = vmatpush1.xpose.msra.mxu0 0.0
        %1655 = vmatprep.subr.mxu0 0.0
        %1656 = vmatpush1.xpose.msra.mxu0 0.0
        %1657 = vmatprep.subr.mxu0 0.0
        %1658 = vmatpush1.xpose.msra.mxu0 0.0
        %1659 = vmatprep.subr.mxu0 0.0
        %1660 = vmatpush1.xpose.msra.mxu0 0.0
        %1661 = vmatprep.subr.mxu0 0.0
        %1662 = vmatpush1.xpose.msra.mxu0 0.0
        %1663 = vmatprep.mubr.f32.mxu0 0.0
        %1664 = vmatmul.mubr.f32.gmra.mrb[0].mxu0 %v1597
        %v1665 = vpop.f32.mrb[0].mxu0
        %v1666 = vadd.f32 0.0, %v1665
        %v1667 = vpop.f32.mrb[0].mxu0
        %1668 = vdwg.mxu0
        %v1669 = vsel %vm572, %v1521, 0
        %1671 = vmatprep.subr.mxu0 0.0
        %1672 = vmatpush1.xpose.msra.mxu0 %v726
        %1673 = vmatprep.subr.mxu0 0.0
        %1674 = vmatpush1.xpose.msra.mxu0 0.0
        %1675 = vmatprep.subr.mxu0 0.0
        %1676 = vmatpush1.xpose.msra.mxu0 0.0
        %1677 = vmatprep.subr.mxu0 0.0
        %1678 = vmatpush1.xpose.msra.mxu0 0.0
        %1679 = vmatprep.subr.mxu0 0.0
        %1680 = vmatpush1.xpose.msra.mxu0 0.0
        %1681 = vmatprep.subr.mxu0 0.0
        %1682 = vmatpush1.xpose.msra.mxu0 0.0
        %1683 = vmatprep.subr.mxu0 0.0
        %1684 = vmatpush1.xpose.msra.mxu0 0.0
        %1685 = vmatprep.subr.mxu0 0.0
        %1686 = vmatpush1.xpose.msra.mxu0 0.0
        %1687 = vmatprep.subr.mxu0 0.0
        %1688 = vmatpush1.xpose.msra.mxu0 0.0
        %1689 = vmatprep.subr.mxu0 0.0
        %1690 = vmatpush1.xpose.msra.mxu0 0.0
        %1691 = vmatprep.subr.mxu0 0.0
        %1692 = vmatpush1.xpose.msra.mxu0 0.0
        %1693 = vmatprep.subr.mxu0 0.0
        %1694 = vmatpush1.xpose.msra.mxu0 0.0
        %1695 = vmatprep.subr.mxu0 0.0
        %1696 = vmatpush1.xpose.msra.mxu0 0.0
        %1697 = vmatprep.subr.mxu0 0.0
        %1698 = vmatpush1.xpose.msra.mxu0 0.0
        %1699 = vmatprep.subr.mxu0 0.0
        %1700 = vmatpush1.xpose.msra.mxu0 0.0
        %1701 = vmatprep.subr.mxu0 0.0
        %1702 = vmatpush1.xpose.msra.mxu0 0.0
        %1703 = vmatprep.subr.mxu0 0.0
        %1704 = vmatpush1.xpose.msra.mxu0 0.0
        %1705 = vmatprep.subr.mxu0 0.0
        %1706 = vmatpush1.xpose.msra.mxu0 0.0
        %1707 = vmatprep.subr.mxu0 0.0
        %1708 = vmatpush1.xpose.msra.mxu0 0.0
        %1709 = vmatprep.subr.mxu0 0.0
        %1710 = vmatpush1.xpose.msra.mxu0 0.0
        %1711 = vmatprep.subr.mxu0 0.0
        %1712 = vmatpush1.xpose.msra.mxu0 0.0
        %1713 = vmatprep.subr.mxu0 0.0
        %1714 = vmatpush1.xpose.msra.mxu0 0.0
        %1715 = vmatprep.subr.mxu0 0.0
        %1716 = vmatpush1.xpose.msra.mxu0 0.0
        %1717 = vmatprep.subr.mxu0 0.0
        %1718 = vmatpush1.xpose.msra.mxu0 0.0
        %1719 = vmatprep.subr.mxu0 0.0
        %1720 = vmatpush1.xpose.msra.mxu0 0.0
        %1721 = vmatprep.subr.mxu0 0.0
        %1722 = vmatpush1.xpose.msra.mxu0 0.0
        %1723 = vmatprep.subr.mxu0 0.0
        %1724 = vmatpush1.xpose.msra.mxu0 0.0
        %1725 = vmatprep.subr.mxu0 0.0
        %1726 = vmatpush1.xpose.msra.mxu0 0.0
        %1727 = vmatprep.subr.mxu0 0.0
        %1728 = vmatpush1.xpose.msra.mxu0 0.0
        %1729 = vmatprep.subr.mxu0 0.0
        %1730 = vmatpush1.xpose.msra.mxu0 0.0
        %1731 = vmatprep.subr.mxu0 0.0
        %1732 = vmatpush1.xpose.msra.mxu0 0.0
        %1733 = vmatprep.subr.mxu0 0.0
        %1734 = vmatpush1.xpose.msra.mxu0 0.0
        %1735 = vmatprep.mubr.f32.mxu0 0.0
        %1736 = vmatmul.mubr.f32.gmra.mrb[0].mxu0 %v1669
        %v1737 = vpop.f32.mrb[0].mxu0
        %v1738 = vadd.f32 0.0, %v1737
        %v1739 = vpop.f32.mrb[0].mxu0
        %1740 = vdwg.mxu0
        %v1741 = vsel %vm572, %v1523, 0
        %1743 = vmatprep.subr.mxu0 0.0
        %1744 = vmatpush1.xpose.msra.mxu0 %v801
        %1745 = vmatprep.subr.mxu0 0.0
        %1746 = vmatpush1.xpose.msra.mxu0 0.0
        %1747 = vmatprep.subr.mxu0 0.0
        %1748 = vmatpush1.xpose.msra.mxu0 0.0
        %1749 = vmatprep.subr.mxu0 0.0
        %1750 = vmatpush1.xpose.msra.mxu0 0.0
        %1751 = vmatprep.subr.mxu0 0.0
        %1752 = vmatpush1.xpose.msra.mxu0 0.0
        %1753 = vmatprep.subr.mxu0 0.0
        %1754 = vmatpush1.xpose.msra.mxu0 0.0
        %1755 = vmatprep.subr.mxu0 0.0
        %1756 = vmatpush1.xpose.msra.mxu0 0.0
        %1757 = vmatprep.subr.mxu0 0.0
        %1758 = vmatpush1.xpose.msra.mxu0 0.0
        %1759 = vmatprep.subr.mxu0 0.0
        %1760 = vmatpush1.xpose.msra.mxu0 0.0
        %1761 = vmatprep.subr.mxu0 0.0
        %1762 = vmatpush1.xpose.msra.mxu0 0.0
        %1763 = vmatprep.subr.mxu0 0.0
        %1764 = vmatpush1.xpose.msra.mxu0 0.0
        %1765 = vmatprep.subr.mxu0 0.0
        %1766 = vmatpush1.xpose.msra.mxu0 0.0
        %1767 = vmatprep.subr.mxu0 0.0
        %1768 = vmatpush1.xpose.msra.mxu0 0.0
        %1769 = vmatprep.subr.mxu0 0.0
        %1770 = vmatpush1.xpose.msra.mxu0 0.0
        %1771 = vmatprep.subr.mxu0 0.0
        %1772 = vmatpush1.xpose.msra.mxu0 0.0
        %1773 = vmatprep.subr.mxu0 0.0
        %1774 = vmatpush1.xpose.msra.mxu0 0.0
        %1775 = vmatprep.subr.mxu0 0.0
        %1776 = vmatpush1.xpose.msra.mxu0 0.0
        %1777 = vmatprep.subr.mxu0 0.0
        %1778 = vmatpush1.xpose.msra.mxu0 0.0
        %1779 = vmatprep.subr.mxu0 0.0
        %1780 = vmatpush1.xpose.msra.mxu0 0.0
        %1781 = vmatprep.subr.mxu0 0.0
        %1782 = vmatpush1.xpose.msra.mxu0 0.0
        %1783 = vmatprep.subr.mxu0 0.0
        %1784 = vmatpush1.xpose.msra.mxu0 0.0
        %1785 = vmatprep.subr.mxu0 0.0
        %1786 = vmatpush1.xpose.msra.mxu0 0.0
        %1787 = vmatprep.subr.mxu0 0.0
        %1788 = vmatpush1.xpose.msra.mxu0 0.0
        %1789 = vmatprep.subr.mxu0 0.0
        %1790 = vmatpush1.xpose.msra.mxu0 0.0
        %1791 = vmatprep.subr.mxu0 0.0
        %1792 = vmatpush1.xpose.msra.mxu0 0.0
        %1793 = vmatprep.subr.mxu0 0.0
        %1794 = vmatpush1.xpose.msra.mxu0 0.0
        %1795 = vmatprep.subr.mxu0 0.0
        %1796 = vmatpush1.xpose.msra.mxu0 0.0
        %1797 = vmatprep.subr.mxu0 0.0
        %1798 = vmatpush1.xpose.msra.mxu0 0.0
        %1799 = vmatprep.subr.mxu0 0.0
        %1800 = vmatpush1.xpose.msra.mxu0 0.0
        %1801 = vmatprep.subr.mxu0 0.0
        %1802 = vmatpush1.xpose.msra.mxu0 0.0
        %1803 = vmatprep.subr.mxu0 0.0
        %1804 = vmatpush1.xpose.msra.mxu0 0.0
        %1805 = vmatprep.subr.mxu0 0.0
        %1806 = vmatpush1.xpose.msra.mxu0 0.0
        %1807 = vmatprep.mubr.f32.mxu0 0.0
        %1808 = vmatmul.mubr.f32.gmra.mrb[0].mxu0 %v1741
        %v1809 = vpop.f32.mrb[0].mxu0
        %v1810 = vadd.f32 0.0, %v1809
        %v1811 = vpop.f32.mrb[0].mxu0
        %1812 = vdwg.mxu0
        %v1813 = vsel %vm572, %v1506, 0
        %1815 = vmatprep.subr.mxu0 0.0
        %1816 = vmatpush1.xpose.msra.mxu0 %v876
        %1817 = vmatprep.subr.mxu0 0.0
        %1818 = vmatpush1.xpose.msra.mxu0 0.0
        %1819 = vmatprep.subr.mxu0 0.0
        %1820 = vmatpush1.xpose.msra.mxu0 0.0
        %1821 = vmatprep.subr.mxu0 0.0
        %1822 = vmatpush1.xpose.msra.mxu0 0.0
        %1823 = vmatprep.subr.mxu0 0.0
        %1824 = vmatpush1.xpose.msra.mxu0 0.0
        %1825 = vmatprep.subr.mxu0 0.0
        %1826 = vmatpush1.xpose.msra.mxu0 0.0
        %1827 = vmatprep.subr.mxu0 0.0
        %1828 = vmatpush1.xpose.msra.mxu0 0.0
        %1829 = vmatprep.subr.mxu0 0.0
        %1830 = vmatpush1.xpose.msra.mxu0 0.0
        %1831 = vmatprep.subr.mxu0 0.0
        %1832 = vmatpush1.xpose.msra.mxu0 0.0
        %1833 = vmatprep.subr.mxu0 0.0
        %1834 = vmatpush1.xpose.msra.mxu0 0.0
        %1835 = vmatprep.subr.mxu0 0.0
        %1836 = vmatpush1.xpose.msra.mxu0 0.0
        %1837 = vmatprep.subr.mxu0 0.0
        %1838 = vmatpush1.xpose.msra.mxu0 0.0
        %1839 = vmatprep.subr.mxu0 0.0
        %1840 = vmatpush1.xpose.msra.mxu0 0.0
        %1841 = vmatprep.subr.mxu0 0.0
        %1842 = vmatpush1.xpose.msra.mxu0 0.0
        %1843 = vmatprep.subr.mxu0 0.0
        %1844 = vmatpush1.xpose.msra.mxu0 0.0
        %1845 = vmatprep.subr.mxu0 0.0
        %1846 = vmatpush1.xpose.msra.mxu0 0.0
        %1847 = vmatprep.subr.mxu0 0.0
        %1848 = vmatpush1.xpose.msra.mxu0 0.0
        %1849 = vmatprep.subr.mxu0 0.0
        %1850 = vmatpush1.xpose.msra.mxu0 0.0
        %1851 = vmatprep.subr.mxu0 0.0
        %1852 = vmatpush1.xpose.msra.mxu0 0.0
        %1853 = vmatprep.subr.mxu0 0.0
        %1854 = vmatpush1.xpose.msra.mxu0 0.0
        %1855 = vmatprep.subr.mxu0 0.0
        %1856 = vmatpush1.xpose.msra.mxu0 0.0
        %1857 = vmatprep.subr.mxu0 0.0
        %1858 = vmatpush1.xpose.msra.mxu0 0.0
        %1859 = vmatprep.subr.mxu0 0.0
        %1860 = vmatpush1.xpose.msra.mxu0 0.0
        %1861 = vmatprep.subr.mxu0 0.0
        %1862 = vmatpush1.xpose.msra.mxu0 0.0
        %1863 = vmatprep.subr.mxu0 0.0
        %1864 = vmatpush1.xpose.msra.mxu0 0.0
        %1865 = vmatprep.subr.mxu0 0.0
        %1866 = vmatpush1.xpose.msra.mxu0 0.0
        %1867 = vmatprep.subr.mxu0 0.0
        %1868 = vmatpush1.xpose.msra.mxu0 0.0
        %1869 = vmatprep.subr.mxu0 0.0
        %1870 = vmatpush1.xpose.msra.mxu0 0.0
        %1871 = vmatprep.subr.mxu0 0.0
        %1872 = vmatpush1.xpose.msra.mxu0 0.0
        %1873 = vmatprep.subr.mxu0 0.0
        %1874 = vmatpush1.xpose.msra.mxu0 0.0
        %1875 = vmatprep.subr.mxu0 0.0
        %1876 = vmatpush1.xpose.msra.mxu0 0.0
        %1877 = vmatprep.subr.mxu0 0.0
        %1878 = vmatpush1.xpose.msra.mxu0 0.0
        %1879 = vmatprep.mubr.f32.mxu0 0.0
        %1880 = vmatmul.mubr.f32.gmra.mrb[0].mxu0 %v1813
        %v1881 = vpop.f32.mrb[0].mxu0
        %v1882 = vadd.f32 0.0, %v1881
        %v1883 = vpop.f32.mrb[0].mxu0
        %1884 = vdwg.mxu0
        %v1885 = vsel %vm572, %v1520, 0
        %1887 = vmatprep.subr.mxu0 0.0
        %1888 = vmatpush1.xpose.msra.mxu0 %v951
        %1889 = vmatprep.subr.mxu0 0.0
        %1890 = vmatpush1.xpose.msra.mxu0 0.0
        %1891 = vmatprep.subr.mxu0 0.0
        %1892 = vmatpush1.xpose.msra.mxu0 0.0
        %1893 = vmatprep.subr.mxu0 0.0
        %1894 = vmatpush1.xpose.msra.mxu0 0.0
        %1895 = vmatprep.subr.mxu0 0.0
        %1896 = vmatpush1.xpose.msra.mxu0 0.0
        %1897 = vmatprep.subr.mxu0 0.0
        %1898 = vmatpush1.xpose.msra.mxu0 0.0
        %1899 = vmatprep.subr.mxu0 0.0
        %1900 = vmatpush1.xpose.msra.mxu0 0.0
        %1901 = vmatprep.subr.mxu0 0.0
        %1902 = vmatpush1.xpose.msra.mxu0 0.0
        %1903 = vmatprep.subr.mxu0 0.0
        %1904 = vmatpush1.xpose.msra.mxu0 0.0
        %1905 = vmatprep.subr.mxu0 0.0
        %1906 = vmatpush1.xpose.msra.mxu0 0.0
        %1907 = vmatprep.subr.mxu0 0.0
        %1908 = vmatpush1.xpose.msra.mxu0 0.0
        %1909 = vmatprep.subr.mxu0 0.0
        %1910 = vmatpush1.xpose.msra.mxu0 0.0
        %1911 = vmatprep.subr.mxu0 0.0
        %1912 = vmatpush1.xpose.msra.mxu0 0.0
        %1913 = vmatprep.subr.mxu0 0.0
        %1914 = vmatpush1.xpose.msra.mxu0 0.0
        %1915 = vmatprep.subr.mxu0 0.0
        %1916 = vmatpush1.xpose.msra.mxu0 0.0
        %1917 = vmatprep.subr.mxu0 0.0
        %1918 = vmatpush1.xpose.msra.mxu0 0.0
        %1919 = vmatprep.subr.mxu0 0.0
        %1920 = vmatpush1.xpose.msra.mxu0 0.0
        %1921 = vmatprep.subr.mxu0 0.0
        %1922 = vmatpush1.xpose.msra.mxu0 0.0
        %1923 = vmatprep.subr.mxu0 0.0
        %1924 = vmatpush1.xpose.msra.mxu0 0.0
        %1925 = vmatprep.subr.mxu0 0.0
        %1926 = vmatpush1.xpose.msra.mxu0 0.0
        %1927 = vmatprep.subr.mxu0 0.0
        %1928 = vmatpush1.xpose.msra.mxu0 0.0
        %1929 = vmatprep.subr.mxu0 0.0
        %1930 = vmatpush1.xpose.msra.mxu0 0.0
        %1931 = vmatprep.subr.mxu0 0.0
        %1932 = vmatpush1.xpose.msra.mxu0 0.0
        %1933 = vmatprep.subr.mxu0 0.0
        %1934 = vmatpush1.xpose.msra.mxu0 0.0
        %1935 = vmatprep.subr.mxu0 0.0
        %1936 = vmatpush1.xpose.msra.mxu0 0.0
        %1937 = vmatprep.subr.mxu0 0.0
        %1938 = vmatpush1.xpose.msra.mxu0 0.0
        %1939 = vmatprep.subr.mxu0 0.0
        %1940 = vmatpush1.xpose.msra.mxu0 0.0
        %1941 = vmatprep.subr.mxu0 0.0
        %1942 = vmatpush1.xpose.msra.mxu0 0.0
        %1943 = vmatprep.subr.mxu0 0.0
        %1944 = vmatpush1.xpose.msra.mxu0 0.0
        %1945 = vmatprep.subr.mxu0 0.0
        %1946 = vmatpush1.xpose.msra.mxu0 0.0
        %1947 = vmatprep.subr.mxu0 0.0
        %1948 = vmatpush1.xpose.msra.mxu0 0.0
        %1949 = vmatprep.subr.mxu0 0.0
        %1950 = vmatpush1.xpose.msra.mxu0 0.0
        %1951 = vmatprep.mubr.f32.mxu0 0.0
        %1952 = vmatmul.mubr.f32.gmra.mrb[0].mxu0 %v1885
        %v1953 = vpop.f32.mrb[0].mxu0
        %v1954 = vadd.f32 0.0, %v1953
        %v1955 = vpop.f32.mrb[0].mxu0
        %1956 = vdwg.mxu0
        %v1957 = vsel %vm572, %v1522, 0
        %1959 = vmatprep.subr.mxu0 0.0
        %1960 = vmatpush1.xpose.msra.mxu0 %v1026
        %1961 = vmatprep.subr.mxu0 0.0
        %1962 = vmatpush1.xpose.msra.mxu0 0.0
        %1963 = vmatprep.subr.mxu0 0.0
        %1964 = vmatpush1.xpose.msra.mxu0 0.0
        %1965 = vmatprep.subr.mxu0 0.0
        %1966 = vmatpush1.xpose.msra.mxu0 0.0
        %1967 = vmatprep.subr.mxu0 0.0
        %1968 = vmatpush1.xpose.msra.mxu0 0.0
        %1969 = vmatprep.subr.mxu0 0.0
        %1970 = vmatpush1.xpose.msra.mxu0 0.0
        %1971 = vmatprep.subr.mxu0 0.0
        %1972 = vmatpush1.xpose.msra.mxu0 0.0
        %1973 = vmatprep.subr.mxu0 0.0
        %1974 = vmatpush1.xpose.msra.mxu0 0.0
        %1975 = vmatprep.subr.mxu0 0.0
        %1976 = vmatpush1.xpose.msra.mxu0 0.0
        %1977 = vmatprep.subr.mxu0 0.0
        %1978 = vmatpush1.xpose.msra.mxu0 0.0
        %1979 = vmatprep.subr.mxu0 0.0
        %1980 = vmatpush1.xpose.msra.mxu0 0.0
        %1981 = vmatprep.subr.mxu0 0.0
        %1982 = vmatpush1.xpose.msra.mxu0 0.0
        %1983 = vmatprep.subr.mxu0 0.0
        %1984 = vmatpush1.xpose.msra.mxu0 0.0
        %1985 = vmatprep.subr.mxu0 0.0
        %1986 = vmatpush1.xpose.msra.mxu0 0.0
        %1987 = vmatprep.subr.mxu0 0.0
        %1988 = vmatpush1.xpose.msra.mxu0 0.0
        %1989 = vmatprep.subr.mxu0 0.0
        %1990 = vmatpush1.xpose.msra.mxu0 0.0
        %1991 = vmatprep.subr.mxu0 0.0
        %1992 = vmatpush1.xpose.msra.mxu0 0.0
        %1993 = vmatprep.subr.mxu0 0.0
        %1994 = vmatpush1.xpose.msra.mxu0 0.0
        %1995 = vmatprep.subr.mxu0 0.0
        %1996 = vmatpush1.xpose.msra.mxu0 0.0
        %1997 = vmatprep.subr.mxu0 0.0
        %1998 = vmatpush1.xpose.msra.mxu0 0.0
        %1999 = vmatprep.subr.mxu0 0.0
        %2000 = vmatpush1.xpose.msra.mxu0 0.0
        %2001 = vmatprep.subr.mxu0 0.0
        %2002 = vmatpush1.xpose.msra.mxu0 0.0
        %2003 = vmatprep.subr.mxu0 0.0
        %2004 = vmatpush1.xpose.msra.mxu0 0.0
        %2005 = vmatprep.subr.mxu0 0.0
        %2006 = vmatpush1.xpose.msra.mxu0 0.0
        %2007 = vmatprep.subr.mxu0 0.0
        %2008 = vmatpush1.xpose.msra.mxu0 0.0
        %2009 = vmatprep.subr.mxu0 0.0
        %2010 = vmatpush1.xpose.msra.mxu0 0.0
        %2011 = vmatprep.subr.mxu0 0.0
        %2012 = vmatpush1.xpose.msra.mxu0 0.0
        %2013 = vmatprep.subr.mxu0 0.0
        %2014 = vmatpush1.xpose.msra.mxu0 0.0
        %2015 = vmatprep.subr.mxu0 0.0
        %2016 = vmatpush1.xpose.msra.mxu0 0.0
        %2017 = vmatprep.subr.mxu0 0.0
        %2018 = vmatpush1.xpose.msra.mxu0 0.0
        %2019 = vmatprep.subr.mxu0 0.0
        %2020 = vmatpush1.xpose.msra.mxu0 0.0
        %2021 = vmatprep.subr.mxu0 0.0
        %2022 = vmatpush1.xpose.msra.mxu0 0.0
        %2023 = vmatprep.mubr.f32.mxu0 0.0
        %2024 = vmatmul.mubr.f32.gmra.mrb[0].mxu0 %v1957
        %v2025 = vpop.f32.mrb[0].mxu0
        %v2026 = vadd.f32 0.0, %v2025
        %v2027 = vpop.f32.mrb[0].mxu0
        %2028 = vdwg.mxu0
        %v2029 = vsel %vm572, %v1524, 0
        %2031 = vmatprep.subr.mxu0 0.0
        %2032 = vmatpush1.xpose.msra.mxu0 %v1101
        %2033 = vmatprep.subr.mxu0 0.0
        %2034 = vmatpush1.xpose.msra.mxu0 0.0
        %2035 = vmatprep.subr.mxu0 0.0
        %2036 = vmatpush1.xpose.msra.mxu0 0.0
        %2037 = vmatprep.subr.mxu0 0.0
        %2038 = vmatpush1.xpose.msra.mxu0 0.0
        %2039 = vmatprep.subr.mxu0 0.0
        %2040 = vmatpush1.xpose.msra.mxu0 0.0
        %2041 = vmatprep.subr.mxu0 0.0
        %2042 = vmatpush1.xpose.msra.mxu0 0.0
        %2043 = vmatprep.subr.mxu0 0.0
        %2044 = vmatpush1.xpose.msra.mxu0 0.0
        %2045 = vmatprep.subr.mxu0 0.0
        %2046 = vmatpush1.xpose.msra.mxu0 0.0
        %2047 = vmatprep.subr.mxu0 0.0
        %2048 = vmatpush1.xpose.msra.mxu0 0.0
        %2049 = vmatprep.subr.mxu0 0.0
        %2050 = vmatpush1.xpose.msra.mxu0 0.0
        %2051 = vmatprep.subr.mxu0 0.0
        %2052 = vmatpush1.xpose.msra.mxu0 0.0
        %2053 = vmatprep.subr.mxu0 0.0
        %2054 = vmatpush1.xpose.msra.mxu0 0.0
        %2055 = vmatprep.subr.mxu0 0.0
        %2056 = vmatpush1.xpose.msra.mxu0 0.0
        %2057 = vmatprep.subr.mxu0 0.0
        %2058 = vmatpush1.xpose.msra.mxu0 0.0
        %2059 = vmatprep.subr.mxu0 0.0
        %2060 = vmatpush1.xpose.msra.mxu0 0.0
        %2061 = vmatprep.subr.mxu0 0.0
        %2062 = vmatpush1.xpose.msra.mxu0 0.0
        %2063 = vmatprep.subr.mxu0 0.0
        %2064 = vmatpush1.xpose.msra.mxu0 0.0
        %2065 = vmatprep.subr.mxu0 0.0
        %2066 = vmatpush1.xpose.msra.mxu0 0.0
        %2067 = vmatprep.subr.mxu0 0.0
        %2068 = vmatpush1.xpose.msra.mxu0 0.0
        %2069 = vmatprep.subr.mxu0 0.0
        %2070 = vmatpush1.xpose.msra.mxu0 0.0
        %2071 = vmatprep.subr.mxu0 0.0
        %2072 = vmatpush1.xpose.msra.mxu0 0.0
        %2073 = vmatprep.subr.mxu0 0.0
        %2074 = vmatpush1.xpose.msra.mxu0 0.0
        %2075 = vmatprep.subr.mxu0 0.0
        %2076 = vmatpush1.xpose.msra.mxu0 0.0
        %2077 = vmatprep.subr.mxu0 0.0
        %2078 = vmatpush1.xpose.msra.mxu0 0.0
        %2079 = vmatprep.subr.mxu0 0.0
        %2080 = vmatpush1.xpose.msra.mxu0 0.0
        %2081 = vmatprep.subr.mxu0 0.0
        %2082 = vmatpush1.xpose.msra.mxu0 0.0
        %2083 = vmatprep.subr.mxu0 0.0
        %2084 = vmatpush1.xpose.msra.mxu0 0.0
        %2085 = vmatprep.subr.mxu0 0.0
        %2086 = vmatpush1.xpose.msra.mxu0 0.0
        %2087 = vmatprep.subr.mxu0 0.0
        %2088 = vmatpush1.xpose.msra.mxu0 0.0
        %2089 = vmatprep.subr.mxu0 0.0
        %2090 = vmatpush1.xpose.msra.mxu0 0.0
        %2091 = vmatprep.subr.mxu0 0.0
        %2092 = vmatpush1.xpose.msra.mxu0 0.0
        %2093 = vmatprep.subr.mxu0 0.0
        %2094 = vmatpush1.xpose.msra.mxu0 0.0
        %2095 = vmatprep.mubr.f32.mxu0 0.0
        %2096 = vmatmul.mubr.f32.gmra.mrb[0].mxu0 %v2029
        %v2097 = vpop.f32.mrb[0].mxu0
        %v2098 = vadd.f32 0.0, %v2097
        %v2099 = vpop.f32.mrb[0].mxu0
        %2100 = vdwg.mxu0
        %2101 = vrot.lane.b32.xlu0 %v408, 120
        %v2102 = vpop.permute.xlu0 %2101
        %v2111 = vrot.slane %v1666, 7
        %v2112 = vsel %vm1182, %v2111, %v1594
        %v2113 = vrot.slane %v1738, 6
        %v2114 = vsel %vm1185, %v2113, %v2112
        %v2115 = vrot.slane %v1810, 5
        %v2116 = vsel %vm1188, %v2115, %v2114
        %v2117 = vrot.slane %v1882, 4
        %v2118 = vsel %vm1191, %v2117, %v2116
        %v2119 = vrot.slane %v1954, 3
        %v2120 = vsel %vm1194, %v2119, %v2118
        %v2121 = vrot.slane %v2026, 2
        %v2122 = vsel %vm1197, %v2121, %v2120
        %v2123 = vrot.slane %v2098, 1
        %v2124 = vsel %vm1200, %v2123, %v2122
        %v2126 = vsel %vm437, %v2102, 0
        %2128 = vmatprep.subr.mxu0 0.0
        %2129 = vmatpush1.xpose.msra.mxu0 %v2126
        %2130 = vmatprep.subr.mxu0 0.0
        %2131 = vmatpush1.xpose.msra.mxu0 0.0
        %2132 = vmatprep.subr.mxu0 0.0
        %2133 = vmatpush1.xpose.msra.mxu0 0.0
        %2134 = vmatprep.subr.mxu0 0.0
        %2135 = vmatpush1.xpose.msra.mxu0 0.0
        %2136 = vmatprep.subr.mxu0 0.0
        %2137 = vmatpush1.xpose.msra.mxu0 0.0
        %2138 = vmatprep.subr.mxu0 0.0
        %2139 = vmatpush1.xpose.msra.mxu0 0.0
        %2140 = vmatprep.subr.mxu0 0.0
        %2141 = vmatpush1.xpose.msra.mxu0 0.0
        %2142 = vmatprep.subr.mxu0 0.0
        %2143 = vmatpush1.xpose.msra.mxu0 0.0
        %2144 = vmatprep.subr.mxu0 0.0
        %2145 = vmatpush1.xpose.msra.mxu0 0.0
        %2146 = vmatprep.subr.mxu0 0.0
        %2147 = vmatpush1.xpose.msra.mxu0 0.0
        %2148 = vmatprep.subr.mxu0 0.0
        %2149 = vmatpush1.xpose.msra.mxu0 0.0
        %2150 = vmatprep.subr.mxu0 0.0
        %2151 = vmatpush1.xpose.msra.mxu0 0.0
        %2152 = vmatprep.subr.mxu0 0.0
        %2153 = vmatpush1.xpose.msra.mxu0 0.0
        %2154 = vmatprep.subr.mxu0 0.0
        %2155 = vmatpush1.xpose.msra.mxu0 0.0
        %2156 = vmatprep.subr.mxu0 0.0
        %2157 = vmatpush1.xpose.msra.mxu0 0.0
        %2158 = vmatprep.subr.mxu0 0.0
        %2159 = vmatpush1.xpose.msra.mxu0 0.0
        %2160 = vmatprep.subr.mxu0 0.0
        %2161 = vmatpush1.xpose.msra.mxu0 0.0
        %2162 = vmatprep.subr.mxu0 0.0
        %2163 = vmatpush1.xpose.msra.mxu0 0.0
        %2164 = vmatprep.subr.mxu0 0.0
        %2165 = vmatpush1.xpose.msra.mxu0 0.0
        %2166 = vmatprep.subr.mxu0 0.0
        %2167 = vmatpush1.xpose.msra.mxu0 0.0
        %2168 = vmatprep.subr.mxu0 0.0
        %2169 = vmatpush1.xpose.msra.mxu0 0.0
        %2170 = vmatprep.subr.mxu0 0.0
        %2171 = vmatpush1.xpose.msra.mxu0 0.0
        %2172 = vmatprep.subr.mxu0 0.0
        %2173 = vmatpush1.xpose.msra.mxu0 0.0
        %2174 = vmatprep.subr.mxu0 0.0
        %2175 = vmatpush1.xpose.msra.mxu0 0.0
        %2176 = vmatprep.subr.mxu0 0.0
        %2177 = vmatpush1.xpose.msra.mxu0 0.0
        %2178 = vmatprep.subr.mxu0 0.0
        %2179 = vmatpush1.xpose.msra.mxu0 0.0
        %2180 = vmatprep.subr.mxu0 0.0
        %2181 = vmatpush1.xpose.msra.mxu0 0.0
        %2182 = vmatprep.subr.mxu0 0.0
        %2183 = vmatpush1.xpose.msra.mxu0 0.0
        %2184 = vmatprep.subr.mxu0 0.0
        %2185 = vmatpush1.xpose.msra.mxu0 0.0
        %2186 = vmatprep.subr.mxu0 0.0
        %2187 = vmatpush1.xpose.msra.mxu0 0.0
        %2188 = vmatprep.subr.mxu0 0.0
        %2189 = vmatpush1.xpose.msra.mxu0 0.0
        %2190 = vmatprep.subr.mxu0 0.0
        %2191 = vmatpush1.xpose.msra.mxu0 0.0
        %2192 = vmatprep.mubr.f32.mxu0 0.0
        %2193 = vmatmul.mubr.f32.gmra.mrb[0].mxu0 %v1388
        %v2194 = vpop.f32.mrb[0].mxu0
        %v2195 = vadd.f32 %v2124, %v2194
        %v2196 = vpop.f32.mrb[0].mxu0
        %2197 = vdwg.mxu0
        %v2198 = vadd.f32 %v2195, %v1474
        %v2199 = vsel %vm435, %v2198, -1e+15
        %s2200 = scalar_lea.vmem [#allocation2], 8
        %v2201 = vld [vmem:[%s2200] sm:$0xff]
        %v2202 = vsel %vm437, %v2199, -inf
        %2203 = vmax.xlane.f32.xlu0 %v2202
        %v2204 = vpop.xlane.xlu0 %2203
        %v2205 = vmax.f32 %v2201, %v2204
        %v2206 = vsub.f32 %v2201, %v2205
        %v2207 = vmul.f32 %v2206, 1.442695
        %v2208 = vpow.pop %v2207
        %2210 = vset.pattern.permute.xlu0 0
        %2211 = vperm.xlu0 %2210, %v2205
        %v2212 = vpop.permute.xlu0 %2211
        %v2214 = vsub.f32 %v2199, %v2212
        %v2215 = vmul.f32 %v2214, 1.442695
        %v2216 = vpow.pop %v2215
        %s2217 = scalar_lea.vmem [#allocation3], 8
        %v2218 = vld [vmem:[%s2217] sm:$0xff]
        %v2219 = vmul.f32 %v2208, %v2218
        %v2220 = vsel %vm437, %v2216, 0.0
        %2221 = vadd.xlane.f32.xlu0 %v2220
        %v2222 = vpop.xlane.xlu0 %2221
        %v2223 = vadd.f32 %v2219, %v2222
        %2224 = vst.msk [vmem:[%s2217] sm:$0xff] %vm1300, %v2223
        %s2225 = scalar_lea.vmem [#allocation4], 8
        %v2226 = vld [vmem:[%s2225] sm:$0xff]
        %2228 = vset.pattern.permute.xlu0 0
        %2229 = vperm.xlu0 %2228, %v2208
        %v2230 = vpop.permute.xlu0 %2229
        %v2232 = vmul.f32 %v2230, %v2226
        %2234 = vrot.lane.b32.xlu0 %v409, 120
        %v2235 = vpop.permute.xlu0 %2234
        %v2238 = vsel %vm437, %v2216, 0
        %2240 = vmatprep.subr.mxu0 0.0
        %2241 = vmatpush1.msra.mxu0 %v2235
        %2242 = vmatprep.subr.mxu0 0.0
        %2243 = vmatpush1.msra.mxu0 0.0
        %2244 = vmatprep.subr.mxu0 0.0
        %2245 = vmatpush1.msra.mxu0 0.0
        %2246 = vmatprep.subr.mxu0 0.0
        %2247 = vmatpush1.msra.mxu0 0.0
        %2248 = vmatprep.subr.mxu0 0.0
        %2249 = vmatpush1.msra.mxu0 0.0
        %2250 = vmatprep.subr.mxu0 0.0
        %2251 = vmatpush1.msra.mxu0 0.0
        %2252 = vmatprep.subr.mxu0 0.0
        %2253 = vmatpush1.msra.mxu0 0.0
        %2254 = vmatprep.subr.mxu0 0.0
        %2255 = vmatpush1.msra.mxu0 0.0
        %2256 = vmatprep.subr.mxu0 0.0
        %2257 = vmatpush1.msra.mxu0 0.0
        %2258 = vmatprep.subr.mxu0 0.0
        %2259 = vmatpush1.msra.mxu0 0.0
        %2260 = vmatprep.subr.mxu0 0.0
        %2261 = vmatpush1.msra.mxu0 0.0
        %2262 = vmatprep.subr.mxu0 0.0
        %2263 = vmatpush1.msra.mxu0 0.0
        %2264 = vmatprep.subr.mxu0 0.0
        %2265 = vmatpush1.msra.mxu0 0.0
        %2266 = vmatprep.subr.mxu0 0.0
        %2267 = vmatpush1.msra.mxu0 0.0
        %2268 = vmatprep.subr.mxu0 0.0
        %2269 = vmatpush1.msra.mxu0 0.0
        %2270 = vmatprep.subr.mxu0 0.0
        %2271 = vmatpush1.msra.mxu0 0.0
        %2272 = vmatprep.subr.mxu0 0.0
        %2273 = vmatpush1.msra.mxu0 0.0
        %2274 = vmatprep.subr.mxu0 0.0
        %2275 = vmatpush1.msra.mxu0 0.0
        %2276 = vmatprep.subr.mxu0 0.0
        %2277 = vmatpush1.msra.mxu0 0.0
        %2278 = vmatprep.subr.mxu0 0.0
        %2279 = vmatpush1.msra.mxu0 0.0
        %2280 = vmatprep.subr.mxu0 0.0
        %2281 = vmatpush1.msra.mxu0 0.0
        %2282 = vmatprep.subr.mxu0 0.0
        %2283 = vmatpush1.msra.mxu0 0.0
        %2284 = vmatprep.subr.mxu0 0.0
        %2285 = vmatpush1.msra.mxu0 0.0
        %2286 = vmatprep.subr.mxu0 0.0
        %2287 = vmatpush1.msra.mxu0 0.0
        %2288 = vmatprep.subr.mxu0 0.0
        %2289 = vmatpush1.msra.mxu0 0.0
        %2290 = vmatprep.subr.mxu0 0.0
        %2291 = vmatpush1.msra.mxu0 0.0
        %2292 = vmatprep.subr.mxu0 0.0
        %2293 = vmatpush1.msra.mxu0 0.0
        %2294 = vmatprep.subr.mxu0 0.0
        %2295 = vmatpush1.msra.mxu0 0.0
        %2296 = vmatprep.subr.mxu0 0.0
        %2297 = vmatpush1.msra.mxu0 0.0
        %2298 = vmatprep.subr.mxu0 0.0
        %2299 = vmatpush1.msra.mxu0 0.0
        %2300 = vmatprep.subr.mxu0 0.0
        %2301 = vmatpush1.msra.mxu0 0.0
        %2302 = vmatprep.subr.mxu0 0.0
        %2303 = vmatpush1.msra.mxu0 0.0
        %2304 = vmatprep.mubr.f32.mxu0 0.0
        %2305 = vmatmul.mubr.f32.gmra.mrb[0].mxu0 %v2238
        %v2306 = vpop.f32.mrb[0].mxu0
        %v2307 = vadd.f32 0.0, %v2306
        %v2308 = vpop.f32.mrb[0].mxu0
        %2309 = vdwg.mxu0
        %v2310 = vadd.f32 %v2232, %v2307
        %2311 = vst.msk [vmem:[%s2225] sm:$0xff] %vm437, %v2310
        %2312 = vst.msk [vmem:[%s2200] sm:$0xff] %vm1300, %v2205
        %v2313 = vld [vmem:[%s5 + $0x10] sm:$0xff]
        %2314 = vrot.lane.b32.xlu0 %v407, 112
        %v2315 = vpop.permute.xlu0 %2314
        %v2316 = vsel %vm437, %v2315, 0
        %2318 = vmatprep.subr.mxu0 0.0
        %2319 = vmatpush1.msra.mxu0 %v2313
        %2320 = vmatprep.subr.mxu0 0.0
        %2321 = vmatpush1.msra.mxu0 0.0
        %2322 = vmatprep.subr.mxu0 0.0
        %2323 = vmatpush1.msra.mxu0 0.0
        %2324 = vmatprep.subr.mxu0 0.0
        %2325 = vmatpush1.msra.mxu0 0.0
        %2326 = vmatprep.subr.mxu0 0.0
        %2327 = vmatpush1.msra.mxu0 0.0
        %2328 = vmatprep.subr.mxu0 0.0
        %2329 = vmatpush1.msra.mxu0 0.0
        %2330 = vmatprep.subr.mxu0 0.0
        %2331 = vmatpush1.msra.mxu0 0.0
        %2332 = vmatprep.subr.mxu0 0.0
        %2333 = vmatpush1.msra.mxu0 0.0
        %2334 = vmatprep.subr.mxu0 0.0
        %2335 = vmatpush1.msra.mxu0 0.0
        %2336 = vmatprep.subr.mxu0 0.0
        %2337 = vmatpush1.msra.mxu0 0.0
        %2338 = vmatprep.subr.mxu0 0.0
        %2339 = vmatpush1.msra.mxu0 0.0
        %2340 = vmatprep.subr.mxu0 0.0
        %2341 = vmatpush1.msra.mxu0 0.0
        %2342 = vmatprep.subr.mxu0 0.0
        %2343 = vmatpush1.msra.mxu0 0.0
        %2344 = vmatprep.subr.mxu0 0.0
        %2345 = vmatpush1.msra.mxu0 0.0
        %2346 = vmatprep.subr.mxu0 0.0
        %2347 = vmatpush1.msra.mxu0 0.0
        %2348 = vmatprep.subr.mxu0 0.0
        %2349 = vmatpush1.msra.mxu0 0.0
        %2350 = vmatprep.subr.mxu0 0.0
        %2351 = vmatpush1.msra.mxu0 0.0
        %2352 = vmatprep.subr.mxu0 0.0
        %2353 = vmatpush1.msra.mxu0 0.0
        %2354 = vmatprep.subr.mxu0 0.0
        %2355 = vmatpush1.msra.mxu0 0.0
        %2356 = vmatprep.subr.mxu0 0.0
        %2357 = vmatpush1.msra.mxu0 0.0
        %2358 = vmatprep.subr.mxu0 0.0
        %2359 = vmatpush1.msra.mxu0 0.0
        %2360 = vmatprep.subr.mxu0 0.0
        %2361 = vmatpush1.msra.mxu0 0.0
        %2362 = vmatprep.subr.mxu0 0.0
        %2363 = vmatpush1.msra.mxu0 0.0
        %2364 = vmatprep.subr.mxu0 0.0
        %2365 = vmatpush1.msra.mxu0 0.0
        %2366 = vmatprep.subr.mxu0 0.0
        %2367 = vmatpush1.msra.mxu0 0.0
        %2368 = vmatprep.subr.mxu0 0.0
        %2369 = vmatpush1.msra.mxu0 0.0
        %2370 = vmatprep.subr.mxu0 0.0
        %2371 = vmatpush1.msra.mxu0 0.0
        %2372 = vmatprep.subr.mxu0 0.0
        %2373 = vmatpush1.msra.mxu0 0.0
        %2374 = vmatprep.subr.mxu0 0.0
        %2375 = vmatpush1.msra.mxu0 0.0
        %2376 = vmatprep.subr.mxu0 0.0
        %2377 = vmatpush1.msra.mxu0 0.0
        %2378 = vmatprep.subr.mxu0 0.0
        %2379 = vmatpush1.msra.mxu0 0.0
        %2380 = vmatprep.subr.mxu0 0.0
        %2381 = vmatpush1.msra.mxu0 0.0
        %2382 = vmatprep.mubr.f32.mxu0 0.0
        %2383 = vmatmul.mubr.f32.gmra.mrb[0].mxu0 %v2316
        %v2384 = vpop.f32.mrb[0].mxu0
        %v2385 = vadd.f32 0.0, %v2384
        %v2386 = vpop.f32.mrb[0].mxu0
        %2387 = vdwg.mxu0
        %v2388 = vld [vmem:[%s6] sm:$0x1]
        %v2390 = vlaneseq
        %v2391 = vshrl.u32 %v2390, 7
        %v2392 = vsub.s32 0, %v2391
        %v2393 = vrot.slane %v2388, %v2392
        %v2395 = vmul.f32 %v407, %v2393
        %2397 = vrot.lane.b32.xlu0 %v2395, 112
        %v2398 = vpop.permute.xlu0 %2397
        %v2400 = vsel %vm437, %v2398, 0.0
        %2401 = vadd.xlane.f32.xlu0 %v2400
        %v2402 = vpop.xlane.xlu0 %2401
        %v2404 = vcombine.high %v2385, %v2385
        %v2406 = vunpack.c.l.s4 1966171168
        %v2407 = vunpack.c.0.s8 %v2406
        %v2408 = vlaneseq
        %v2409 = vshrl.u32 %v2408, 7
        %v2410 = vsub.s32 %v2407, %v2409
        %v2411 = vrot.slane %v2385, %v2410
        %v2413 = vunpack.c.l.s4 1966171168
        %v2414 = vunpack.c.0.s8 %v2413
        %v2415 = vlaneseq
        %v2416 = vshrl.u32 %v2415, 7
        %v2417 = vsub.s32 %v2414, %v2416
        %v2418 = vrot.slane %v2404, %v2417
        %v2419 = vcombine.high %v2411, %v2411
        %v2420 = vcombine.high %v2418, %v2418
        %v2422 = vunpack.c.l.s4 1966171168
        %v2423 = vunpack.c.0.s8 %v2422
        %v2424 = vlaneseq
        %v2425 = vshrl.u32 %v2424, 7
        %v2426 = vsub.s32 %v2423, %v2425
        %v2427 = vrot.slane %v2411, %v2426
        %v2429 = vunpack.c.l.s4 1966171168
        %v2430 = vunpack.c.0.s8 %v2429
        %v2431 = vlaneseq
        %v2432 = vshrl.u32 %v2431, 7
        %v2433 = vsub.s32 %v2430, %v2432
        %v2434 = vrot.slane %v2418, %v2433
        %v2436 = vunpack.c.l.s4 1966171168
        %v2437 = vunpack.c.0.s8 %v2436
        %v2438 = vlaneseq
        %v2439 = vshrl.u32 %v2438, 7
        %v2440 = vsub.s32 %v2437, %v2439
        %v2441 = vrot.slane %v2419, %v2440
        %v2443 = vunpack.c.l.s4 1966171168
        %v2444 = vunpack.c.0.s8 %v2443
        %v2445 = vlaneseq
        %v2446 = vshrl.u32 %v2445, 7
        %v2447 = vsub.s32 %v2444, %v2446
        %v2448 = vrot.slane %v2420, %v2447
        %v2449 = vcombine.high %v2427, %v2427
        %v2450 = vcombine.high %v2434, %v2434
        %v2451 = vcombine.high %v2441, %v2441
        %v2452 = vcombine.high %v2448, %v2448
        %v2453 = vsel %vm572, %v2427, 0
        %2455 = vmatprep.subr.mxu0 0.0
        %2456 = vmatpush1.xpose.msra.mxu0 %v576
        %2457 = vmatprep.subr.mxu0 0.0
        %2458 = vmatpush1.xpose.msra.mxu0 0.0
        %2459 = vmatprep.subr.mxu0 0.0
        %2460 = vmatpush1.xpose.msra.mxu0 0.0
        %2461 = vmatprep.subr.mxu0 0.0
        %2462 = vmatpush1.xpose.msra.mxu0 0.0
        %2463 = vmatprep.subr.mxu0 0.0
        %2464 = vmatpush1.xpose.msra.mxu0 0.0
        %2465 = vmatprep.subr.mxu0 0.0
        %2466 = vmatpush1.xpose.msra.mxu0 0.0
        %2467 = vmatprep.subr.mxu0 0.0
        %2468 = vmatpush1.xpose.msra.mxu0 0.0
        %2469 = vmatprep.subr.mxu0 0.0
        %2470 = vmatpush1.xpose.msra.mxu0 0.0
        %2471 = vmatprep.subr.mxu0 0.0
        %2472 = vmatpush1.xpose.msra.mxu0 0.0
        %2473 = vmatprep.subr.mxu0 0.0
        %2474 = vmatpush1.xpose.msra.mxu0 0.0
        %2475 = vmatprep.subr.mxu0 0.0
        %2476 = vmatpush1.xpose.msra.mxu0 0.0
        %2477 = vmatprep.subr.mxu0 0.0
        %2478 = vmatpush1.xpose.msra.mxu0 0.0
        %2479 = vmatprep.subr.mxu0 0.0
        %2480 = vmatpush1.xpose.msra.mxu0 0.0
        %2481 = vmatprep.subr.mxu0 0.0
        %2482 = vmatpush1.xpose.msra.mxu0 0.0
        %2483 = vmatprep.subr.mxu0 0.0
        %2484 = vmatpush1.xpose.msra.mxu0 0.0
        %2485 = vmatprep.subr.mxu0 0.0
        %2486 = vmatpush1.xpose.msra.mxu0 0.0
        %2487 = vmatprep.subr.mxu0 0.0
        %2488 = vmatpush1.xpose.msra.mxu0 0.0
        %2489 = vmatprep.subr.mxu0 0.0
        %2490 = vmatpush1.xpose.msra.mxu0 0.0
        %2491 = vmatprep.subr.mxu0 0.0
        %2492 = vmatpush1.xpose.msra.mxu0 0.0
        %2493 = vmatprep.subr.mxu0 0.0
        %2494 = vmatpush1.xpose.msra.mxu0 0.0
        %2495 = vmatprep.subr.mxu0 0.0
        %2496 = vmatpush1.xpose.msra.mxu0 0.0
        %2497 = vmatprep.subr.mxu0 0.0
        %2498 = vmatpush1.xpose.msra.mxu0 0.0
        %2499 = vmatprep.subr.mxu0 0.0
        %2500 = vmatpush1.xpose.msra.mxu0 0.0
        %2501 = vmatprep.subr.mxu0 0.0
        %2502 = vmatpush1.xpose.msra.mxu0 0.0
        %2503 = vmatprep.subr.mxu0 0.0
        %2504 = vmatpush1.xpose.msra.mxu0 0.0
        %2505 = vmatprep.subr.mxu0 0.0
        %2506 = vmatpush1.xpose.msra.mxu0 0.0
        %2507 = vmatprep.subr.mxu0 0.0
        %2508 = vmatpush1.xpose.msra.mxu0 0.0
        %2509 = vmatprep.subr.mxu0 0.0
        %2510 = vmatpush1.xpose.msra.mxu0 0.0
        %2511 = vmatprep.subr.mxu0 0.0
        %2512 = vmatpush1.xpose.msra.mxu0 0.0
        %2513 = vmatprep.subr.mxu0 0.0
        %2514 = vmatpush1.xpose.msra.mxu0 0.0
        %2515 = vmatprep.subr.mxu0 0.0
        %2516 = vmatpush1.xpose.msra.mxu0 0.0
        %2517 = vmatprep.subr.mxu0 0.0
        %2518 = vmatpush1.xpose.msra.mxu0 0.0
        %2519 = vmatprep.mubr.f32.mxu0 0.0
        %2520 = vmatmul.mubr.f32.gmra.mrb[0].mxu0 %v2453
        %v2521 = vpop.f32.mrb[0].mxu0
        %v2522 = vadd.f32 0.0, %v2521
        %v2523 = vpop.f32.mrb[0].mxu0
        %2524 = vdwg.mxu0
        %v2525 = vsel %vm572, %v2441, 0
        %2527 = vmatprep.subr.mxu0 0.0
        %2528 = vmatpush1.xpose.msra.mxu0 %v651
        %2529 = vmatprep.subr.mxu0 0.0
        %2530 = vmatpush1.xpose.msra.mxu0 0.0
        %2531 = vmatprep.subr.mxu0 0.0
        %2532 = vmatpush1.xpose.msra.mxu0 0.0
        %2533 = vmatprep.subr.mxu0 0.0
        %2534 = vmatpush1.xpose.msra.mxu0 0.0
        %2535 = vmatprep.subr.mxu0 0.0
        %2536 = vmatpush1.xpose.msra.mxu0 0.0
        %2537 = vmatprep.subr.mxu0 0.0
        %2538 = vmatpush1.xpose.msra.mxu0 0.0
        %2539 = vmatprep.subr.mxu0 0.0
        %2540 = vmatpush1.xpose.msra.mxu0 0.0
        %2541 = vmatprep.subr.mxu0 0.0
        %2542 = vmatpush1.xpose.msra.mxu0 0.0
        %2543 = vmatprep.subr.mxu0 0.0
        %2544 = vmatpush1.xpose.msra.mxu0 0.0
        %2545 = vmatprep.subr.mxu0 0.0
        %2546 = vmatpush1.xpose.msra.mxu0 0.0
        %2547 = vmatprep.subr.mxu0 0.0
        %2548 = vmatpush1.xpose.msra.mxu0 0.0
        %2549 = vmatprep.subr.mxu0 0.0
        %2550 = vmatpush1.xpose.msra.mxu0 0.0
        %2551 = vmatprep.subr.mxu0 0.0
        %2552 = vmatpush1.xpose.msra.mxu0 0.0
        %2553 = vmatprep.subr.mxu0 0.0
        %2554 = vmatpush1.xpose.msra.mxu0 0.0
        %2555 = vmatprep.subr.mxu0 0.0
        %2556 = vmatpush1.xpose.msra.mxu0 0.0
        %2557 = vmatprep.subr.mxu0 0.0
        %2558 = vmatpush1.xpose.msra.mxu0 0.0
        %2559 = vmatprep.subr.mxu0 0.0
        %2560 = vmatpush1.xpose.msra.mxu0 0.0
        %2561 = vmatprep.subr.mxu0 0.0
        %2562 = vmatpush1.xpose.msra.mxu0 0.0
        %2563 = vmatprep.subr.mxu0 0.0
        %2564 = vmatpush1.xpose.msra.mxu0 0.0
        %2565 = vmatprep.subr.mxu0 0.0
        %2566 = vmatpush1.xpose.msra.mxu0 0.0
        %2567 = vmatprep.subr.mxu0 0.0
        %2568 = vmatpush1.xpose.msra.mxu0 0.0
        %2569 = vmatprep.subr.mxu0 0.0
        %2570 = vmatpush1.xpose.msra.mxu0 0.0
        %2571 = vmatprep.subr.mxu0 0.0
        %2572 = vmatpush1.xpose.msra.mxu0 0.0
        %2573 = vmatprep.subr.mxu0 0.0
        %2574 = vmatpush1.xpose.msra.mxu0 0.0
        %2575 = vmatprep.subr.mxu0 0.0
        %2576 = vmatpush1.xpose.msra.mxu0 0.0
        %2577 = vmatprep.subr.mxu0 0.0
        %2578 = vmatpush1.xpose.msra.mxu0 0.0
        %2579 = vmatprep.subr.mxu0 0.0
        %2580 = vmatpush1.xpose.msra.mxu0 0.0
        %2581 = vmatprep.subr.mxu0 0.0
        %2582 = vmatpush1.xpose.msra.mxu0 0.0
        %2583 = vmatprep.subr.mxu0 0.0
        %2584 = vmatpush1.xpose.msra.mxu0 0.0
        %2585 = vmatprep.subr.mxu0 0.0
        %2586 = vmatpush1.xpose.msra.mxu0 0.0
        %2587 = vmatprep.subr.mxu0 0.0
        %2588 = vmatpush1.xpose.msra.mxu0 0.0
        %2589 = vmatprep.subr.mxu0 0.0
        %2590 = vmatpush1.xpose.msra.mxu0 0.0
        %2591 = vmatprep.mubr.f32.mxu0 0.0
        %2592 = vmatmul.mubr.f32.gmra.mrb[0].mxu0 %v2525
        %v2593 = vpop.f32.mrb[0].mxu0
        %v2594 = vadd.f32 0.0, %v2593
        %v2595 = vpop.f32.mrb[0].mxu0
        %2596 = vdwg.mxu0
        %v2597 = vsel %vm572, %v2449, 0
        %2599 = vmatprep.subr.mxu0 0.0
        %2600 = vmatpush1.xpose.msra.mxu0 %v726
        %2601 = vmatprep.subr.mxu0 0.0
        %2602 = vmatpush1.xpose.msra.mxu0 0.0
        %2603 = vmatprep.subr.mxu0 0.0
        %2604 = vmatpush1.xpose.msra.mxu0 0.0
        %2605 = vmatprep.subr.mxu0 0.0
        %2606 = vmatpush1.xpose.msra.mxu0 0.0
        %2607 = vmatprep.subr.mxu0 0.0
        %2608 = vmatpush1.xpose.msra.mxu0 0.0
        %2609 = vmatprep.subr.mxu0 0.0
        %2610 = vmatpush1.xpose.msra.mxu0 0.0
        %2611 = vmatprep.subr.mxu0 0.0
        %2612 = vmatpush1.xpose.msra.mxu0 0.0
        %2613 = vmatprep.subr.mxu0 0.0
        %2614 = vmatpush1.xpose.msra.mxu0 0.0
        %2615 = vmatprep.subr.mxu0 0.0
        %2616 = vmatpush1.xpose.msra.mxu0 0.0
        %2617 = vmatprep.subr.mxu0 0.0
        %2618 = vmatpush1.xpose.msra.mxu0 0.0
        %2619 = vmatprep.subr.mxu0 0.0
        %2620 = vmatpush1.xpose.msra.mxu0 0.0
        %2621 = vmatprep.subr.mxu0 0.0
        %2622 = vmatpush1.xpose.msra.mxu0 0.0
        %2623 = vmatprep.subr.mxu0 0.0
        %2624 = vmatpush1.xpose.msra.mxu0 0.0
        %2625 = vmatprep.subr.mxu0 0.0
        %2626 = vmatpush1.xpose.msra.mxu0 0.0
        %2627 = vmatprep.subr.mxu0 0.0
        %2628 = vmatpush1.xpose.msra.mxu0 0.0
        %2629 = vmatprep.subr.mxu0 0.0
        %2630 = vmatpush1.xpose.msra.mxu0 0.0
        %2631 = vmatprep.subr.mxu0 0.0
        %2632 = vmatpush1.xpose.msra.mxu0 0.0
        %2633 = vmatprep.subr.mxu0 0.0
        %2634 = vmatpush1.xpose.msra.mxu0 0.0
        %2635 = vmatprep.subr.mxu0 0.0
        %2636 = vmatpush1.xpose.msra.mxu0 0.0
        %2637 = vmatprep.subr.mxu0 0.0
        %2638 = vmatpush1.xpose.msra.mxu0 0.0
        %2639 = vmatprep.subr.mxu0 0.0
        %2640 = vmatpush1.xpose.msra.mxu0 0.0
        %2641 = vmatprep.subr.mxu0 0.0
        %2642 = vmatpush1.xpose.msra.mxu0 0.0
        %2643 = vmatprep.subr.mxu0 0.0
        %2644 = vmatpush1.xpose.msra.mxu0 0.0
        %2645 = vmatprep.subr.mxu0 0.0
        %2646 = vmatpush1.xpose.msra.mxu0 0.0
        %2647 = vmatprep.subr.mxu0 0.0
        %2648 = vmatpush1.xpose.msra.mxu0 0.0
        %2649 = vmatprep.subr.mxu0 0.0
        %2650 = vmatpush1.xpose.msra.mxu0 0.0
        %2651 = vmatprep.subr.mxu0 0.0
        %2652 = vmatpush1.xpose.msra.mxu0 0.0
        %2653 = vmatprep.subr.mxu0 0.0
        %2654 = vmatpush1.xpose.msra.mxu0 0.0
        %2655 = vmatprep.subr.mxu0 0.0
        %2656 = vmatpush1.xpose.msra.mxu0 0.0
        %2657 = vmatprep.subr.mxu0 0.0
        %2658 = vmatpush1.xpose.msra.mxu0 0.0
        %2659 = vmatprep.subr.mxu0 0.0
        %2660 = vmatpush1.xpose.msra.mxu0 0.0
        %2661 = vmatprep.subr.mxu0 0.0
        %2662 = vmatpush1.xpose.msra.mxu0 0.0
        %2663 = vmatprep.mubr.f32.mxu0 0.0
        %2664 = vmatmul.mubr.f32.gmra.mrb[0].mxu0 %v2597
        %v2665 = vpop.f32.mrb[0].mxu0
        %v2666 = vadd.f32 0.0, %v2665
        %v2667 = vpop.f32.mrb[0].mxu0
        %2668 = vdwg.mxu0
        %v2669 = vsel %vm572, %v2451, 0
        %2671 = vmatprep.subr.mxu0 0.0
        %2672 = vmatpush1.xpose.msra.mxu0 %v801
        %2673 = vmatprep.subr.mxu0 0.0
        %2674 = vmatpush1.xpose.msra.mxu0 0.0
        %2675 = vmatprep.subr.mxu0 0.0
        %2676 = vmatpush1.xpose.msra.mxu0 0.0
        %2677 = vmatprep.subr.mxu0 0.0
        %2678 = vmatpush1.xpose.msra.mxu0 0.0
        %2679 = vmatprep.subr.mxu0 0.0
        %2680 = vmatpush1.xpose.msra.mxu0 0.0
        %2681 = vmatprep.subr.mxu0 0.0
        %2682 = vmatpush1.xpose.msra.mxu0 0.0
        %2683 = vmatprep.subr.mxu0 0.0
        %2684 = vmatpush1.xpose.msra.mxu0 0.0
        %2685 = vmatprep.subr.mxu0 0.0
        %2686 = vmatpush1.xpose.msra.mxu0 0.0
        %2687 = vmatprep.subr.mxu0 0.0
        %2688 = vmatpush1.xpose.msra.mxu0 0.0
        %2689 = vmatprep.subr.mxu0 0.0
        %2690 = vmatpush1.xpose.msra.mxu0 0.0
        %2691 = vmatprep.subr.mxu0 0.0
        %2692 = vmatpush1.xpose.msra.mxu0 0.0
        %2693 = vmatprep.subr.mxu0 0.0
        %2694 = vmatpush1.xpose.msra.mxu0 0.0
        %2695 = vmatprep.subr.mxu0 0.0
        %2696 = vmatpush1.xpose.msra.mxu0 0.0
        %2697 = vmatprep.subr.mxu0 0.0
        %2698 = vmatpush1.xpose.msra.mxu0 0.0
        %2699 = vmatprep.subr.mxu0 0.0
        %2700 = vmatpush1.xpose.msra.mxu0 0.0
        %2701 = vmatprep.subr.mxu0 0.0
        %2702 = vmatpush1.xpose.msra.mxu0 0.0
        %2703 = vmatprep.subr.mxu0 0.0
        %2704 = vmatpush1.xpose.msra.mxu0 0.0
        %2705 = vmatprep.subr.mxu0 0.0
        %2706 = vmatpush1.xpose.msra.mxu0 0.0
        %2707 = vmatprep.subr.mxu0 0.0
        %2708 = vmatpush1.xpose.msra.mxu0 0.0
        %2709 = vmatprep.subr.mxu0 0.0
        %2710 = vmatpush1.xpose.msra.mxu0 0.0
        %2711 = vmatprep.subr.mxu0 0.0
        %2712 = vmatpush1.xpose.msra.mxu0 0.0
        %2713 = vmatprep.subr.mxu0 0.0
        %2714 = vmatpush1.xpose.msra.mxu0 0.0
        %2715 = vmatprep.subr.mxu0 0.0
        %2716 = vmatpush1.xpose.msra.mxu0 0.0
        %2717 = vmatprep.subr.mxu0 0.0
        %2718 = vmatpush1.xpose.msra.mxu0 0.0
        %2719 = vmatprep.subr.mxu0 0.0
        %2720 = vmatpush1.xpose.msra.mxu0 0.0
        %2721 = vmatprep.subr.mxu0 0.0
        %2722 = vmatpush1.xpose.msra.mxu0 0.0
        %2723 = vmatprep.subr.mxu0 0.0
        %2724 = vmatpush1.xpose.msra.mxu0 0.0
        %2725 = vmatprep.subr.mxu0 0.0
        %2726 = vmatpush1.xpose.msra.mxu0 0.0
        %2727 = vmatprep.subr.mxu0 0.0
        %2728 = vmatpush1.xpose.msra.mxu0 0.0
        %2729 = vmatprep.subr.mxu0 0.0
        %2730 = vmatpush1.xpose.msra.mxu0 0.0
        %2731 = vmatprep.subr.mxu0 0.0
        %2732 = vmatpush1.xpose.msra.mxu0 0.0
        %2733 = vmatprep.subr.mxu0 0.0
        %2734 = vmatpush1.xpose.msra.mxu0 0.0
        %2735 = vmatprep.mubr.f32.mxu0 0.0
        %2736 = vmatmul.mubr.f32.gmra.mrb[0].mxu0 %v2669
        %v2737 = vpop.f32.mrb[0].mxu0
        %v2738 = vadd.f32 0.0, %v2737
        %v2739 = vpop.f32.mrb[0].mxu0
        %2740 = vdwg.mxu0
        %v2741 = vsel %vm572, %v2434, 0
        %2743 = vmatprep.subr.mxu0 0.0
        %2744 = vmatpush1.xpose.msra.mxu0 %v876
        %2745 = vmatprep.subr.mxu0 0.0
        %2746 = vmatpush1.xpose.msra.mxu0 0.0
        %2747 = vmatprep.subr.mxu0 0.0
        %2748 = vmatpush1.xpose.msra.mxu0 0.0
        %2749 = vmatprep.subr.mxu0 0.0
        %2750 = vmatpush1.xpose.msra.mxu0 0.0
        %2751 = vmatprep.subr.mxu0 0.0
        %2752 = vmatpush1.xpose.msra.mxu0 0.0
        %2753 = vmatprep.subr.mxu0 0.0
        %2754 = vmatpush1.xpose.msra.mxu0 0.0
        %2755 = vmatprep.subr.mxu0 0.0
        %2756 = vmatpush1.xpose.msra.mxu0 0.0
        %2757 = vmatprep.subr.mxu0 0.0
        %2758 = vmatpush1.xpose.msra.mxu0 0.0
        %2759 = vmatprep.subr.mxu0 0.0
        %2760 = vmatpush1.xpose.msra.mxu0 0.0
        %2761 = vmatprep.subr.mxu0 0.0
        %2762 = vmatpush1.xpose.msra.mxu0 0.0
        %2763 = vmatprep.subr.mxu0 0.0
        %2764 = vmatpush1.xpose.msra.mxu0 0.0
        %2765 = vmatprep.subr.mxu0 0.0
        %2766 = vmatpush1.xpose.msra.mxu0 0.0
        %2767 = vmatprep.subr.mxu0 0.0
        %2768 = vmatpush1.xpose.msra.mxu0 0.0
        %2769 = vmatprep.subr.mxu0 0.0
        %2770 = vmatpush1.xpose.msra.mxu0 0.0
        %2771 = vmatprep.subr.mxu0 0.0
        %2772 = vmatpush1.xpose.msra.mxu0 0.0
        %2773 = vmatprep.subr.mxu0 0.0
        %2774 = vmatpush1.xpose.msra.mxu0 0.0
        %2775 = vmatprep.subr.mxu0 0.0
        %2776 = vmatpush1.xpose.msra.mxu0 0.0
        %2777 = vmatprep.subr.mxu0 0.0
        %2778 = vmatpush1.xpose.msra.mxu0 0.0
        %2779 = vmatprep.subr.mxu0 0.0
        %2780 = vmatpush1.xpose.msra.mxu0 0.0
        %2781 = vmatprep.subr.mxu0 0.0
        %2782 = vmatpush1.xpose.msra.mxu0 0.0
        %2783 = vmatprep.subr.mxu0 0.0
        %2784 = vmatpush1.xpose.msra.mxu0 0.0
        %2785 = vmatprep.subr.mxu0 0.0
        %2786 = vmatpush1.xpose.msra.mxu0 0.0
        %2787 = vmatprep.subr.mxu0 0.0
        %2788 = vmatpush1.xpose.msra.mxu0 0.0
        %2789 = vmatprep.subr.mxu0 0.0
        %2790 = vmatpush1.xpose.msra.mxu0 0.0
        %2791 = vmatprep.subr.mxu0 0.0
        %2792 = vmatpush1.xpose.msra.mxu0 0.0
        %2793 = vmatprep.subr.mxu0 0.0
        %2794 = vmatpush1.xpose.msra.mxu0 0.0
        %2795 = vmatprep.subr.mxu0 0.0
        %2796 = vmatpush1.xpose.msra.mxu0 0.0
        %2797 = vmatprep.subr.mxu0 0.0
        %2798 = vmatpush1.xpose.msra.mxu0 0.0
        %2799 = vmatprep.subr.mxu0 0.0
        %2800 = vmatpush1.xpose.msra.mxu0 0.0
        %2801 = vmatprep.subr.mxu0 0.0
        %2802 = vmatpush1.xpose.msra.mxu0 0.0
        %2803 = vmatprep.subr.mxu0 0.0
        %2804 = vmatpush1.xpose.msra.mxu0 0.0
        %2805 = vmatprep.subr.mxu0 0.0
        %2806 = vmatpush1.xpose.msra.mxu0 0.0
        %2807 = vmatprep.mubr.f32.mxu0 0.0
        %2808 = vmatmul.mubr.f32.gmra.mrb[0].mxu0 %v2741
        %v2809 = vpop.f32.mrb[0].mxu0
        %v2810 = vadd.f32 0.0, %v2809
        %v2811 = vpop.f32.mrb[0].mxu0
        %2812 = vdwg.mxu0
        %v2813 = vsel %vm572, %v2448, 0
        %2815 = vmatprep.subr.mxu0 0.0
        %2816 = vmatpush1.xpose.msra.mxu0 %v951
        %2817 = vmatprep.subr.mxu0 0.0
        %2818 = vmatpush1.xpose.msra.mxu0 0.0
        %2819 = vmatprep.subr.mxu0 0.0
        %2820 = vmatpush1.xpose.msra.mxu0 0.0
        %2821 = vmatprep.subr.mxu0 0.0
        %2822 = vmatpush1.xpose.msra.mxu0 0.0
        %2823 = vmatprep.subr.mxu0 0.0
        %2824 = vmatpush1.xpose.msra.mxu0 0.0
        %2825 = vmatprep.subr.mxu0 0.0
        %2826 = vmatpush1.xpose.msra.mxu0 0.0
        %2827 = vmatprep.subr.mxu0 0.0
        %2828 = vmatpush1.xpose.msra.mxu0 0.0
        %2829 = vmatprep.subr.mxu0 0.0
        %2830 = vmatpush1.xpose.msra.mxu0 0.0
        %2831 = vmatprep.subr.mxu0 0.0
        %2832 = vmatpush1.xpose.msra.mxu0 0.0
        %2833 = vmatprep.subr.mxu0 0.0
        %2834 = vmatpush1.xpose.msra.mxu0 0.0
        %2835 = vmatprep.subr.mxu0 0.0
        %2836 = vmatpush1.xpose.msra.mxu0 0.0
        %2837 = vmatprep.subr.mxu0 0.0
        %2838 = vmatpush1.xpose.msra.mxu0 0.0
        %2839 = vmatprep.subr.mxu0 0.0
        %2840 = vmatpush1.xpose.msra.mxu0 0.0
        %2841 = vmatprep.subr.mxu0 0.0
        %2842 = vmatpush1.xpose.msra.mxu0 0.0
        %2843 = vmatprep.subr.mxu0 0.0
        %2844 = vmatpush1.xpose.msra.mxu0 0.0
        %2845 = vmatprep.subr.mxu0 0.0
        %2846 = vmatpush1.xpose.msra.mxu0 0.0
        %2847 = vmatprep.subr.mxu0 0.0
        %2848 = vmatpush1.xpose.msra.mxu0 0.0
        %2849 = vmatprep.subr.mxu0 0.0
        %2850 = vmatpush1.xpose.msra.mxu0 0.0
        %2851 = vmatprep.subr.mxu0 0.0
        %2852 = vmatpush1.xpose.msra.mxu0 0.0
        %2853 = vmatprep.subr.mxu0 0.0
        %2854 = vmatpush1.xpose.msra.mxu0 0.0
        %2855 = vmatprep.subr.mxu0 0.0
        %2856 = vmatpush1.xpose.msra.mxu0 0.0
        %2857 = vmatprep.subr.mxu0 0.0
        %2858 = vmatpush1.xpose.msra.mxu0 0.0
        %2859 = vmatprep.subr.mxu0 0.0
        %2860 = vmatpush1.xpose.msra.mxu0 0.0
        %2861 = vmatprep.subr.mxu0 0.0
        %2862 = vmatpush1.xpose.msra.mxu0 0.0
        %2863 = vmatprep.subr.mxu0 0.0
        %2864 = vmatpush1.xpose.msra.mxu0 0.0
        %2865 = vmatprep.subr.mxu0 0.0
        %2866 = vmatpush1.xpose.msra.mxu0 0.0
        %2867 = vmatprep.subr.mxu0 0.0
        %2868 = vmatpush1.xpose.msra.mxu0 0.0
        %2869 = vmatprep.subr.mxu0 0.0
        %2870 = vmatpush1.xpose.msra.mxu0 0.0
        %2871 = vmatprep.subr.mxu0 0.0
        %2872 = vmatpush1.xpose.msra.mxu0 0.0
        %2873 = vmatprep.subr.mxu0 0.0
        %2874 = vmatpush1.xpose.msra.mxu0 0.0
        %2875 = vmatprep.subr.mxu0 0.0
        %2876 = vmatpush1.xpose.msra.mxu0 0.0
        %2877 = vmatprep.subr.mxu0 0.0
        %2878 = vmatpush1.xpose.msra.mxu0 0.0
        %2879 = vmatprep.mubr.f32.mxu0 0.0
        %2880 = vmatmul.mubr.f32.gmra.mrb[0].mxu0 %v2813
        %v2881 = vpop.f32.mrb[0].mxu0
        %v2882 = vadd.f32 0.0, %v2881
        %v2883 = vpop.f32.mrb[0].mxu0
        %2884 = vdwg.mxu0
        %v2885 = vsel %vm572, %v2450, 0
        %2887 = vmatprep.subr.mxu0 0.0
        %2888 = vmatpush1.xpose.msra.mxu0 %v1026
        %2889 = vmatprep.subr.mxu0 0.0
        %2890 = vmatpush1.xpose.msra.mxu0 0.0
        %2891 = vmatprep.subr.mxu0 0.0
        %2892 = vmatpush1.xpose.msra.mxu0 0.0
        %2893 = vmatprep.subr.mxu0 0.0
        %2894 = vmatpush1.xpose.msra.mxu0 0.0
        %2895 = vmatprep.subr.mxu0 0.0
        %2896 = vmatpush1.xpose.msra.mxu0 0.0
        %2897 = vmatprep.subr.mxu0 0.0
        %2898 = vmatpush1.xpose.msra.mxu0 0.0
        %2899 = vmatprep.subr.mxu0 0.0
        %2900 = vmatpush1.xpose.msra.mxu0 0.0
        %2901 = vmatprep.subr.mxu0 0.0
        %2902 = vmatpush1.xpose.msra.mxu0 0.0
        %2903 = vmatprep.subr.mxu0 0.0
        %2904 = vmatpush1.xpose.msra.mxu0 0.0
        %2905 = vmatprep.subr.mxu0 0.0
        %2906 = vmatpush1.xpose.msra.mxu0 0.0
        %2907 = vmatprep.subr.mxu0 0.0
        %2908 = vmatpush1.xpose.msra.mxu0 0.0
        %2909 = vmatprep.subr.mxu0 0.0
        %2910 = vmatpush1.xpose.msra.mxu0 0.0
        %2911 = vmatprep.subr.mxu0 0.0
        %2912 = vmatpush1.xpose.msra.mxu0 0.0
        %2913 = vmatprep.subr.mxu0 0.0
        %2914 = vmatpush1.xpose.msra.mxu0 0.0
        %2915 = vmatprep.subr.mxu0 0.0
        %2916 = vmatpush1.xpose.msra.mxu0 0.0
        %2917 = vmatprep.subr.mxu0 0.0
        %2918 = vmatpush1.xpose.msra.mxu0 0.0
        %2919 = vmatprep.subr.mxu0 0.0
        %2920 = vmatpush1.xpose.msra.mxu0 0.0
        %2921 = vmatprep.subr.mxu0 0.0
        %2922 = vmatpush1.xpose.msra.mxu0 0.0
        %2923 = vmatprep.subr.mxu0 0.0
        %2924 = vmatpush1.xpose.msra.mxu0 0.0
        %2925 = vmatprep.subr.mxu0 0.0
        %2926 = vmatpush1.xpose.msra.mxu0 0.0
        %2927 = vmatprep.subr.mxu0 0.0
        %2928 = vmatpush1.xpose.msra.mxu0 0.0
        %2929 = vmatprep.subr.mxu0 0.0
        %2930 = vmatpush1.xpose.msra.mxu0 0.0
        %2931 = vmatprep.subr.mxu0 0.0
        %2932 = vmatpush1.xpose.msra.mxu0 0.0
        %2933 = vmatprep.subr.mxu0 0.0
        %2934 = vmatpush1.xpose.msra.mxu0 0.0
        %2935 = vmatprep.subr.mxu0 0.0
        %2936 = vmatpush1.xpose.msra.mxu0 0.0
        %2937 = vmatprep.subr.mxu0 0.0
        %2938 = vmatpush1.xpose.msra.mxu0 0.0
        %2939 = vmatprep.subr.mxu0 0.0
        %2940 = vmatpush1.xpose.msra.mxu0 0.0
        %2941 = vmatprep.subr.mxu0 0.0
        %2942 = vmatpush1.xpose.msra.mxu0 0.0
        %2943 = vmatprep.subr.mxu0 0.0
        %2944 = vmatpush1.xpose.msra.mxu0 0.0
        %2945 = vmatprep.subr.mxu0 0.0
        %2946 = vmatpush1.xpose.msra.mxu0 0.0
        %2947 = vmatprep.subr.mxu0 0.0
        %2948 = vmatpush1.xpose.msra.mxu0 0.0
        %2949 = vmatprep.subr.mxu0 0.0
        %2950 = vmatpush1.xpose.msra.mxu0 0.0
        %2951 = vmatprep.mubr.f32.mxu0 0.0
        %2952 = vmatmul.mubr.f32.gmra.mrb[0].mxu0 %v2885
        %v2953 = vpop.f32.mrb[0].mxu0
        %v2954 = vadd.f32 0.0, %v2953
        %v2955 = vpop.f32.mrb[0].mxu0
        %2956 = vdwg.mxu0
        %v2957 = vsel %vm572, %v2452, 0
        %2959 = vmatprep.subr.mxu0 0.0
        %2960 = vmatpush1.xpose.msra.mxu0 %v1101
        %2961 = vmatprep.subr.mxu0 0.0
        %2962 = vmatpush1.xpose.msra.mxu0 0.0
        %2963 = vmatprep.subr.mxu0 0.0
        %2964 = vmatpush1.xpose.msra.mxu0 0.0
        %2965 = vmatprep.subr.mxu0 0.0
        %2966 = vmatpush1.xpose.msra.mxu0 0.0
        %2967 = vmatprep.subr.mxu0 0.0
        %2968 = vmatpush1.xpose.msra.mxu0 0.0
        %2969 = vmatprep.subr.mxu0 0.0
        %2970 = vmatpush1.xpose.msra.mxu0 0.0
        %2971 = vmatprep.subr.mxu0 0.0
        %2972 = vmatpush1.xpose.msra.mxu0 0.0
        %2973 = vmatprep.subr.mxu0 0.0
        %2974 = vmatpush1.xpose.msra.mxu0 0.0
        %2975 = vmatprep.subr.mxu0 0.0
        %2976 = vmatpush1.xpose.msra.mxu0 0.0
        %2977 = vmatprep.subr.mxu0 0.0
        %2978 = vmatpush1.xpose.msra.mxu0 0.0
        %2979 = vmatprep.subr.mxu0 0.0
        %2980 = vmatpush1.xpose.msra.mxu0 0.0
        %2981 = vmatprep.subr.mxu0 0.0
        %2982 = vmatpush1.xpose.msra.mxu0 0.0
        %2983 = vmatprep.subr.mxu0 0.0
        %2984 = vmatpush1.xpose.msra.mxu0 0.0
        %2985 = vmatprep.subr.mxu0 0.0
        %2986 = vmatpush1.xpose.msra.mxu0 0.0
        %2987 = vmatprep.subr.mxu0 0.0
        %2988 = vmatpush1.xpose.msra.mxu0 0.0
        %2989 = vmatprep.subr.mxu0 0.0
        %2990 = vmatpush1.xpose.msra.mxu0 0.0
        %2991 = vmatprep.subr.mxu0 0.0
        %2992 = vmatpush1.xpose.msra.mxu0 0.0
        %2993 = vmatprep.subr.mxu0 0.0
        %2994 = vmatpush1.xpose.msra.mxu0 0.0
        %2995 = vmatprep.subr.mxu0 0.0
        %2996 = vmatpush1.xpose.msra.mxu0 0.0
        %2997 = vmatprep.subr.mxu0 0.0
        %2998 = vmatpush1.xpose.msra.mxu0 0.0
        %2999 = vmatprep.subr.mxu0 0.0
        %3000 = vmatpush1.xpose.msra.mxu0 0.0
        %3001 = vmatprep.subr.mxu0 0.0
        %3002 = vmatpush1.xpose.msra.mxu0 0.0
        %3003 = vmatprep.subr.mxu0 0.0
        %3004 = vmatpush1.xpose.msra.mxu0 0.0
        %3005 = vmatprep.subr.mxu0 0.0
        %3006 = vmatpush1.xpose.msra.mxu0 0.0
        %3007 = vmatprep.subr.mxu0 0.0
        %3008 = vmatpush1.xpose.msra.mxu0 0.0
        %3009 = vmatprep.subr.mxu0 0.0
        %3010 = vmatpush1.xpose.msra.mxu0 0.0
        %3011 = vmatprep.subr.mxu0 0.0
        %3012 = vmatpush1.xpose.msra.mxu0 0.0
        %3013 = vmatprep.subr.mxu0 0.0
        %3014 = vmatpush1.xpose.msra.mxu0 0.0
        %3015 = vmatprep.subr.mxu0 0.0
        %3016 = vmatpush1.xpose.msra.mxu0 0.0
        %3017 = vmatprep.subr.mxu0 0.0
        %3018 = vmatpush1.xpose.msra.mxu0 0.0
        %3019 = vmatprep.subr.mxu0 0.0
        %3020 = vmatpush1.xpose.msra.mxu0 0.0
        %3021 = vmatprep.subr.mxu0 0.0
        %3022 = vmatpush1.xpose.msra.mxu0 0.0
        %3023 = vmatprep.mubr.f32.mxu0 0.0
        %3024 = vmatmul.mubr.f32.gmra.mrb[0].mxu0 %v2957
        %v3025 = vpop.f32.mrb[0].mxu0
        %v3026 = vadd.f32 0.0, %v3025
        %v3027 = vpop.f32.mrb[0].mxu0
        %3028 = vdwg.mxu0
        %3029 = vrot.lane.b32.xlu0 %v408, 112
        %v3030 = vpop.permute.xlu0 %3029
        %v3039 = vrot.slane %v2594, 7
        %v3040 = vsel %vm1182, %v3039, %v2522
        %v3041 = vrot.slane %v2666, 6
        %v3042 = vsel %vm1185, %v3041, %v3040
        %v3043 = vrot.slane %v2738, 5
        %v3044 = vsel %vm1188, %v3043, %v3042
        %v3045 = vrot.slane %v2810, 4
        %v3046 = vsel %vm1191, %v3045, %v3044
        %v3047 = vrot.slane %v2882, 3
        %v3048 = vsel %vm1194, %v3047, %v3046
        %v3049 = vrot.slane %v2954, 2
        %v3050 = vsel %vm1197, %v3049, %v3048
        %v3051 = vrot.slane %v3026, 1
        %v3052 = vsel %vm1200, %v3051, %v3050
        %v3054 = vsel %vm437, %v3030, 0
        %3056 = vmatprep.subr.mxu0 0.0
        %3057 = vmatpush1.xpose.msra.mxu0 %v3054
        %3058 = vmatprep.subr.mxu0 0.0
        %3059 = vmatpush1.xpose.msra.mxu0 0.0
        %3060 = vmatprep.subr.mxu0 0.0
        %3061 = vmatpush1.xpose.msra.mxu0 0.0
        %3062 = vmatprep.subr.mxu0 0.0
        %3063 = vmatpush1.xpose.msra.mxu0 0.0
        %3064 = vmatprep.subr.mxu0 0.0
        %3065 = vmatpush1.xpose.msra.mxu0 0.0
        %3066 = vmatprep.subr.mxu0 0.0
        %3067 = vmatpush1.xpose.msra.mxu0 0.0
        %3068 = vmatprep.subr.mxu0 0.0
        %3069 = vmatpush1.xpose.msra.mxu0 0.0
        %3070 = vmatprep.subr.mxu0 0.0
        %3071 = vmatpush1.xpose.msra.mxu0 0.0
        %3072 = vmatprep.subr.mxu0 0.0
        %3073 = vmatpush1.xpose.msra.mxu0 0.0
        %3074 = vmatprep.subr.mxu0 0.0
        %3075 = vmatpush1.xpose.msra.mxu0 0.0
        %3076 = vmatprep.subr.mxu0 0.0
        %3077 = vmatpush1.xpose.msra.mxu0 0.0
        %3078 = vmatprep.subr.mxu0 0.0
        %3079 = vmatpush1.xpose.msra.mxu0 0.0
        %3080 = vmatprep.subr.mxu0 0.0
        %3081 = vmatpush1.xpose.msra.mxu0 0.0
        %3082 = vmatprep.subr.mxu0 0.0
        %3083 = vmatpush1.xpose.msra.mxu0 0.0
        %3084 = vmatprep.subr.mxu0 0.0
        %3085 = vmatpush1.xpose.msra.mxu0 0.0
        %3086 = vmatprep.subr.mxu0 0.0
        %3087 = vmatpush1.xpose.msra.mxu0 0.0
        %3088 = vmatprep.subr.mxu0 0.0
        %3089 = vmatpush1.xpose.msra.mxu0 0.0
        %3090 = vmatprep.subr.mxu0 0.0
        %3091 = vmatpush1.xpose.msra.mxu0 0.0
        %3092 = vmatprep.subr.mxu0 0.0
        %3093 = vmatpush1.xpose.msra.mxu0 0.0
        %3094 = vmatprep.subr.mxu0 0.0
        %3095 = vmatpush1.xpose.msra.mxu0 0.0
        %3096 = vmatprep.subr.mxu0 0.0
        %3097 = vmatpush1.xpose.msra.mxu0 0.0
        %3098 = vmatprep.subr.mxu0 0.0
        %3099 = vmatpush1.xpose.msra.mxu0 0.0
        %3100 = vmatprep.subr.mxu0 0.0
        %3101 = vmatpush1.xpose.msra.mxu0 0.0
        %3102 = vmatprep.subr.mxu0 0.0
        %3103 = vmatpush1.xpose.msra.mxu0 0.0
        %3104 = vmatprep.subr.mxu0 0.0
        %3105 = vmatpush1.xpose.msra.mxu0 0.0
        %3106 = vmatprep.subr.mxu0 0.0
        %3107 = vmatpush1.xpose.msra.mxu0 0.0
        %3108 = vmatprep.subr.mxu0 0.0
        %3109 = vmatpush1.xpose.msra.mxu0 0.0
        %3110 = vmatprep.subr.mxu0 0.0
        %3111 = vmatpush1.xpose.msra.mxu0 0.0
        %3112 = vmatprep.subr.mxu0 0.0
        %3113 = vmatpush1.xpose.msra.mxu0 0.0
        %3114 = vmatprep.subr.mxu0 0.0
        %3115 = vmatpush1.xpose.msra.mxu0 0.0
        %3116 = vmatprep.subr.mxu0 0.0
        %3117 = vmatpush1.xpose.msra.mxu0 0.0
        %3118 = vmatprep.subr.mxu0 0.0
        %3119 = vmatpush1.xpose.msra.mxu0 0.0
        %3120 = vmatprep.mubr.f32.mxu0 0.0
        %3121 = vmatmul.mubr.f32.gmra.mrb[0].mxu0 %v2316
        %v3122 = vpop.f32.mrb[0].mxu0
        %v3123 = vadd.f32 %v3052, %v3122
        %v3124 = vpop.f32.mrb[0].mxu0
        %3125 = vdwg.mxu0
        %v3126 = vadd.f32 %v3123, %v2402
        %v3127 = vsel %vm435, %v3126, -1e+15
        %s3128 = scalar_lea.vmem [#allocation2], 16
        %v3129 = vld [vmem:[%s3128] sm:$0xff]
        %v3130 = vsel %vm437, %v3127, -inf
        %3131 = vmax.xlane.f32.xlu0 %v3130
        %v3132 = vpop.xlane.xlu0 %3131
        %v3133 = vmax.f32 %v3129, %v3132
        %v3134 = vsub.f32 %v3129, %v3133
        %v3135 = vmul.f32 %v3134, 1.442695
        %v3136 = vpow.pop %v3135
        %3138 = vset.pattern.permute.xlu0 0
        %3139 = vperm.xlu0 %3138, %v3133
        %v3140 = vpop.permute.xlu0 %3139
        %v3142 = vsub.f32 %v3127, %v3140
        %v3143 = vmul.f32 %v3142, 1.442695
        %v3144 = vpow.pop %v3143
        %s3145 = scalar_lea.vmem [#allocation3], 16
        %v3146 = vld [vmem:[%s3145] sm:$0xff]
        %v3147 = vmul.f32 %v3136, %v3146
        %v3148 = vsel %vm437, %v3144, 0.0
        %3149 = vadd.xlane.f32.xlu0 %v3148
        %v3150 = vpop.xlane.xlu0 %3149
        %v3151 = vadd.f32 %v3147, %v3150
        %3152 = vst.msk [vmem:[%s3145] sm:$0xff] %vm1300, %v3151
        %s3153 = scalar_lea.vmem [#allocation4], 16
        %v3154 = vld [vmem:[%s3153] sm:$0xff]
        %3156 = vset.pattern.permute.xlu0 0
        %3157 = vperm.xlu0 %3156, %v3136
        %v3158 = vpop.permute.xlu0 %3157
        %v3160 = vmul.f32 %v3158, %v3154
        %3161 = vrot.lane.b32.xlu0 %v409, 112
        %v3162 = vpop.permute.xlu0 %3161
        %v3165 = vsel %vm437, %v3144, 0
        %3167 = vmatprep.subr.mxu0 0.0
        %3168 = vmatpush1.msra.mxu0 %v3162
        %3169 = vmatprep.subr.mxu0 0.0
        %3170 = vmatpush1.msra.mxu0 0.0
        %3171 = vmatprep.subr.mxu0 0.0
        %3172 = vmatpush1.msra.mxu0 0.0
        %3173 = vmatprep.subr.mxu0 0.0
        %3174 = vmatpush1.msra.mxu0 0.0
        %3175 = vmatprep.subr.mxu0 0.0
        %3176 = vmatpush1.msra.mxu0 0.0
        %3177 = vmatprep.subr.mxu0 0.0
        %3178 = vmatpush1.msra.mxu0 0.0
        %3179 = vmatprep.subr.mxu0 0.0
        %3180 = vmatpush1.msra.mxu0 0.0
        %3181 = vmatprep.subr.mxu0 0.0
        %3182 = vmatpush1.msra.mxu0 0.0
        %3183 = vmatprep.subr.mxu0 0.0
        %3184 = vmatpush1.msra.mxu0 0.0
        %3185 = vmatprep.subr.mxu0 0.0
        %3186 = vmatpush1.msra.mxu0 0.0
        %3187 = vmatprep.subr.mxu0 0.0
        %3188 = vmatpush1.msra.mxu0 0.0
        %3189 = vmatprep.subr.mxu0 0.0
        %3190 = vmatpush1.msra.mxu0 0.0
        %3191 = vmatprep.subr.mxu0 0.0
        %3192 = vmatpush1.msra.mxu0 0.0
        %3193 = vmatprep.subr.mxu0 0.0
        %3194 = vmatpush1.msra.mxu0 0.0
        %3195 = vmatprep.subr.mxu0 0.0
        %3196 = vmatpush1.msra.mxu0 0.0
        %3197 = vmatprep.subr.mxu0 0.0
        %3198 = vmatpush1.msra.mxu0 0.0
        %3199 = vmatprep.subr.mxu0 0.0
        %3200 = vmatpush1.msra.mxu0 0.0
        %3201 = vmatprep.subr.mxu0 0.0
        %3202 = vmatpush1.msra.mxu0 0.0
        %3203 = vmatprep.subr.mxu0 0.0
        %3204 = vmatpush1.msra.mxu0 0.0
        %3205 = vmatprep.subr.mxu0 0.0
        %3206 = vmatpush1.msra.mxu0 0.0
        %3207 = vmatprep.subr.mxu0 0.0
        %3208 = vmatpush1.msra.mxu0 0.0
        %3209 = vmatprep.subr.mxu0 0.0
        %3210 = vmatpush1.msra.mxu0 0.0
        %3211 = vmatprep.subr.mxu0 0.0
        %3212 = vmatpush1.msra.mxu0 0.0
        %3213 = vmatprep.subr.mxu0 0.0
        %3214 = vmatpush1.msra.mxu0 0.0
        %3215 = vmatprep.subr.mxu0 0.0
        %3216 = vmatpush1.msra.mxu0 0.0
        %3217 = vmatprep.subr.mxu0 0.0
        %3218 = vmatpush1.msra.mxu0 0.0
        %3219 = vmatprep.subr.mxu0 0.0
        %3220 = vmatpush1.msra.mxu0 0.0
        %3221 = vmatprep.subr.mxu0 0.0
        %3222 = vmatpush1.msra.mxu0 0.0
        %3223 = vmatprep.subr.mxu0 0.0
        %3224 = vmatpush1.msra.mxu0 0.0
        %3225 = vmatprep.subr.mxu0 0.0
        %3226 = vmatpush1.msra.mxu0 0.0
        %3227 = vmatprep.subr.mxu0 0.0
        %3228 = vmatpush1.msra.mxu0 0.0
        %3229 = vmatprep.subr.mxu0 0.0
        %3230 = vmatpush1.msra.mxu0 0.0
        %3231 = vmatprep.mubr.f32.mxu0 0.0
        %3232 = vmatmul.mubr.f32.gmra.mrb[0].mxu0 %v3165
        %v3233 = vpop.f32.mrb[0].mxu0
        %v3234 = vadd.f32 0.0, %v3233
        %v3235 = vpop.f32.mrb[0].mxu0
        %3236 = vdwg.mxu0
        %v3237 = vadd.f32 %v3160, %v3234
        %3238 = vst.msk [vmem:[%s3153] sm:$0xff] %vm437, %v3237
        %3239 = vst.msk [vmem:[%s3128] sm:$0xff] %vm1300, %v3133
        %v3240 = vld [vmem:[%s5 + $0x18] sm:$0xff]
        %3241 = vrot.lane.b32.xlu0 %v407, 104
        %v3242 = vpop.permute.xlu0 %3241
        %v3243 = vsel %vm437, %v3242, 0
        %3245 = vmatprep.subr.mxu0 0.0
        %3246 = vmatpush1.msra.mxu0 %v3240
        %3247 = vmatprep.subr.mxu0 0.0
        %3248 = vmatpush1.msra.mxu0 0.0
        %3249 = vmatprep.subr.mxu0 0.0
        %3250 = vmatpush1.msra.mxu0 0.0
        %3251 = vmatprep.subr.mxu0 0.0
        %3252 = vmatpush1.msra.mxu0 0.0
        %3253 = vmatprep.subr.mxu0 0.0
        %3254 = vmatpush1.msra.mxu0 0.0
        %3255 = vmatprep.subr.mxu0 0.0
        %3256 = vmatpush1.msra.mxu0 0.0
        %3257 = vmatprep.subr.mxu0 0.0
        %3258 = vmatpush1.msra.mxu0 0.0
        %3259 = vmatprep.subr.mxu0 0.0
        %3260 = vmatpush1.msra.mxu0 0.0
        %3261 = vmatprep.subr.mxu0 0.0
        %3262 = vmatpush1.msra.mxu0 0.0
        %3263 = vmatprep.subr.mxu0 0.0
        %3264 = vmatpush1.msra.mxu0 0.0
        %3265 = vmatprep.subr.mxu0 0.0
        %3266 = vmatpush1.msra.mxu0 0.0
        %3267 = vmatprep.subr.mxu0 0.0
        %3268 = vmatpush1.msra.mxu0 0.0
        %3269 = vmatprep.subr.mxu0 0.0
        %3270 = vmatpush1.msra.mxu0 0.0
        %3271 = vmatprep.subr.mxu0 0.0
        %3272 = vmatpush1.msra.mxu0 0.0
        %3273 = vmatprep.subr.mxu0 0.0
        %3274 = vmatpush1.msra.mxu0 0.0
        %3275 = vmatprep.subr.mxu0 0.0
        %3276 = vmatpush1.msra.mxu0 0.0
        %3277 = vmatprep.subr.mxu0 0.0
        %3278 = vmatpush1.msra.mxu0 0.0
        %3279 = vmatprep.subr.mxu0 0.0
        %3280 = vmatpush1.msra.mxu0 0.0
        %3281 = vmatprep.subr.mxu0 0.0
        %3282 = vmatpush1.msra.mxu0 0.0
        %3283 = vmatprep.subr.mxu0 0.0
        %3284 = vmatpush1.msra.mxu0 0.0
        %3285 = vmatprep.subr.mxu0 0.0
        %3286 = vmatpush1.msra.mxu0 0.0
        %3287 = vmatprep.subr.mxu0 0.0
        %3288 = vmatpush1.msra.mxu0 0.0
        %3289 = vmatprep.subr.mxu0 0.0
        %3290 = vmatpush1.msra.mxu0 0.0
        %3291 = vmatprep.subr.mxu0 0.0
        %3292 = vmatpush1.msra.mxu0 0.0
        %3293 = vmatprep.subr.mxu0 0.0
        %3294 = vmatpush1.msra.mxu0 0.0
        %3295 = vmatprep.subr.mxu0 0.0
        %3296 = vmatpush1.msra.mxu0 0.0
        %3297 = vmatprep.subr.mxu0 0.0
        %3298 = vmatpush1.msra.mxu0 0.0
        %3299 = vmatprep.subr.mxu0 0.0
        %3300 = vmatpush1.msra.mxu0 0.0
        %3301 = vmatprep.subr.mxu0 0.0
        %3302 = vmatpush1.msra.mxu0 0.0
        %3303 = vmatprep.subr.mxu0 0.0
        %3304 = vmatpush1.msra.mxu0 0.0
        %3305 = vmatprep.subr.mxu0 0.0
        %3306 = vmatpush1.msra.mxu0 0.0
        %3307 = vmatprep.subr.mxu0 0.0
        %3308 = vmatpush1.msra.mxu0 0.0
        %3309 = vmatprep.mubr.f32.mxu0 0.0
        %3310 = vmatmul.mubr.f32.gmra.mrb[0].mxu0 %v3243
        %v3311 = vpop.f32.mrb[0].mxu0
        %v3312 = vadd.f32 0.0, %v3311
        %v3313 = vpop.f32.mrb[0].mxu0
        %3314 = vdwg.mxu0
        %v3315 = vld [vmem:[%s6] sm:$0x1]
        %v3317 = vlaneseq
        %v3318 = vshrl.u32 %v3317, 7
        %v3319 = vsub.s32 0, %v3318
        %v3320 = vrot.slane %v3315, %v3319
        %v3322 = vmul.f32 %v407, %v3320
        %3324 = vrot.lane.b32.xlu0 %v3322, 104
        %v3325 = vpop.permute.xlu0 %3324
        %v3327 = vsel %vm437, %v3325, 0.0
        %3328 = vadd.xlane.f32.xlu0 %v3327
        %v3329 = vpop.xlane.xlu0 %3328
        %v3331 = vcombine.high %v3312, %v3312
        %v3333 = vunpack.c.l.s4 1966171168
        %v3334 = vunpack.c.0.s8 %v3333
        %v3335 = vlaneseq
        %v3336 = vshrl.u32 %v3335, 7
        %v3337 = vsub.s32 %v3334, %v3336
        %v3338 = vrot.slane %v3312, %v3337
        %v3340 = vunpack.c.l.s4 1966171168
        %v3341 = vunpack.c.0.s8 %v3340
        %v3342 = vlaneseq
        %v3343 = vshrl.u32 %v3342, 7
        %v3344 = vsub.s32 %v3341, %v3343
        %v3345 = vrot.slane %v3331, %v3344
        %v3346 = vcombine.high %v3338, %v3338
        %v3347 = vcombine.high %v3345, %v3345
        %v3349 = vunpack.c.l.s4 1966171168
        %v3350 = vunpack.c.0.s8 %v3349
        %v3351 = vlaneseq
        %v3352 = vshrl.u32 %v3351, 7
        %v3353 = vsub.s32 %v3350, %v3352
        %v3354 = vrot.slane %v3338, %v3353
        %v3356 = vunpack.c.l.s4 1966171168
        %v3357 = vunpack.c.0.s8 %v3356
        %v3358 = vlaneseq
        %v3359 = vshrl.u32 %v3358, 7
        %v3360 = vsub.s32 %v3357, %v3359
        %v3361 = vrot.slane %v3345, %v3360
        %v3363 = vunpack.c.l.s4 1966171168
        %v3364 = vunpack.c.0.s8 %v3363
        %v3365 = vlaneseq
        %v3366 = vshrl.u32 %v3365, 7
        %v3367 = vsub.s32 %v3364, %v3366
        %v3368 = vrot.slane %v3346, %v3367
        %v3370 = vunpack.c.l.s4 1966171168
        %v3371 = vunpack.c.0.s8 %v3370
        %v3372 = vlaneseq
        %v3373 = vshrl.u32 %v3372, 7
        %v3374 = vsub.s32 %v3371, %v3373
        %v3375 = vrot.slane %v3347, %v3374
        %v3376 = vcombine.high %v3354, %v3354
        %v3377 = vcombine.high %v3361, %v3361
        %v3378 = vcombine.high %v3368, %v3368
        %v3379 = vcombine.high %v3375, %v3375
        %v3380 = vsel %vm572, %v3354, 0
        %3382 = vmatprep.subr.mxu0 0.0
        %3383 = vmatpush1.xpose.msra.mxu0 %v576
        %3384 = vmatprep.subr.mxu0 0.0
        %3385 = vmatpush1.xpose.msra.mxu0 0.0
        %3386 = vmatprep.subr.mxu0 0.0
        %3387 = vmatpush1.xpose.msra.mxu0 0.0
        %3388 = vmatprep.subr.mxu0 0.0
        %3389 = vmatpush1.xpose.msra.mxu0 0.0
        %3390 = vmatprep.subr.mxu0 0.0
        %3391 = vmatpush1.xpose.msra.mxu0 0.0
        %3392 = vmatprep.subr.mxu0 0.0
        %3393 = vmatpush1.xpose.msra.mxu0 0.0
        %3394 = vmatprep.subr.mxu0 0.0
        %3395 = vmatpush1.xpose.msra.mxu0 0.0
        %3396 = vmatprep.subr.mxu0 0.0
        %3397 = vmatpush1.xpose.msra.mxu0 0.0
        %3398 = vmatprep.subr.mxu0 0.0
        %3399 = vmatpush1.xpose.msra.mxu0 0.0
        %3400 = vmatprep.subr.mxu0 0.0
        %3401 = vmatpush1.xpose.msra.mxu0 0.0
        %3402 = vmatprep.subr.mxu0 0.0
        %3403 = vmatpush1.xpose.msra.mxu0 0.0
        %3404 = vmatprep.subr.mxu0 0.0
        %3405 = vmatpush1.xpose.msra.mxu0 0.0
        %3406 = vmatprep.subr.mxu0 0.0
        %3407 = vmatpush1.xpose.msra.mxu0 0.0
        %3408 = vmatprep.subr.mxu0 0.0
        %3409 = vmatpush1.xpose.msra.mxu0 0.0
        %3410 = vmatprep.subr.mxu0 0.0
        %3411 = vmatpush1.xpose.msra.mxu0 0.0
        %3412 = vmatprep.subr.mxu0 0.0
        %3413 = vmatpush1.xpose.msra.mxu0 0.0
        %3414 = vmatprep.subr.mxu0 0.0
        %3415 = vmatpush1.xpose.msra.mxu0 0.0
        %3416 = vmatprep.subr.mxu0 0.0
        %3417 = vmatpush1.xpose.msra.mxu0 0.0
        %3418 = vmatprep.subr.mxu0 0.0
        %3419 = vmatpush1.xpose.msra.mxu0 0.0
        %3420 = vmatprep.subr.mxu0 0.0
        %3421 = vmatpush1.xpose.msra.mxu0 0.0
        %3422 = vmatprep.subr.mxu0 0.0
        %3423 = vmatpush1.xpose.msra.mxu0 0.0
        %3424 = vmatprep.subr.mxu0 0.0
        %3425 = vmatpush1.xpose.msra.mxu0 0.0
        %3426 = vmatprep.subr.mxu0 0.0
        %3427 = vmatpush1.xpose.msra.mxu0 0.0
        %3428 = vmatprep.subr.mxu0 0.0
        %3429 = vmatpush1.xpose.msra.mxu0 0.0
        %3430 = vmatprep.subr.mxu0 0.0
        %3431 = vmatpush1.xpose.msra.mxu0 0.0
        %3432 = vmatprep.subr.mxu0 0.0
        %3433 = vmatpush1.xpose.msra.mxu0 0.0
        %3434 = vmatprep.subr.mxu0 0.0
        %3435 = vmatpush1.xpose.msra.mxu0 0.0
        %3436 = vmatprep.subr.mxu0 0.0
        %3437 = vmatpush1.xpose.msra.mxu0 0.0
        %3438 = vmatprep.subr.mxu0 0.0
        %3439 = vmatpush1.xpose.msra.mxu0 0.0
        %3440 = vmatprep.subr.mxu0 0.0
        %3441 = vmatpush1.xpose.msra.mxu0 0.0
        %3442 = vmatprep.subr.mxu0 0.0
        %3443 = vmatpush1.xpose.msra.mxu0 0.0
        %3444 = vmatprep.subr.mxu0 0.0
        %3445 = vmatpush1.xpose.msra.mxu0 0.0
        %3446 = vmatprep.mubr.f32.mxu0 0.0
        %3447 = vmatmul.mubr.f32.gmra.mrb[0].mxu0 %v3380
        %v3448 = vpop.f32.mrb[0].mxu0
        %v3449 = vadd.f32 0.0, %v3448
        %v3450 = vpop.f32.mrb[0].mxu0
        %3451 = vdwg.mxu0
        %v3452 = vsel %vm572, %v3368, 0
        %3454 = vmatprep.subr.mxu0 0.0
        %3455 = vmatpush1.xpose.msra.mxu0 %v651
        %3456 = vmatprep.subr.mxu0 0.0
        %3457 = vmatpush1.xpose.msra.mxu0 0.0
        %3458 = vmatprep.subr.mxu0 0.0
        %3459 = vmatpush1.xpose.msra.mxu0 0.0
        %3460 = vmatprep.subr.mxu0 0.0
        %3461 = vmatpush1.xpose.msra.mxu0 0.0
        %3462 = vmatprep.subr.mxu0 0.0
        %3463 = vmatpush1.xpose.msra.mxu0 0.0
        %3464 = vmatprep.subr.mxu0 0.0
        %3465 = vmatpush1.xpose.msra.mxu0 0.0
        %3466 = vmatprep.subr.mxu0 0.0
        %3467 = vmatpush1.xpose.msra.mxu0 0.0
        %3468 = vmatprep.subr.mxu0 0.0
        %3469 = vmatpush1.xpose.msra.mxu0 0.0
        %3470 = vmatprep.subr.mxu0 0.0
        %3471 = vmatpush1.xpose.msra.mxu0 0.0
        %3472 = vmatprep.subr.mxu0 0.0
        %3473 = vmatpush1.xpose.msra.mxu0 0.0
        %3474 = vmatprep.subr.mxu0 0.0
        %3475 = vmatpush1.xpose.msra.mxu0 0.0
        %3476 = vmatprep.subr.mxu0 0.0
        %3477 = vmatpush1.xpose.msra.mxu0 0.0
        %3478 = vmatprep.subr.mxu0 0.0
        %3479 = vmatpush1.xpose.msra.mxu0 0.0
        %3480 = vmatprep.subr.mxu0 0.0
        %3481 = vmatpush1.xpose.msra.mxu0 0.0
        %3482 = vmatprep.subr.mxu0 0.0
        %3483 = vmatpush1.xpose.msra.mxu0 0.0
        %3484 = vmatprep.subr.mxu0 0.0
        %3485 = vmatpush1.xpose.msra.mxu0 0.0
        %3486 = vmatprep.subr.mxu0 0.0
        %3487 = vmatpush1.xpose.msra.mxu0 0.0
        %3488 = vmatprep.subr.mxu0 0.0
        %3489 = vmatpush1.xpose.msra.mxu0 0.0
        %3490 = vmatprep.subr.mxu0 0.0
        %3491 = vmatpush1.xpose.msra.mxu0 0.0
        %3492 = vmatprep.subr.mxu0 0.0
        %3493 = vmatpush1.xpose.msra.mxu0 0.0
        %3494 = vmatprep.subr.mxu0 0.0
        %3495 = vmatpush1.xpose.msra.mxu0 0.0
        %3496 = vmatprep.subr.mxu0 0.0
        %3497 = vmatpush1.xpose.msra.mxu0 0.0
        %3498 = vmatprep.subr.mxu0 0.0
        %3499 = vmatpush1.xpose.msra.mxu0 0.0
        %3500 = vmatprep.subr.mxu0 0.0
        %3501 = vmatpush1.xpose.msra.mxu0 0.0
        %3502 = vmatprep.subr.mxu0 0.0
        %3503 = vmatpush1.xpose.msra.mxu0 0.0
        %3504 = vmatprep.subr.mxu0 0.0
        %3505 = vmatpush1.xpose.msra.mxu0 0.0
        %3506 = vmatprep.subr.mxu0 0.0
        %3507 = vmatpush1.xpose.msra.mxu0 0.0
        %3508 = vmatprep.subr.mxu0 0.0
        %3509 = vmatpush1.xpose.msra.mxu0 0.0
        %3510 = vmatprep.subr.mxu0 0.0
        %3511 = vmatpush1.xpose.msra.mxu0 0.0
        %3512 = vmatprep.subr.mxu0 0.0
        %3513 = vmatpush1.xpose.msra.mxu0 0.0
        %3514 = vmatprep.subr.mxu0 0.0
        %3515 = vmatpush1.xpose.msra.mxu0 0.0
        %3516 = vmatprep.subr.mxu0 0.0
        %3517 = vmatpush1.xpose.msra.mxu0 0.0
        %3518 = vmatprep.mubr.f32.mxu0 0.0
        %3519 = vmatmul.mubr.f32.gmra.mrb[0].mxu0 %v3452
        %v3520 = vpop.f32.mrb[0].mxu0
        %v3521 = vadd.f32 0.0, %v3520
        %v3522 = vpop.f32.mrb[0].mxu0
        %3523 = vdwg.mxu0
        %v3524 = vsel %vm572, %v3376, 0
        %3526 = vmatprep.subr.mxu0 0.0
        %3527 = vmatpush1.xpose.msra.mxu0 %v726
        %3528 = vmatprep.subr.mxu0 0.0
        %3529 = vmatpush1.xpose.msra.mxu0 0.0
        %3530 = vmatprep.subr.mxu0 0.0
        %3531 = vmatpush1.xpose.msra.mxu0 0.0
        %3532 = vmatprep.subr.mxu0 0.0
        %3533 = vmatpush1.xpose.msra.mxu0 0.0
        %3534 = vmatprep.subr.mxu0 0.0
        %3535 = vmatpush1.xpose.msra.mxu0 0.0
        %3536 = vmatprep.subr.mxu0 0.0
        %3537 = vmatpush1.xpose.msra.mxu0 0.0
        %3538 = vmatprep.subr.mxu0 0.0
        %3539 = vmatpush1.xpose.msra.mxu0 0.0
        %3540 = vmatprep.subr.mxu0 0.0
        %3541 = vmatpush1.xpose.msra.mxu0 0.0
        %3542 = vmatprep.subr.mxu0 0.0
        %3543 = vmatpush1.xpose.msra.mxu0 0.0
        %3544 = vmatprep.subr.mxu0 0.0
        %3545 = vmatpush1.xpose.msra.mxu0 0.0
        %3546 = vmatprep.subr.mxu0 0.0
        %3547 = vmatpush1.xpose.msra.mxu0 0.0
        %3548 = vmatprep.subr.mxu0 0.0
        %3549 = vmatpush1.xpose.msra.mxu0 0.0
        %3550 = vmatprep.subr.mxu0 0.0
        %3551 = vmatpush1.xpose.msra.mxu0 0.0
        %3552 = vmatprep.subr.mxu0 0.0
        %3553 = vmatpush1.xpose.msra.mxu0 0.0
        %3554 = vmatprep.subr.mxu0 0.0
        %3555 = vmatpush1.xpose.msra.mxu0 0.0
        %3556 = vmatprep.subr.mxu0 0.0
        %3557 = vmatpush1.xpose.msra.mxu0 0.0
        %3558 = vmatprep.subr.mxu0 0.0
        %3559 = vmatpush1.xpose.msra.mxu0 0.0
        %3560 = vmatprep.subr.mxu0 0.0
        %3561 = vmatpush1.xpose.msra.mxu0 0.0
        %3562 = vmatprep.subr.mxu0 0.0
        %3563 = vmatpush1.xpose.msra.mxu0 0.0
        %3564 = vmatprep.subr.mxu0 0.0
        %3565 = vmatpush1.xpose.msra.mxu0 0.0
        %3566 = vmatprep.subr.mxu0 0.0
        %3567 = vmatpush1.xpose.msra.mxu0 0.0
        %3568 = vmatprep.subr.mxu0 0.0
        %3569 = vmatpush1.xpose.msra.mxu0 0.0
        %3570 = vmatprep.subr.mxu0 0.0
        %3571 = vmatpush1.xpose.msra.mxu0 0.0
        %3572 = vmatprep.subr.mxu0 0.0
        %3573 = vmatpush1.xpose.msra.mxu0 0.0
        %3574 = vmatprep.subr.mxu0 0.0
        %3575 = vmatpush1.xpose.msra.mxu0 0.0
        %3576 = vmatprep.subr.mxu0 0.0
        %3577 = vmatpush1.xpose.msra.mxu0 0.0
        %3578 = vmatprep.subr.mxu0 0.0
        %3579 = vmatpush1.xpose.msra.mxu0 0.0
        %3580 = vmatprep.subr.mxu0 0.0
        %3581 = vmatpush1.xpose.msra.mxu0 0.0
        %3582 = vmatprep.subr.mxu0 0.0
        %3583 = vmatpush1.xpose.msra.mxu0 0.0
        %3584 = vmatprep.subr.mxu0 0.0
        %3585 = vmatpush1.xpose.msra.mxu0 0.0
        %3586 = vmatprep.subr.mxu0 0.0
        %3587 = vmatpush1.xpose.msra.mxu0 0.0
        %3588 = vmatprep.subr.mxu0 0.0
        %3589 = vmatpush1.xpose.msra.mxu0 0.0
        %3590 = vmatprep.mubr.f32.mxu0 0.0
        %3591 = vmatmul.mubr.f32.gmra.mrb[0].mxu0 %v3524
        %v3592 = vpop.f32.mrb[0].mxu0
        %v3593 = vadd.f32 0.0, %v3592
        %v3594 = vpop.f32.mrb[0].mxu0
        %3595 = vdwg.mxu0
        %v3596 = vsel %vm572, %v3378, 0
        %3598 = vmatprep.subr.mxu0 0.0
        %3599 = vmatpush1.xpose.msra.mxu0 %v801
        %3600 = vmatprep.subr.mxu0 0.0
        %3601 = vmatpush1.xpose.msra.mxu0 0.0
        %3602 = vmatprep.subr.mxu0 0.0
        %3603 = vmatpush1.xpose.msra.mxu0 0.0
        %3604 = vmatprep.subr.mxu0 0.0
        %3605 = vmatpush1.xpose.msra.mxu0 0.0
        %3606 = vmatprep.subr.mxu0 0.0
        %3607 = vmatpush1.xpose.msra.mxu0 0.0
        %3608 = vmatprep.subr.mxu0 0.0
        %3609 = vmatpush1.xpose.msra.mxu0 0.0
        %3610 = vmatprep.subr.mxu0 0.0
        %3611 = vmatpush1.xpose.msra.mxu0 0.0
        %3612 = vmatprep.subr.mxu0 0.0
        %3613 = vmatpush1.xpose.msra.mxu0 0.0
        %3614 = vmatprep.subr.mxu0 0.0
        %3615 = vmatpush1.xpose.msra.mxu0 0.0
        %3616 = vmatprep.subr.mxu0 0.0
        %3617 = vmatpush1.xpose.msra.mxu0 0.0
        %3618 = vmatprep.subr.mxu0 0.0
        %3619 = vmatpush1.xpose.msra.mxu0 0.0
        %3620 = vmatprep.subr.mxu0 0.0
        %3621 = vmatpush1.xpose.msra.mxu0 0.0
        %3622 = vmatprep.subr.mxu0 0.0
        %3623 = vmatpush1.xpose.msra.mxu0 0.0
        %3624 = vmatprep.subr.mxu0 0.0
        %3625 = vmatpush1.xpose.msra.mxu0 0.0
        %3626 = vmatprep.subr.mxu0 0.0
        %3627 = vmatpush1.xpose.msra.mxu0 0.0
        %3628 = vmatprep.subr.mxu0 0.0
        %3629 = vmatpush1.xpose.msra.mxu0 0.0
        %3630 = vmatprep.subr.mxu0 0.0
        %3631 = vmatpush1.xpose.msra.mxu0 0.0
        %3632 = vmatprep.subr.mxu0 0.0
        %3633 = vmatpush1.xpose.msra.mxu0 0.0
        %3634 = vmatprep.subr.mxu0 0.0
        %3635 = vmatpush1.xpose.msra.mxu0 0.0
        %3636 = vmatprep.subr.mxu0 0.0
        %3637 = vmatpush1.xpose.msra.mxu0 0.0
        %3638 = vmatprep.subr.mxu0 0.0
        %3639 = vmatpush1.xpose.msra.mxu0 0.0
        %3640 = vmatprep.subr.mxu0 0.0
        %3641 = vmatpush1.xpose.msra.mxu0 0.0
        %3642 = vmatprep.subr.mxu0 0.0
        %3643 = vmatpush1.xpose.msra.mxu0 0.0
        %3644 = vmatprep.subr.mxu0 0.0
        %3645 = vmatpush1.xpose.msra.mxu0 0.0
        %3646 = vmatprep.subr.mxu0 0.0
        %3647 = vmatpush1.xpose.msra.mxu0 0.0
        %3648 = vmatprep.subr.mxu0 0.0
        %3649 = vmatpush1.xpose.msra.mxu0 0.0
        %3650 = vmatprep.subr.mxu0 0.0
        %3651 = vmatpush1.xpose.msra.mxu0 0.0
        %3652 = vmatprep.subr.mxu0 0.0
        %3653 = vmatpush1.xpose.msra.mxu0 0.0
        %3654 = vmatprep.subr.mxu0 0.0
        %3655 = vmatpush1.xpose.msra.mxu0 0.0
        %3656 = vmatprep.subr.mxu0 0.0
        %3657 = vmatpush1.xpose.msra.mxu0 0.0
        %3658 = vmatprep.subr.mxu0 0.0
        %3659 = vmatpush1.xpose.msra.mxu0 0.0
        %3660 = vmatprep.subr.mxu0 0.0
        %3661 = vmatpush1.xpose.msra.mxu0 0.0
        %3662 = vmatprep.mubr.f32.mxu0 0.0
        %3663 = vmatmul.mubr.f32.gmra.mrb[0].mxu0 %v3596
        %v3664 = vpop.f32.mrb[0].mxu0
        %v3665 = vadd.f32 0.0, %v3664
        %v3666 = vpop.f32.mrb[0].mxu0
        %3667 = vdwg.mxu0
        %v3668 = vsel %vm572, %v3361, 0
        %3670 = vmatprep.subr.mxu0 0.0
        %3671 = vmatpush1.xpose.msra.mxu0 %v876
        %3672 = vmatprep.subr.mxu0 0.0
        %3673 = vmatpush1.xpose.msra.mxu0 0.0
        %3674 = vmatprep.subr.mxu0 0.0
        %3675 = vmatpush1.xpose.msra.mxu0 0.0
        %3676 = vmatprep.subr.mxu0 0.0
        %3677 = vmatpush1.xpose.msra.mxu0 0.0
        %3678 = vmatprep.subr.mxu0 0.0
        %3679 = vmatpush1.xpose.msra.mxu0 0.0
        %3680 = vmatprep.subr.mxu0 0.0
        %3681 = vmatpush1.xpose.msra.mxu0 0.0
        %3682 = vmatprep.subr.mxu0 0.0
        %3683 = vmatpush1.xpose.msra.mxu0 0.0
        %3684 = vmatprep.subr.mxu0 0.0
        %3685 = vmatpush1.xpose.msra.mxu0 0.0
        %3686 = vmatprep.subr.mxu0 0.0
        %3687 = vmatpush1.xpose.msra.mxu0 0.0
        %3688 = vmatprep.subr.mxu0 0.0
        %3689 = vmatpush1.xpose.msra.mxu0 0.0
        %3690 = vmatprep.subr.mxu0 0.0
        %3691 = vmatpush1.xpose.msra.mxu0 0.0
        %3692 = vmatprep.subr.mxu0 0.0
        %3693 = vmatpush1.xpose.msra.mxu0 0.0
        %3694 = vmatprep.subr.mxu0 0.0
        %3695 = vmatpush1.xpose.msra.mxu0 0.0
        %3696 = vmatprep.subr.mxu0 0.0
        %3697 = vmatpush1.xpose.msra.mxu0 0.0
        %3698 = vmatprep.subr.mxu0 0.0
        %3699 = vmatpush1.xpose.msra.mxu0 0.0
        %3700 = vmatprep.subr.mxu0 0.0
        %3701 = vmatpush1.xpose.msra.mxu0 0.0
        %3702 = vmatprep.subr.mxu0 0.0
        %3703 = vmatpush1.xpose.msra.mxu0 0.0
        %3704 = vmatprep.subr.mxu0 0.0
        %3705 = vmatpush1.xpose.msra.mxu0 0.0
        %3706 = vmatprep.subr.mxu0 0.0
        %3707 = vmatpush1.xpose.msra.mxu0 0.0
        %3708 = vmatprep.subr.mxu0 0.0
        %3709 = vmatpush1.xpose.msra.mxu0 0.0
        %3710 = vmatprep.subr.mxu0 0.0
        %3711 = vmatpush1.xpose.msra.mxu0 0.0
        %3712 = vmatprep.subr.mxu0 0.0
        %3713 = vmatpush1.xpose.msra.mxu0 0.0
        %3714 = vmatprep.subr.mxu0 0.0
        %3715 = vmatpush1.xpose.msra.mxu0 0.0
        %3716 = vmatprep.subr.mxu0 0.0
        %3717 = vmatpush1.xpose.msra.mxu0 0.0
        %3718 = vmatprep.subr.mxu0 0.0
        %3719 = vmatpush1.xpose.msra.mxu0 0.0
        %3720 = vmatprep.subr.mxu0 0.0
        %3721 = vmatpush1.xpose.msra.mxu0 0.0
        %3722 = vmatprep.subr.mxu0 0.0
        %3723 = vmatpush1.xpose.msra.mxu0 0.0
        %3724 = vmatprep.subr.mxu0 0.0
        %3725 = vmatpush1.xpose.msra.mxu0 0.0
        %3726 = vmatprep.subr.mxu0 0.0
        %3727 = vmatpush1.xpose.msra.mxu0 0.0
        %3728 = vmatprep.subr.mxu0 0.0
        %3729 = vmatpush1.xpose.msra.mxu0 0.0
        %3730 = vmatprep.subr.mxu0 0.0
        %3731 = vmatpush1.xpose.msra.mxu0 0.0
        %3732 = vmatprep.subr.mxu0 0.0
        %3733 = vmatpush1.xpose.msra.mxu0 0.0
        %3734 = vmatprep.mubr.f32.mxu0 0.0
        %3735 = vmatmul.mubr.f32.gmra.mrb[0].mxu0 %v3668
        %v3736 = vpop.f32.mrb[0].mxu0
        %v3737 = vadd.f32 0.0, %v3736
        %v3738 = vpop.f32.mrb[0].mxu0
        %3739 = vdwg.mxu0
        %v3740 = vsel %vm572, %v3375, 0
        %3742 = vmatprep.subr.mxu0 0.0
        %3743 = vmatpush1.xpose.msra.mxu0 %v951
        %3744 = vmatprep.subr.mxu0 0.0
        %3745 = vmatpush1.xpose.msra.mxu0 0.0
        %3746 = vmatprep.subr.mxu0 0.0
        %3747 = vmatpush1.xpose.msra.mxu0 0.0
        %3748 = vmatprep.subr.mxu0 0.0
        %3749 = vmatpush1.xpose.msra.mxu0 0.0
        %3750 = vmatprep.subr.mxu0 0.0
        %3751 = vmatpush1.xpose.msra.mxu0 0.0
        %3752 = vmatprep.subr.mxu0 0.0
        %3753 = vmatpush1.xpose.msra.mxu0 0.0
        %3754 = vmatprep.subr.mxu0 0.0
        %3755 = vmatpush1.xpose.msra.mxu0 0.0
        %3756 = vmatprep.subr.mxu0 0.0
        %3757 = vmatpush1.xpose.msra.mxu0 0.0
        %3758 = vmatprep.subr.mxu0 0.0
        %3759 = vmatpush1.xpose.msra.mxu0 0.0
        %3760 = vmatprep.subr.mxu0 0.0
        %3761 = vmatpush1.xpose.msra.mxu0 0.0
        %3762 = vmatprep.subr.mxu0 0.0
        %3763 = vmatpush1.xpose.msra.mxu0 0.0
        %3764 = vmatprep.subr.mxu0 0.0
        %3765 = vmatpush1.xpose.msra.mxu0 0.0
        %3766 = vmatprep.subr.mxu0 0.0
        %3767 = vmatpush1.xpose.msra.mxu0 0.0
        %3768 = vmatprep.subr.mxu0 0.0
        %3769 = vmatpush1.xpose.msra.mxu0 0.0
        %3770 = vmatprep.subr.mxu0 0.0
        %3771 = vmatpush1.xpose.msra.mxu0 0.0
        %3772 = vmatprep.subr.mxu0 0.0
        %3773 = vmatpush1.xpose.msra.mxu0 0.0
        %3774 = vmatprep.subr.mxu0 0.0
        %3775 = vmatpush1.xpose.msra.mxu0 0.0
        %3776 = vmatprep.subr.mxu0 0.0
        %3777 = vmatpush1.xpose.msra.mxu0 0.0
        %3778 = vmatprep.subr.mxu0 0.0
        %3779 = vmatpush1.xpose.msra.mxu0 0.0
        %3780 = vmatprep.subr.mxu0 0.0
        %3781 = vmatpush1.xpose.msra.mxu0 0.0
        %3782 = vmatprep.subr.mxu0 0.0
        %3783 = vmatpush1.xpose.msra.mxu0 0.0
        %3784 = vmatprep.subr.mxu0 0.0
        %3785 = vmatpush1.xpose.msra.mxu0 0.0
        %3786 = vmatprep.subr.mxu0 0.0
        %3787 = vmatpush1.xpose.msra.mxu0 0.0
        %3788 = vmatprep.subr.mxu0 0.0
        %3789 = vmatpush1.xpose.msra.mxu0 0.0
        %3790 = vmatprep.subr.mxu0 0.0
        %3791 = vmatpush1.xpose.msra.mxu0 0.0
        %3792 = vmatprep.subr.mxu0 0.0
        %3793 = vmatpush1.xpose.msra.mxu0 0.0
        %3794 = vmatprep.subr.mxu0 0.0
        %3795 = vmatpush1.xpose.msra.mxu0 0.0
        %3796 = vmatprep.subr.mxu0 0.0
        %3797 = vmatpush1.xpose.msra.mxu0 0.0
        %3798 = vmatprep.subr.mxu0 0.0
        %3799 = vmatpush1.xpose.msra.mxu0 0.0
        %3800 = vmatprep.subr.mxu0 0.0
        %3801 = vmatpush1.xpose.msra.mxu0 0.0
        %3802 = vmatprep.subr.mxu0 0.0
        %3803 = vmatpush1.xpose.msra.mxu0 0.0
        %3804 = vmatprep.subr.mxu0 0.0
        %3805 = vmatpush1.xpose.msra.mxu0 0.0
        %3806 = vmatprep.mubr.f32.mxu0 0.0
        %3807 = vmatmul.mubr.f32.gmra.mrb[0].mxu0 %v3740
        %v3808 = vpop.f32.mrb[0].mxu0
        %v3809 = vadd.f32 0.0, %v3808
        %v3810 = vpop.f32.mrb[0].mxu0
        %3811 = vdwg.mxu0
        %v3812 = vsel %vm572, %v3377, 0
        %3814 = vmatprep.subr.mxu0 0.0
        %3815 = vmatpush1.xpose.msra.mxu0 %v1026
        %3816 = vmatprep.subr.mxu0 0.0
        %3817 = vmatpush1.xpose.msra.mxu0 0.0
        %3818 = vmatprep.subr.mxu0 0.0
        %3819 = vmatpush1.xpose.msra.mxu0 0.0
        %3820 = vmatprep.subr.mxu0 0.0
        %3821 = vmatpush1.xpose.msra.mxu0 0.0
        %3822 = vmatprep.subr.mxu0 0.0
        %3823 = vmatpush1.xpose.msra.mxu0 0.0
        %3824 = vmatprep.subr.mxu0 0.0
        %3825 = vmatpush1.xpose.msra.mxu0 0.0
        %3826 = vmatprep.subr.mxu0 0.0
        %3827 = vmatpush1.xpose.msra.mxu0 0.0
        %3828 = vmatprep.subr.mxu0 0.0
        %3829 = vmatpush1.xpose.msra.mxu0 0.0
        %3830 = vmatprep.subr.mxu0 0.0
        %3831 = vmatpush1.xpose.msra.mxu0 0.0
        %3832 = vmatprep.subr.mxu0 0.0
        %3833 = vmatpush1.xpose.msra.mxu0 0.0
        %3834 = vmatprep.subr.mxu0 0.0
        %3835 = vmatpush1.xpose.msra.mxu0 0.0
        %3836 = vmatprep.subr.mxu0 0.0
        %3837 = vmatpush1.xpose.msra.mxu0 0.0
        %3838 = vmatprep.subr.mxu0 0.0
        %3839 = vmatpush1.xpose.msra.mxu0 0.0
        %3840 = vmatprep.subr.mxu0 0.0
        %3841 = vmatpush1.xpose.msra.mxu0 0.0
        %3842 = vmatprep.subr.mxu0 0.0
        %3843 = vmatpush1.xpose.msra.mxu0 0.0
        %3844 = vmatprep.subr.mxu0 0.0
        %3845 = vmatpush1.xpose.msra.mxu0 0.0
        %3846 = vmatprep.subr.mxu0 0.0
        %3847 = vmatpush1.xpose.msra.mxu0 0.0
        %3848 = vmatprep.subr.mxu0 0.0
        %3849 = vmatpush1.xpose.msra.mxu0 0.0
        %3850 = vmatprep.subr.mxu0 0.0
        %3851 = vmatpush1.xpose.msra.mxu0 0.0
        %3852 = vmatprep.subr.mxu0 0.0
        %3853 = vmatpush1.xpose.msra.mxu0 0.0
        %3854 = vmatprep.subr.mxu0 0.0
        %3855 = vmatpush1.xpose.msra.mxu0 0.0
        %3856 = vmatprep.subr.mxu0 0.0
        %3857 = vmatpush1.xpose.msra.mxu0 0.0
        %3858 = vmatprep.subr.mxu0 0.0
        %3859 = vmatpush1.xpose.msra.mxu0 0.0
        %3860 = vmatprep.subr.mxu0 0.0
        %3861 = vmatpush1.xpose.msra.mxu0 0.0
        %3862 = vmatprep.subr.mxu0 0.0
        %3863 = vmatpush1.xpose.msra.mxu0 0.0
        %3864 = vmatprep.subr.mxu0 0.0
        %3865 = vmatpush1.xpose.msra.mxu0 0.0
        %3866 = vmatprep.subr.mxu0 0.0
        %3867 = vmatpush1.xpose.msra.mxu0 0.0
        %3868 = vmatprep.subr.mxu0 0.0
        %3869 = vmatpush1.xpose.msra.mxu0 0.0
        %3870 = vmatprep.subr.mxu0 0.0
        %3871 = vmatpush1.xpose.msra.mxu0 0.0
        %3872 = vmatprep.subr.mxu0 0.0
        %3873 = vmatpush1.xpose.msra.mxu0 0.0
        %3874 = vmatprep.subr.mxu0 0.0
        %3875 = vmatpush1.xpose.msra.mxu0 0.0
        %3876 = vmatprep.subr.mxu0 0.0
        %3877 = vmatpush1.xpose.msra.mxu0 0.0
        %3878 = vmatprep.mubr.f32.mxu0 0.0
        %3879 = vmatmul.mubr.f32.gmra.mrb[0].mxu0 %v3812
        %v3880 = vpop.f32.mrb[0].mxu0
        %v3881 = vadd.f32 0.0, %v3880
        %v3882 = vpop.f32.mrb[0].mxu0
        %3883 = vdwg.mxu0
        %v3884 = vsel %vm572, %v3379, 0
        %3886 = vmatprep.subr.mxu0 0.0
        %3887 = vmatpush1.xpose.msra.mxu0 %v1101
        %3888 = vmatprep.subr.mxu0 0.0
        %3889 = vmatpush1.xpose.msra.mxu0 0.0
        %3890 = vmatprep.subr.mxu0 0.0
        %3891 = vmatpush1.xpose.msra.mxu0 0.0
        %3892 = vmatprep.subr.mxu0 0.0
        %3893 = vmatpush1.xpose.msra.mxu0 0.0
        %3894 = vmatprep.subr.mxu0 0.0
        %3895 = vmatpush1.xpose.msra.mxu0 0.0
        %3896 = vmatprep.subr.mxu0 0.0
        %3897 = vmatpush1.xpose.msra.mxu0 0.0
        %3898 = vmatprep.subr.mxu0 0.0
        %3899 = vmatpush1.xpose.msra.mxu0 0.0
        %3900 = vmatprep.subr.mxu0 0.0
        %3901 = vmatpush1.xpose.msra.mxu0 0.0
        %3902 = vmatprep.subr.mxu0 0.0
        %3903 = vmatpush1.xpose.msra.mxu0 0.0
        %3904 = vmatprep.subr.mxu0 0.0
        %3905 = vmatpush1.xpose.msra.mxu0 0.0
        %3906 = vmatprep.subr.mxu0 0.0
        %3907 = vmatpush1.xpose.msra.mxu0 0.0
        %3908 = vmatprep.subr.mxu0 0.0
        %3909 = vmatpush1.xpose.msra.mxu0 0.0
        %3910 = vmatprep.subr.mxu0 0.0
        %3911 = vmatpush1.xpose.msra.mxu0 0.0
        %3912 = vmatprep.subr.mxu0 0.0
        %3913 = vmatpush1.xpose.msra.mxu0 0.0
        %3914 = vmatprep.subr.mxu0 0.0
        %3915 = vmatpush1.xpose.msra.mxu0 0.0
        %3916 = vmatprep.subr.mxu0 0.0
        %3917 = vmatpush1.xpose.msra.mxu0 0.0
        %3918 = vmatprep.subr.mxu0 0.0
        %3919 = vmatpush1.xpose.msra.mxu0 0.0
        %3920 = vmatprep.subr.mxu0 0.0
        %3921 = vmatpush1.xpose.msra.mxu0 0.0
        %3922 = vmatprep.subr.mxu0 0.0
        %3923 = vmatpush1.xpose.msra.mxu0 0.0
        %3924 = vmatprep.subr.mxu0 0.0
        %3925 = vmatpush1.xpose.msra.mxu0 0.0
        %3926 = vmatprep.subr.mxu0 0.0
        %3927 = vmatpush1.xpose.msra.mxu0 0.0
        %3928 = vmatprep.subr.mxu0 0.0
        %3929 = vmatpush1.xpose.msra.mxu0 0.0
        %3930 = vmatprep.subr.mxu0 0.0
        %3931 = vmatpush1.xpose.msra.mxu0 0.0
        %3932 = vmatprep.subr.mxu0 0.0
        %3933 = vmatpush1.xpose.msra.mxu0 0.0
        %3934 = vmatprep.subr.mxu0 0.0
        %3935 = vmatpush1.xpose.msra.mxu0 0.0
        %3936 = vmatprep.subr.mxu0 0.0
        %3937 = vmatpush1.xpose.msra.mxu0 0.0
        %3938 = vmatprep.subr.mxu0 0.0
        %3939 = vmatpush1.xpose.msra.mxu0 0.0
        %3940 = vmatprep.subr.mxu0 0.0
        %3941 = vmatpush1.xpose.msra.mxu0 0.0
        %3942 = vmatprep.subr.mxu0 0.0
        %3943 = vmatpush1.xpose.msra.mxu0 0.0
        %3944 = vmatprep.subr.mxu0 0.0
        %3945 = vmatpush1.xpose.msra.mxu0 0.0
        %3946 = vmatprep.subr.mxu0 0.0
        %3947 = vmatpush1.xpose.msra.mxu0 0.0
        %3948 = vmatprep.subr.mxu0 0.0
        %3949 = vmatpush1.xpose.msra.mxu0 0.0
        %3950 = vmatprep.mubr.f32.mxu0 0.0
        %3951 = vmatmul.mubr.f32.gmra.mrb[0].mxu0 %v3884
        %v3952 = vpop.f32.mrb[0].mxu0
        %v3953 = vadd.f32 0.0, %v3952
        %v3954 = vpop.f32.mrb[0].mxu0
        %3955 = vdwg.mxu0
        %3956 = vrot.lane.b32.xlu0 %v408, 104
        %v3957 = vpop.permute.xlu0 %3956
        %v3966 = vrot.slane %v3521, 7
        %v3967 = vsel %vm1182, %v3966, %v3449
        %v3968 = vrot.slane %v3593, 6
        %v3969 = vsel %vm1185, %v3968, %v3967
        %v3970 = vrot.slane %v3665, 5
        %v3971 = vsel %vm1188, %v3970, %v3969
        %v3972 = vrot.slane %v3737, 4
        %v3973 = vsel %vm1191, %v3972, %v3971
        %v3974 = vrot.slane %v3809, 3
        %v3975 = vsel %vm1194, %v3974, %v3973
        %v3976 = vrot.slane %v3881, 2
        %v3977 = vsel %vm1197, %v3976, %v3975
        %v3978 = vrot.slane %v3953, 1
        %v3979 = vsel %vm1200, %v3978, %v3977
        %v3981 = vsel %vm437, %v3957, 0
        %3983 = vmatprep.subr.mxu0 0.0
        %3984 = vmatpush1.xpose.msra.mxu0 %v3981
        %3985 = vmatprep.subr.mxu0 0.0
        %3986 = vmatpush1.xpose.msra.mxu0 0.0
        %3987 = vmatprep.subr.mxu0 0.0
        %3988 = vmatpush1.xpose.msra.mxu0 0.0
        %3989 = vmatprep.subr.mxu0 0.0
        %3990 = vmatpush1.xpose.msra.mxu0 0.0
        %3991 = vmatprep.subr.mxu0 0.0
        %3992 = vmatpush1.xpose.msra.mxu0 0.0
        %3993 = vmatprep.subr.mxu0 0.0
        %3994 = vmatpush1.xpose.msra.mxu0 0.0
        %3995 = vmatprep.subr.mxu0 0.0
        %3996 = vmatpush1.xpose.msra.mxu0 0.0
        %3997 = vmatprep.subr.mxu0 0.0
        %3998 = vmatpush1.xpose.msra.mxu0 0.0
        %3999 = vmatprep.subr.mxu0 0.0
        %4000 = vmatpush1.xpose.msra.mxu0 0.0
        %4001 = vmatprep.subr.mxu0 0.0
        %4002 = vmatpush1.xpose.msra.mxu0 0.0
        %4003 = vmatprep.subr.mxu0 0.0
        %4004 = vmatpush1.xpose.msra.mxu0 0.0
        %4005 = vmatprep.subr.mxu0 0.0
        %4006 = vmatpush1.xpose.msra.mxu0 0.0
        %4007 = vmatprep.subr.mxu0 0.0
        %4008 = vmatpush1.xpose.msra.mxu0 0.0
        %4009 = vmatprep.subr.mxu0 0.0
        %4010 = vmatpush1.xpose.msra.mxu0 0.0
        %4011 = vmatprep.subr.mxu0 0.0
        %4012 = vmatpush1.xpose.msra.mxu0 0.0
        %4013 = vmatprep.subr.mxu0 0.0
        %4014 = vmatpush1.xpose.msra.mxu0 0.0
        %4015 = vmatprep.subr.mxu0 0.0
        %4016 = vmatpush1.xpose.msra.mxu0 0.0
        %4017 = vmatprep.subr.mxu0 0.0
        %4018 = vmatpush1.xpose.msra.mxu0 0.0
        %4019 = vmatprep.subr.mxu0 0.0
        %4020 = vmatpush1.xpose.msra.mxu0 0.0
        %4021 = vmatprep.subr.mxu0 0.0
        %4022 = vmatpush1.xpose.msra.mxu0 0.0
        %4023 = vmatprep.subr.mxu0 0.0
        %4024 = vmatpush1.xpose.msra.mxu0 0.0
        %4025 = vmatprep.subr.mxu0 0.0
        %4026 = vmatpush1.xpose.msra.mxu0 0.0
        %4027 = vmatprep.subr.mxu0 0.0
        %4028 = vmatpush1.xpose.msra.mxu0 0.0
        %4029 = vmatprep.subr.mxu0 0.0
        %4030 = vmatpush1.xpose.msra.mxu0 0.0
        %4031 = vmatprep.subr.mxu0 0.0
        %4032 = vmatpush1.xpose.msra.mxu0 0.0
        %4033 = vmatprep.subr.mxu0 0.0
        %4034 = vmatpush1.xpose.msra.mxu0 0.0
        %4035 = vmatprep.subr.mxu0 0.0
        %4036 = vmatpush1.xpose.msra.mxu0 0.0
        %4037 = vmatprep.subr.mxu0 0.0
        %4038 = vmatpush1.xpose.msra.mxu0 0.0
        %4039 = vmatprep.subr.mxu0 0.0
        %4040 = vmatpush1.xpose.msra.mxu0 0.0
        %4041 = vmatprep.subr.mxu0 0.0
        %4042 = vmatpush1.xpose.msra.mxu0 0.0
        %4043 = vmatprep.subr.mxu0 0.0
        %4044 = vmatpush1.xpose.msra.mxu0 0.0
        %4045 = vmatprep.subr.mxu0 0.0
        %4046 = vmatpush1.xpose.msra.mxu0 0.0
        %4047 = vmatprep.mubr.f32.mxu0 0.0
        %4048 = vmatmul.mubr.f32.gmra.mrb[0].mxu0 %v3243
        %v4049 = vpop.f32.mrb[0].mxu0
        %v4050 = vadd.f32 %v3979, %v4049
        %v4051 = vpop.f32.mrb[0].mxu0
        %4052 = vdwg.mxu0
        %v4053 = vadd.f32 %v4050, %v3329
        %v4054 = vsel %vm435, %v4053, -1e+15
        %s4055 = scalar_lea.vmem [#allocation2], 24
        %v4056 = vld [vmem:[%s4055] sm:$0xff]
        %v4057 = vsel %vm437, %v4054, -inf
        %4058 = vmax.xlane.f32.xlu0 %v4057
        %v4059 = vpop.xlane.xlu0 %4058
        %v4060 = vmax.f32 %v4056, %v4059
        %v4061 = vsub.f32 %v4056, %v4060
        %v4062 = vmul.f32 %v4061, 1.442695
        %v4063 = vpow.pop %v4062
        %4065 = vset.pattern.permute.xlu0 0
        %4066 = vperm.xlu0 %4065, %v4060
        %v4067 = vpop.permute.xlu0 %4066
        %v4069 = vsub.f32 %v4054, %v4067
        %v4070 = vmul.f32 %v4069, 1.442695
        %v4071 = vpow.pop %v4070
        %s4072 = scalar_lea.vmem [#allocation3], 24
        %v4073 = vld [vmem:[%s4072] sm:$0xff]
        %v4074 = vmul.f32 %v4063, %v4073
        %v4075 = vsel %vm437, %v4071, 0.0
        %4076 = vadd.xlane.f32.xlu0 %v4075
        %v4077 = vpop.xlane.xlu0 %4076
        %v4078 = vadd.f32 %v4074, %v4077
        %4079 = vst.msk [vmem:[%s4072] sm:$0xff] %vm1300, %v4078
        %s4080 = scalar_lea.vmem [#allocation4], 24
        %v4081 = vld [vmem:[%s4080] sm:$0xff]
        %4083 = vset.pattern.permute.xlu0 0
        %4084 = vperm.xlu0 %4083, %v4063
        %v4085 = vpop.permute.xlu0 %4084
        %v4087 = vmul.f32 %v4085, %v4081
        %4088 = vrot.lane.b32.xlu0 %v409, 104
        %v4089 = vpop.permute.xlu0 %4088
        %v4092 = vsel %vm437, %v4071, 0
        %4094 = vmatprep.subr.mxu0 0.0
        %4095 = vmatpush1.msra.mxu0 %v4089
        %4096 = vmatprep.subr.mxu0 0.0
        %4097 = vmatpush1.msra.mxu0 0.0
        %4098 = vmatprep.subr.mxu0 0.0
        %4099 = vmatpush1.msra.mxu0 0.0
        %4100 = vmatprep.subr.mxu0 0.0
        %4101 = vmatpush1.msra.mxu0 0.0
        %4102 = vmatprep.subr.mxu0 0.0
        %4103 = vmatpush1.msra.mxu0 0.0
        %4104 = vmatprep.subr.mxu0 0.0
        %4105 = vmatpush1.msra.mxu0 0.0
        %4106 = vmatprep.subr.mxu0 0.0
        %4107 = vmatpush1.msra.mxu0 0.0
        %4108 = vmatprep.subr.mxu0 0.0
        %4109 = vmatpush1.msra.mxu0 0.0
        %4110 = vmatprep.subr.mxu0 0.0
        %4111 = vmatpush1.msra.mxu0 0.0
        %4112 = vmatprep.subr.mxu0 0.0
        %4113 = vmatpush1.msra.mxu0 0.0
        %4114 = vmatprep.subr.mxu0 0.0
        %4115 = vmatpush1.msra.mxu0 0.0
        %4116 = vmatprep.subr.mxu0 0.0
        %4117 = vmatpush1.msra.mxu0 0.0
        %4118 = vmatprep.subr.mxu0 0.0
        %4119 = vmatpush1.msra.mxu0 0.0
        %4120 = vmatprep.subr.mxu0 0.0
        %4121 = vmatpush1.msra.mxu0 0.0
        %4122 = vmatprep.subr.mxu0 0.0
        %4123 = vmatpush1.msra.mxu0 0.0
        %4124 = vmatprep.subr.mxu0 0.0
        %4125 = vmatpush1.msra.mxu0 0.0
        %4126 = vmatprep.subr.mxu0 0.0
        %4127 = vmatpush1.msra.mxu0 0.0
        %4128 = vmatprep.subr.mxu0 0.0
        %4129 = vmatpush1.msra.mxu0 0.0
        %4130 = vmatprep.subr.mxu0 0.0
        %4131 = vmatpush1.msra.mxu0 0.0
        %4132 = vmatprep.subr.mxu0 0.0
        %4133 = vmatpush1.msra.mxu0 0.0
        %4134 = vmatprep.subr.mxu0 0.0
        %4135 = vmatpush1.msra.mxu0 0.0
        %4136 = vmatprep.subr.mxu0 0.0
        %4137 = vmatpush1.msra.mxu0 0.0
        %4138 = vmatprep.subr.mxu0 0.0
        %4139 = vmatpush1.msra.mxu0 0.0
        %4140 = vmatprep.subr.mxu0 0.0
        %4141 = vmatpush1.msra.mxu0 0.0
        %4142 = vmatprep.subr.mxu0 0.0
        %4143 = vmatpush1.msra.mxu0 0.0
        %4144 = vmatprep.subr.mxu0 0.0
        %4145 = vmatpush1.msra.mxu0 0.0
        %4146 = vmatprep.subr.mxu0 0.0
        %4147 = vmatpush1.msra.mxu0 0.0
        %4148 = vmatprep.subr.mxu0 0.0
        %4149 = vmatpush1.msra.mxu0 0.0
        %4150 = vmatprep.subr.mxu0 0.0
        %4151 = vmatpush1.msra.mxu0 0.0
        %4152 = vmatprep.subr.mxu0 0.0
        %4153 = vmatpush1.msra.mxu0 0.0
        %4154 = vmatprep.subr.mxu0 0.0
        %4155 = vmatpush1.msra.mxu0 0.0
        %4156 = vmatprep.subr.mxu0 0.0
        %4157 = vmatpush1.msra.mxu0 0.0
        %4158 = vmatprep.mubr.f32.mxu0 0.0
        %4159 = vmatmul.mubr.f32.gmra.mrb[0].mxu0 %v4092
        %v4160 = vpop.f32.mrb[0].mxu0
        %v4161 = vadd.f32 0.0, %v4160
        %v4162 = vpop.f32.mrb[0].mxu0
        %4163 = vdwg.mxu0
        %v4164 = vadd.f32 %v4087, %v4161
        %4165 = vst.msk [vmem:[%s4080] sm:$0xff] %vm437, %v4164
        %4166 = vst.msk [vmem:[%s4055] sm:$0xff] %vm1300, %v4060
        // Predicated region
        $region49: #{transformer_encoder_forward.11} parent=43 // pred_check
          %p4167 = pneg %p389
        $region50: #{transformer_encoder_forward.11} parent=43 // pred_check_branch
          %4169 = sbr.rel (%p4167) target = $region52
        $region51: #{transformer_encoder_forward.11} parent=43 // pred_region
          %v4170 = vld [vmem:[#allocation3] sm:$0xff]
          %v4171 = vrcp.pop %v4170
          %v4172 = vld [vmem:[#allocation4] sm:$0xff]
          %4174 = vset.pattern.permute.xlu0 0
          %4175 = vperm.xlu0 %4174, %v4171
          %v4176 = vpop.permute.xlu0 %4175
          %v4178 = vmul.f32 %v4172, %v4176
          %v4179 = vld [vmem:[%s2217] sm:$0xff]
          %v4180 = vrcp.pop %v4179
          %v4181 = vld [vmem:[%s2225] sm:$0xff]
          %4183 = vset.pattern.permute.xlu0 0
          %4184 = vperm.xlu0 %4183, %v4180
          %v4185 = vpop.permute.xlu0 %4184
          %v4187 = vmul.f32 %v4181, %v4185
          %v4188 = vld [vmem:[%s3145] sm:$0xff]
          %v4189 = vrcp.pop %v4188
          %v4190 = vld [vmem:[%s3153] sm:$0xff]
          %4192 = vset.pattern.permute.xlu0 0
          %4193 = vperm.xlu0 %4192, %v4189
          %v4194 = vpop.permute.xlu0 %4193
          %v4196 = vmul.f32 %v4190, %v4194
          %v4197 = vld [vmem:[%s4072] sm:$0xff]
          %v4198 = vrcp.pop %v4197
          %v4199 = vld [vmem:[%s4080] sm:$0xff]
          %4201 = vset.pattern.permute.xlu0 0
          %4202 = vperm.xlu0 %4201, %v4198
          %v4203 = vpop.permute.xlu0 %4202
          %v4205 = vmul.f32 %v4199, %v4203
          %4207 = vrot.lane.b32.xlu0 %v4187, 8
          %v4208 = vpop.permute.xlu0 %4207
          %4211 = vrot.lane.b32.xlu0 %v4196, 16
          %v4212 = vpop.permute.xlu0 %4211
          %4215 = vrot.lane.b32.xlu0 %v4205, 24
          %v4216 = vpop.permute.xlu0 %4215
          %v4218 = vsel %vm437, %v4178, %v4208
          %vm4219 = vcmask 130048
          %v4220 = vsel %vm4219, %v4218, %v4212
          %vm4221 = vcmask 195584
          %v4222 = vsel %vm4221, %v4220, %v4216
          %4223 = vst.msk [vmem:[%s354] sm:$0xff] %vm572, %v4222
        $region52: #{transformer_encoder_forward.11} parent=43 // pred_fallthru
          _
        %s4224 = sand.u32 %s212, 1
        %s4225 = scalar_lea.sflag [#allocation8], %s4224
        %s4226 = sand.u32 %s212, 1
        %s4227 = smul.addr %s4226, 8
        %s4228 = scalar_lea.vmem [#allocation7], %s4227
        // Predicated region
        $region53: #{transformer_encoder_forward.11} parent=43 // pred_check
          %p4229 = pneg %p222
        $region54: #{transformer_encoder_forward.11} parent=43 // pred_check_branch
          %4231 = sbr.rel (%p4229) target = $region56
        $region55: #{transformer_encoder_forward.11} parent=43 // pred_region
          %s4233 = ssub.s32 128, 128
          %4234 = vsyncadd %s4225, %s4233
          %s4235 = sadd.s32 %s33, %s32
          %s4236 = smul.addr %s4235, 128
          %s4237 = scalar_lea.hbm %s7, %s4236
          %s4239 = sshll.u32 %s4228, 4
          %s4240 = int_to_ptr.vmem [resolvable:$true] %s4239
          %4242 = dma.vmem_to_hbm [thread:$0]  %s4240, 128, %s4237, %s4225
        $region56: #{transformer_encoder_forward.11} parent=43 // pred_fallthru
          _
      $region44: #{transformer_encoder_forward.11} parent=5 // pred_fallthru
        _
      %p4243 = scmp.le.s32.totalorder 2, %s22
      // Predicated region
      $region57: #{transformer_encoder_forward.11} parent=5 // pred_check
        %p4244 = pneg %p4243
      $region58: #{transformer_encoder_forward.11} parent=5 // pred_check_branch
        %4246 = sbr.rel (%p4244) target = $region60
      $region59: #{transformer_encoder_forward.11} parent=5 // pred_region
        %s4247 = ssub.s32 %s22, 2
        // Predicated region
        $region61: #{transformer_encoder_forward.11} parent=59 // pred_check
          %p4248 = pneg %p228
        $region62: #{transformer_encoder_forward.11} parent=59 // pred_check_branch
          %4250 = sbr.rel (%p4248) target = $region64
        $region63: #{transformer_encoder_forward.11} parent=59 // pred_region
          %s4251 = sand.u32 %s213, 1
          %s4252 = scalar_lea.sflag [#allocation8], %s4251
          %s4253 = sand.u32 %s213, 1
          %s4254 = smul.addr %s4253, 8
          %s4255 = scalar_lea.vmem [#allocation7], %s4254
          %4256 = dma.done %s4252, 128
        $region64: #{transformer_encoder_forward.11} parent=59 // pred_fallthru
          _
      $region60: #{transformer_encoder_forward.11} parent=5 // pred_fallthru
        _
    $region6: #{transformer_encoder_forward.11} parent=1 // loop_footer
      %s26 = sadd.s32 1, %s22
    $region7: #{transformer_encoder_forward.11} parent=1 // loop_footer_branch
      %21 = sbr.rel target = $region3
    $region8: #{transformer_encoder_forward.11} parent=1 // loop_exit
      _
    %4257 = vsyncpa [#allocation8], 1
    %s4258 = scalar_lea.sflag [#allocation8], 1
    %4259 = vsyncpa %s4258, 1

</llo_original>
